<compile_context>
chip_gen: v6e
topology: v6e:2x2x1
jax: 0.10.0
libtpu: 0.0.40
codegen_flags: <defaults>
</compile_context>

<pallas_src>
import jax
import jax.numpy as jnp
from jax.experimental import pallas as pl
from jax.experimental.pallas import tpu as pltpu

EPS = 1e-5
_LANE = 128
_MLP4_CHUNK = 256            # output-column chunk for the 128 -> 1024 layer
_TARGET_ROWS = 2048          # flattened (batch*points) rows per grid step
_MAX_TN = 1024               # cap on the point-tile size
_VMEM_LIMIT = 48 * 1024 * 1024   # < v7x's 64 MiB physical; >> actual footprint


# ------------------------------- fused kernel ------------------------------- #

def _make_kernel(tb, tn, n_points):
    needs_point_mask = (n_points % tn) != 0

    def kernel(x_ref,
               w1_ref, s1_ref, c1_ref,
               w2_ref, s2_ref, c2_ref,
               w3_ref, s3_ref, c3_ref,
               w4_ref, s4_ref, c4_ref,
               w5_ref, s5_ref, c5_ref,
               w6_ref, s6_ref, c6_ref,
               w7_ref, b7_ref,
               o_ref, gmax_ref):
        pt = pl.program_id(1)
        n_pt = pl.num_programs(1)

        @pl.when(pt == 0)
        def _():
            gmax_ref[...] = jnp.full(gmax_ref.shape, -jnp.inf, gmax_ref.dtype)

        x = x_ref[...]                                  # (tb, tn, 3) f32
        cin = x.shape[-1]
        rows = tb * tn
        x2 = x.reshape(rows, cin)                       # batch*points -> MXU M dim

        # mlp1 (3 -> 64) on the VPU: a K=3 contraction wastes an MXU pass; three
        # broadcast FMAs ride in otherwise-idle VALU slots.  BN folded, f32.
        w1 = w1_ref[...]
        h = x2[:, 0:1] * w1[0:1, :]
        for c in range(1, cin):
            h = h + x2[:, c:c + 1] * w1[c:c + 1, :]
        h = jnp.maximum(h * s1_ref[...] + c1_ref[...], 0.0)

        # mlp2 (64 -> 64): bf16 MXU operands, f32 accumulate / scale / ReLU.
        h = jnp.dot(h.astype(jnp.bfloat16), w2_ref[...],
                    preferred_element_type=jnp.float32)
        h = jnp.maximum(h * s2_ref[...] + c2_ref[...], 0.0)

        # Feature transform (64x64) is identity and the two PyTorch .view
        # reshapes around its bmm cancel exactly -> nothing to do here.

        # mlp3 (64 -> 128)
        h = jnp.dot(h.astype(jnp.bfloat16), w3_ref[...],
                    preferred_element_type=jnp.float32)
        h = jnp.maximum(h * s3_ref[...] + c3_ref[...], 0.0)
        h_bf = h.astype(jnp.bfloat16)                   # live across mlp4 chunks

        # Tail mask for the (cdiv) partial point tile: padded rows -> -inf so
        # they never win the running max.  (Padded *batch* rows need no mask:
        # their garbage stays in their own rows and the partial output block
        # write-back drops them.)
        if needs_point_mask:
            p_idx = jax.lax.broadcasted_iota(jnp.int32, (tb, tn, 1), 1)
            valid = (pt * tn + p_idx) < n_points
        else:
            valid = None

        # mlp4 (128 -> 1024) + running point-max, in 256-wide output-column
        # chunks so the live (rows, .) f32 intermediates stay small even at
        # 2048-row tiles (keeps the kernel safe on v7x's 64 MiB VMEM).
        for j in range(1024 // _MLP4_CHUNK):
            lo, hi = j * _MLP4_CHUNK, (j + 1) * _MLP4_CHUNK
            z = jnp.dot(h_bf, w4_ref[:, lo:hi],
                        preferred_element_type=jnp.float32)
            z = jnp.maximum(z * s4_ref[:, lo:hi] + c4_ref[:, lo:hi], 0.0)
            z = z.reshape(tb, tn, _MLP4_CHUNK)
            if valid is not None:
                z = jnp.where(valid, z, -jnp.inf)
            gmax_ref[:, lo:hi] = jnp.maximum(gmax_ref[:, lo:hi],
                                             jnp.max(z, axis=1))

        # Head epilogue on the last point tile: fc1/bn5 -> fc2/bn6 -> last.
        # (Dropout is eval-mode identity.)  Runs once per batch tile; head
        # weight DMA is hidden behind the point-tile compute of the same step.
        @pl.when(pt == n_pt - 1)
        def _():
            g = gmax_ref[...]                                    # (tb, 1024) f32
            g = jnp.dot(g.astype(jnp.bfloat16), w5_ref[...],
                        preferred_element_type=jnp.float32)
            g = jnp.maximum(g * s5_ref[...] + c5_ref[...], 0.0)
            g = jnp.dot(g.astype(jnp.bfloat16), w6_ref[...],
                        preferred_element_type=jnp.float32)
            g = jnp.maximum(g * s6_ref[...] + c6_ref[...], 0.0)
            g = jnp.dot(g.astype(jnp.bfloat16), w7_ref[...],
                        preferred_element_type=jnp.float32) + b7_ref[...]
            o_ref[...] = g.reshape(tb, 1, g.shape[-1])           # lane-dense

    return kernel


# ------------------------------ pallas_call wrapper -------------------------- #

def _round_up(v, m):
    return -(-v // m) * m


def _rep_spec(shape):
    # Parameter replicated across the whole grid (constant block index ->
    # DMA'd once, never re-fetched).
    n = len(shape)
    return pl.BlockSpec(shape, lambda b, t, _n=n: (0,) * _n)


def _pick_tiles(B, N):
    # Point tile: large multiple of 8 (sublane dim of the x block); the cdiv
    # grid + in-kernel masking handles any N, so no divisor games.
    tn = min(_round_up(N, 8), _MAX_TN)
    # Batch tile: flatten enough batch elements to reach ~_TARGET_ROWS MXU
    # rows, but keep >= 2 batch tiles whenever B >= 2 so v7x's second
    # TensorCore gets work (the "parallel" axis is what megacore shards).
    tb = max(1, _TARGET_ROWS // tn)
    if B >= 2:
        tb = min(tb, pl.cdiv(B, 2))
    tb = min(tb, B)
    return tb, tn


def pointnet_fused(x_nc, weights, nc_pad, *, tb, tn):
    """x_nc: (B, N, 3) f32; weights: 20-tuple of replicated parameter arrays."""
    B, N, Cin = x_nc.shape
    grid = (pl.cdiv(B, tb), pl.cdiv(N, tn))

    flops = (2 * B * N * (Cin * 64 + 64 * 64 + 64 * 128 + 128 * 1024)
             + 2 * B * (1024 * 512 + 512 * 256 + 256 * nc_pad))
    bytes_accessed = (int(x_nc.size) * x_nc.dtype.itemsize
                      + sum(int(w.size) * w.dtype.itemsize for w in weights)
                      + B * nc_pad * 4)

    out = pl.pallas_call(
        _make_kernel(tb, tn, N),
        out_shape=jax.ShapeDtypeStruct((B, 1, nc_pad), jnp.float32),
        grid=grid,
        in_specs=[pl.BlockSpec((tb, tn, Cin), lambda b, t: (b, t, 0))]
                 + [_rep_spec(w.shape) for w in weights],
        out_specs=pl.BlockSpec((tb, 1, nc_pad), lambda b, t: (b, 0, 0)),
        scratch_shapes=[pltpu.VMEM((tb, 1024), jnp.float32)],
        compiler_params=pltpu.CompilerParams(
            dimension_semantics=("parallel", "arbitrary"),
            vmem_limit_bytes=_VMEM_LIMIT),
        cost_estimate=pl.CostEstimate(
            flops=flops, transcendentals=0, bytes_accessed=bytes_accessed),
    )(x_nc, *weights)
    return out[:, 0, :]                                  # (B, nc_pad)


# ------------------------------ parameters --------------------------------- #

def init_params(key, num_classes):
    keys = jax.random.split(key, 20)

    def dense(k, cin, cout, bf16=True):
        w = jax.random.normal(k, (cin, cout), jnp.float32) / jnp.sqrt(cin)
        if bf16:
            # Store MXU-operand weights at bf16 precision (the kernel feeds
            # them to the MXU as bf16); the f32 reference uses the identical
            # values so the self-test isolates kernel correctness.
            w = w.astype(jnp.bfloat16).astype(jnp.float32)
        return w

    def bias(k, c):
        return 0.1 * jax.random.normal(k, (c,), jnp.float32)

    def bn(k, c):
        k1, k2, k3, k4 = jax.random.split(k, 4)
        gamma = 1.0 + 0.1 * jax.random.normal(k1, (c,), jnp.float32)
        beta = 0.1 * jax.random.normal(k2, (c,), jnp.float32)
        mean = 0.1 * jax.random.normal(k3, (c,), jnp.float32)
        var = 1.0 + 0.1 * jax.random.uniform(k4, (c,), jnp.float32)
        return gamma, beta, mean, var

    p = {}
    p['w1'], p['b1'], p['bn1'] = dense(keys[0], 3, 64, bf16=False), bias(keys[1], 64), bn(keys[2], 64)
    p['w2'], p['b2'], p['bn2'] = dense(keys[3], 64, 64), bias(keys[4], 64), bn(keys[5], 64)
    p['w3'], p['b3'], p['bn3'] = dense(keys[6], 64, 128), bias(keys[7], 128), bn(keys[8], 128)
    p['w4'], p['b4'], p['bn4'] = dense(keys[9], 128, 1024), bias(keys[10], 1024), bn(keys[11], 1024)
    p['w5'], p['b5'], p['bn5'] = dense(keys[12], 1024, 512), bias(keys[13], 512), bn(keys[14], 512)
    p['w6'], p['b6'], p['bn6'] = dense(keys[15], 512, 256), bias(keys[16], 256), bn(keys[17], 256)
    p['w7'], p['b7'] = dense(keys[18], 256, num_classes), bias(keys[19], num_classes)
    return p


def fold_bn(bias, bn_p):
    # bn(z + bias) = z * s + c   with   s = gamma / sqrt(var + eps),
    #                                    c = (bias - mean) * s + beta
    gamma, beta, mean, var = bn_p
    s = gamma / jnp.sqrt(var + EPS)
    c = (bias - mean) * s + beta
    return s.reshape(1, -1), c.reshape(1, -1)


# ------------------------------ forward pass -------------------------------- #

def pointnet_cls_forward(x, p, num_classes):
    # x: (B, N, 3) float32, matching torch.bmm(x, 3x3 input transform).
    B, N, _ = x.shape
    # TODO(synk): input_transform_net_alt / feature_transform_net_alt are not
    # defined in the provided module; identity transforms are assumed.  bmm(x, I3)
    # is a no-op and the view -> bmm(., I64) -> view round trip cancels exactly,
    # so both are skipped entirely.

    # PyTorch x.view(bn, pts, inpt): (B, N, 3) -> (B, 3, N) is a row-major
    # reshape (data scramble, NOT a transpose); reproduce it literally, then
    # bring to the kernel's (points, channels) layout.  x traffic is tiny.
    x_cn = jnp.reshape(x, (B, 3, N))
    x_nc = jnp.transpose(x_cn, (0, 2, 1))            # (B, N, 3)

    s1, c1 = fold_bn(p['b1'], p['bn1'])
    s2, c2 = fold_bn(p['b2'], p['bn2'])
    s3, c3 = fold_bn(p['b3'], p['bn3'])
    s4, c4 = fold_bn(p['b4'], p['bn4'])
    s5, c5 = fold_bn(p['b5'], p['bn5'])
    s6, c6 = fold_bn(p['b6'], p['bn6'])

    # Lane-dense head output: pad the last layer's columns to a multiple of 128
    # so the final store is an unmasked vst; slice back afterwards.
    nc_pad = _round_up(num_classes, _LANE)
    bf = jnp.bfloat16
    w7p = jnp.pad(p['w7'], ((0, 0), (0, nc_pad - num_classes))).astype(bf)
    b7p = jnp.pad(p['b7'], (0, nc_pad - num_classes)).reshape(1, -1)

    weights = (p['w1'], s1, c1,
               p['w2'].astype(bf), s2, c2,
               p['w3'].astype(bf), s3, c3,
               p['w4'].astype(bf), s4, c4,
               p['w5'].astype(bf), s5, c5,
               p['w6'].astype(bf), s6, c6,
               w7p, b7p)

    tb, tn = _pick_tiles(B, N)
    out = pointnet_fused(x_nc, weights, nc_pad, tb=tb, tn=tn)   # (B, nc_pad)
    return out[:, :num_classes]


# ------------------------------ pure-JAX reference --------------------------- #

def reference_forward(x, p):
    B, N, _ = x.shape
    x = jnp.matmul(x, jnp.eye(3, dtype=jnp.float32))
    x = jnp.reshape(x, (B, 3, N))

    def conv_bn_relu(h_cn, w, b, bn_p):
        gamma, beta, mean, var = bn_p
        z = jnp.einsum('bcn,cd->bdn', h_cn, w) + b[None, :, None]
        z = gamma[None, :, None] * (z - mean[None, :, None]) / jnp.sqrt(
            var[None, :, None] + EPS) + beta[None, :, None]
        return jnp.maximum(z, 0.0)

    x = conv_bn_relu(x, p['w1'], p['b1'], p['bn1'])
    x = conv_bn_relu(x, p['w2'], p['b2'], p['bn2'])
    y = jnp.reshape(x, (B, N, 64))
    y = jnp.matmul(y, jnp.eye(64, dtype=jnp.float32))
    x = jnp.reshape(y, (B, 64, N))
    x = conv_bn_relu(x, p['w3'], p['b3'], p['bn3'])
    x = conv_bn_relu(x, p['w4'], p['b4'], p['bn4'])
    g = jnp.max(x, axis=2)

    def fc_bn_relu(h, w, b, bn_p):
        gamma, beta, mean, var = bn_p
        z = h @ w + b[None, :]
        z = gamma * (z - mean) / jnp.sqrt(var + EPS) + beta
        return jnp.maximum(z, 0.0)

    g = fc_bn_relu(g, p['w5'], p['b5'], p['bn5'])
    g = fc_bn_relu(g, p['w6'], p['b6'], p['bn6'])
    return g @ p['w7'] + p['b7'][None, :]


# ------------------------------------ main ----------------------------------- #

def _check(name, out, ref, atol=5e-2, rtol=5e-2):
    # bf16 MXU operands in the kernel (activation casts) vs. the f32 reference
    # with identical (bf16-rounded) weights -> a few-percent tolerance.
    if not jnp.allclose(out, ref, atol=atol, rtol=rtol):
        err = float(jnp.max(jnp.abs(out - ref)))
        raise AssertionError(f"{name}: Pallas result mismatch vs reference "
                             f"(max abs err {err})")


if __name__ == "__main__":
    NUM_CLASSES = 10
    key = jax.random.PRNGKey(0)
    kp, kx1, kx2 = jax.random.split(key, 3)
    params = init_params(kp, NUM_CLASSES)

    # 1) Small smoke test (single point tile per batch tile).
    B1, N1 = 2, 16
    x1 = jax.random.normal(kx1, (B1, N1, 3), jnp.float32)
    out1 = jax.block_until_ready(pointnet_cls_forward(x1, params, NUM_CLASSES))
    assert out1.shape == (B1, NUM_CLASSES), out1.shape
    _check("small", out1, reference_forward(x1, params))

    # 2) Multi-tile test: multiple point tiles with a partial tail
    #    (1300 = 1024 + 276) and multiple batch tiles with a partial tail
    #    (3 = 2 + 1) -> exercises the gmax init/carry/epilogue, the cdiv grid
    #    and the in-kernel tail masking.
    B2, N2 = 3, 1300
    x2 = jax.random.normal(kx2, (B2, N2, 3), jnp.float32)
    out2 = jax.block_until_ready(pointnet_cls_forward(x2, params, NUM_CLASSES))
    assert out2.shape == (B2, NUM_CLASSES), out2.shape
    _check("multi-tile", out2, reference_forward(x2, params))

    print("KERNEL_OK")
</pallas_src>

<mosaic_0001>
module attributes {stable_mosaic.version = 11 : i64} {
  func.func @kernel(%arg0: i32, %arg1: i32, %arg2: memref<1x16x3xf32, #tpu.memory_space<vmem>>, %arg3: memref<3x64xf32, #tpu.memory_space<vmem>>, %arg4: memref<1x64xf32, #tpu.memory_space<vmem>>, %arg5: memref<1x64xf32, #tpu.memory_space<vmem>>, %arg6: memref<64x64xbf16, #tpu.memory_space<vmem>>, %arg7: memref<1x64xf32, #tpu.memory_space<vmem>>, %arg8: memref<1x64xf32, #tpu.memory_space<vmem>>, %arg9: memref<64x128xbf16, #tpu.memory_space<vmem>>, %arg10: memref<1x128xf32, #tpu.memory_space<vmem>>, %arg11: memref<1x128xf32, #tpu.memory_space<vmem>>, %arg12: memref<128x1024xbf16, #tpu.memory_space<vmem>>, %arg13: memref<1x1024xf32, #tpu.memory_space<vmem>>, %arg14: memref<1x1024xf32, #tpu.memory_space<vmem>>, %arg15: memref<1024x512xbf16, #tpu.memory_space<vmem>>, %arg16: memref<1x512xf32, #tpu.memory_space<vmem>>, %arg17: memref<1x512xf32, #tpu.memory_space<vmem>>, %arg18: memref<512x256xbf16, #tpu.memory_space<vmem>>, %arg19: memref<1x256xf32, #tpu.memory_space<vmem>>, %arg20: memref<1x256xf32, #tpu.memory_space<vmem>>, %arg21: memref<256x128xbf16, #tpu.memory_space<vmem>>, %arg22: memref<1x128xf32, #tpu.memory_space<vmem>>, %arg23: memref<1x1x128xf32, #tpu.memory_space<vmem>>, %arg24: memref<1x1024xf32, #tpu.memory_space<vmem>>) attributes {dimension_semantics = [#tpu.dimension_semantics<parallel>, #tpu.dimension_semantics<arbitrary>], iteration_bounds = array<i64: 2, 1>, scalar_prefetch = 0 : i64, scratch_operands = 1 : i64, tpu.core_type = #tpu.core_type<tc>, window_params = [{transform_indices = @transform_0, window_bounds = array<i64: 1, 16, 3>}, {pipeline_mode = #tpu.pipeline_mode<synchronous>, transform_indices = @transform_1, window_bounds = array<i64: 3, 64>}, {pipeline_mode = #tpu.pipeline_mode<synchronous>, transform_indices = @transform_2, window_bounds = array<i64: 1, 64>}, {pipeline_mode = #tpu.pipeline_mode<synchronous>, transform_indices = @transform_3, window_bounds = array<i64: 1, 64>}, {pipeline_mode = #tpu.pipeline_mode<synchronous>, transform_indices = @transform_4, window_bounds = array<i64: 64, 64>}, {pipeline_mode = #tpu.pipeline_mode<synchronous>, transform_indices = @transform_5, window_bounds = array<i64: 1, 64>}, {pipeline_mode = #tpu.pipeline_mode<synchronous>, transform_indices = @transform_6, window_bounds = array<i64: 1, 64>}, {pipeline_mode = #tpu.pipeline_mode<synchronous>, transform_indices = @transform_7, window_bounds = array<i64: 64, 128>}, {pipeline_mode = #tpu.pipeline_mode<synchronous>, transform_indices = @transform_8, window_bounds = array<i64: 1, 128>}, {pipeline_mode = #tpu.pipeline_mode<synchronous>, transform_indices = @transform_9, window_bounds = array<i64: 1, 128>}, {pipeline_mode = #tpu.pipeline_mode<synchronous>, transform_indices = @transform_10, window_bounds = array<i64: 128, 1024>}, {pipeline_mode = #tpu.pipeline_mode<synchronous>, transform_indices = @transform_11, window_bounds = array<i64: 1, 1024>}, {pipeline_mode = #tpu.pipeline_mode<synchronous>, transform_indices = @transform_12, window_bounds = array<i64: 1, 1024>}, {pipeline_mode = #tpu.pipeline_mode<synchronous>, transform_indices = @transform_13, window_bounds = array<i64: 1024, 512>}, {pipeline_mode = #tpu.pipeline_mode<synchronous>, transform_indices = @transform_14, window_bounds = array<i64: 1, 512>}, {pipeline_mode = #tpu.pipeline_mode<synchronous>, transform_indices = @transform_15, window_bounds = array<i64: 1, 512>}, {pipeline_mode = #tpu.pipeline_mode<synchronous>, transform_indices = @transform_16, window_bounds = array<i64: 512, 256>}, {pipeline_mode = #tpu.pipeline_mode<synchronous>, transform_indices = @transform_17, window_bounds = array<i64: 1, 256>}, {pipeline_mode = #tpu.pipeline_mode<synchronous>, transform_indices = @transform_18, window_bounds = array<i64: 1, 256>}, {pipeline_mode = #tpu.pipeline_mode<synchronous>, transform_indices = @transform_19, window_bounds = array<i64: 256, 128>}, {pipeline_mode = #tpu.pipeline_mode<synchronous>, transform_indices = @transform_20, window_bounds = array<i64: 1, 128>}, {transform_indices = @transform_21, window_bounds = array<i64: 1, 1, 128>}]} {
    %c0_i32 = arith.constant 0 : i32
    %0 = arith.cmpi eq, %arg1, %c0_i32 : i32
    %1 = arith.extui %0 : i1 to i32
    %c0_i32_0 = arith.constant 0 : i32
    %2 = arith.cmpi ne, %1, %c0_i32_0 : i32
    scf.if %2 {
      %cst_76 = arith.constant 0xFF800000 : f32
      %117 = vector.broadcast %cst_76 : f32 to vector<1x1024xf32>
      %c0_77 = arith.constant 0 : index
      %c0_78 = arith.constant 0 : index
      %118 = vector.load %arg24[%c0_77, %c0_78] : memref<1x1024xf32, #tpu.memory_space<vmem>>, vector<1x1024xf32>
      tpu.vector_store %arg24[%c0_77, %c0_78], %117 {strides = array<i32>} : memref<1x1024xf32, #tpu.memory_space<vmem>>, vector<1x1024xf32>,
    } else {
    }
    %c0 = arith.constant 0 : index
    %c0_1 = arith.constant 0 : index
    %c0_2 = arith.constant 0 : index
    %3 = vector.load %arg2[%c0, %c0_1, %c0_2] : memref<1x16x3xf32, #tpu.memory_space<vmem>>, vector<1x16x3xf32>
    %4 = vector.shape_cast %3 : vector<1x16x3xf32> to vector<16x3xf32>
    %c0_3 = arith.constant 0 : index
    %c0_4 = arith.constant 0 : index
    %5 = vector.load %arg3[%c0_3, %c0_4] : memref<3x64xf32, #tpu.memory_space<vmem>>, vector<3x64xf32>
    %6 = vector.extract_strided_slice %4 {offsets = [0, 0], sizes = [16, 1], strides = [1, 1]} : vector<16x3xf32> to vector<16x1xf32>
    %7 = vector.extract_strided_slice %5 {offsets = [0, 0], sizes = [1, 64], strides = [1, 1]} : vector<3x64xf32> to vector<1x64xf32>
    %8 = vector.broadcast %6 : vector<16x1xf32> to vector<16x64xf32>
    %9 = vector.broadcast %7 : vector<1x64xf32> to vector<16x64xf32>
    %10 = arith.mulf %8, %9 : vector<16x64xf32>
    %11 = vector.extract_strided_slice %4 {offsets = [0, 1], sizes = [16, 1], strides = [1, 1]} : vector<16x3xf32> to vector<16x1xf32>
    %12 = vector.extract_strided_slice %5 {offsets = [1, 0], sizes = [1, 64], strides = [1, 1]} : vector<3x64xf32> to vector<1x64xf32>
    %13 = vector.broadcast %11 : vector<16x1xf32> to vector<16x64xf32>
    %14 = vector.broadcast %12 : vector<1x64xf32> to vector<16x64xf32>
    %15 = arith.mulf %13, %14 : vector<16x64xf32>
    %16 = arith.addf %10, %15 : vector<16x64xf32>
    %17 = vector.extract_strided_slice %4 {offsets = [0, 2], sizes = [16, 1], strides = [1, 1]} : vector<16x3xf32> to vector<16x1xf32>
    %18 = vector.extract_strided_slice %5 {offsets = [2, 0], sizes = [1, 64], strides = [1, 1]} : vector<3x64xf32> to vector<1x64xf32>
    %19 = vector.broadcast %17 : vector<16x1xf32> to vector<16x64xf32>
    %20 = vector.broadcast %18 : vector<1x64xf32> to vector<16x64xf32>
    %21 = arith.mulf %19, %20 : vector<16x64xf32>
    %22 = arith.addf %16, %21 : vector<16x64xf32>
    %c0_5 = arith.constant 0 : index
    %c0_6 = arith.constant 0 : index
    %23 = vector.load %arg4[%c0_5, %c0_6] : memref<1x64xf32, #tpu.memory_space<vmem>>, vector<1x64xf32>
    %24 = vector.broadcast %23 : vector<1x64xf32> to vector<16x64xf32>
    %25 = arith.mulf %22, %24 : vector<16x64xf32>
    %c0_7 = arith.constant 0 : index
    %c0_8 = arith.constant 0 : index
    %26 = vector.load %arg5[%c0_7, %c0_8] : memref<1x64xf32, #tpu.memory_space<vmem>>, vector<1x64xf32>
    %27 = vector.broadcast %26 : vector<1x64xf32> to vector<16x64xf32>
    %28 = arith.addf %25, %27 : vector<16x64xf32>
    %cst = arith.constant 0.000000e+00 : f32
    %29 = vector.broadcast %cst : f32 to vector<16x64xf32>
    %30 = arith.maximumf %28, %29 : vector<16x64xf32>
    %31 = arith.truncf %30 : vector<16x64xf32> to vector<16x64xbf16>
    %c0_9 = arith.constant 0 : index
    %c0_10 = arith.constant 0 : index
    %32 = vector.load %arg6[%c0_9, %c0_10] : memref<64x64xbf16, #tpu.memory_space<vmem>>, vector<64x64xbf16>
    %cst_11 = arith.constant dense<0.000000e+00> : vector<16x64xf32>
    %33 = tpu.matmul %31, %32, %cst_11 {dimension_numbers = #tpu.dot_dimension_numbers<[1], [0], [0], [1], [0, 0, 1, 1], [], []>} : vector<16x64xbf16>, vector<64x64xbf16>, vector<16x64xf32> -> vector<16x64xf32>
    %c0_12 = arith.constant 0 : index
    %c0_13 = arith.constant 0 : index
    %34 = vector.load %arg7[%c0_12, %c0_13] : memref<1x64xf32, #tpu.memory_space<vmem>>, vector<1x64xf32>
    %35 = vector.broadcast %34 : vector<1x64xf32> to vector<16x64xf32>
    %36 = arith.mulf %33, %35 : vector<16x64xf32>
    %c0_14 = arith.constant 0 : index
    %c0_15 = arith.constant 0 : index
    %37 = vector.load %arg8[%c0_14, %c0_15] : memref<1x64xf32, #tpu.memory_space<vmem>>, vector<1x64xf32>
    %38 = vector.broadcast %37 : vector<1x64xf32> to vector<16x64xf32>
    %39 = arith.addf %36, %38 : vector<16x64xf32>
    %cst_16 = arith.constant 0.000000e+00 : f32
    %40 = vector.broadcast %cst_16 : f32 to vector<16x64xf32>
    %41 = arith.maximumf %39, %40 : vector<16x64xf32>
    %42 = arith.truncf %41 : vector<16x64xf32> to vector<16x64xbf16>
    %c0_17 = arith.constant 0 : index
    %c0_18 = arith.constant 0 : index
    %43 = vector.load %arg9[%c0_17, %c0_18] : memref<64x128xbf16, #tpu.memory_space<vmem>>, vector<64x128xbf16>
    %cst_19 = arith.constant dense<0.000000e+00> : vector<16x128xf32>
    %44 = tpu.matmul %42, %43, %cst_19 {dimension_numbers = #tpu.dot_dimension_numbers<[1], [0], [0], [1], [0, 0, 1, 1], [], []>} : vector<16x64xbf16>, vector<64x128xbf16>, vector<16x128xf32> -> vector<16x128xf32>
    %c0_20 = arith.constant 0 : index
    %c0_21 = arith.constant 0 : index
    %45 = vector.load %arg10[%c0_20, %c0_21] : memref<1x128xf32, #tpu.memory_space<vmem>>, vector<1x128xf32>
    %46 = vector.broadcast %45 : vector<1x128xf32> to vector<16x128xf32>
    %47 = arith.mulf %44, %46 : vector<16x128xf32>
    %c0_22 = arith.constant 0 : index
    %c0_23 = arith.constant 0 : index
    %48 = vector.load %arg11[%c0_22, %c0_23] : memref<1x128xf32, #tpu.memory_space<vmem>>, vector<1x128xf32>
    %49 = vector.broadcast %48 : vector<1x128xf32> to vector<16x128xf32>
    %50 = arith.addf %47, %49 : vector<16x128xf32>
    %cst_24 = arith.constant 0.000000e+00 : f32
    %51 = vector.broadcast %cst_24 : f32 to vector<16x128xf32>
    %52 = arith.maximumf %50, %51 : vector<16x128xf32>
    %53 = arith.truncf %52 : vector<16x128xf32> to vector<16x128xbf16>
    %c0_25 = arith.constant 0 : index
    %c0_26 = arith.constant 0 : index
    %54 = vector.load %arg12[%c0_25, %c0_26] : memref<128x1024xbf16, #tpu.memory_space<vmem>>, vector<128x256xbf16>
    %cst_27 = arith.constant dense<0.000000e+00> : vector<16x256xf32>
    %55 = tpu.matmul %53, %54, %cst_27 {dimension_numbers = #tpu.dot_dimension_numbers<[1], [0], [0], [1], [0, 0, 1, 1], [], []>} : vector<16x128xbf16>, vector<128x256xbf16>, vector<16x256xf32> -> vector<16x256xf32>
    %c0_28 = arith.constant 0 : index
    %c0_29 = arith.constant 0 : index
    %56 = vector.load %arg13[%c0_28, %c0_29] : memref<1x1024xf32, #tpu.memory_space<vmem>>, vector<1x256xf32>
    %57 = vector.broadcast %56 : vector<1x256xf32> to vector<16x256xf32>
    %58 = arith.mulf %55, %57 : vector<16x256xf32>
    %c0_30 = arith.constant 0 : index
    %c0_31 = arith.constant 0 : index
    %59 = vector.load %arg14[%c0_30, %c0_31] : memref<1x1024xf32, #tpu.memory_space<vmem>>, vector<1x256xf32>
    %60 = vector.broadcast %59 : vector<1x256xf32> to vector<16x256xf32>
    %61 = arith.addf %58, %60 : vector<16x256xf32>
    %cst_32 = arith.constant 0.000000e+00 : f32
    %62 = vector.broadcast %cst_32 : f32 to vector<16x256xf32>
    %63 = arith.maximumf %61, %62 : vector<16x256xf32>
    %64 = vector.shape_cast %63 : vector<16x256xf32> to vector<1x16x256xf32>
    %c0_33 = arith.constant 0 : index
    %c0_34 = arith.constant 0 : index
    %65 = vector.load %arg24[%c0_33, %c0_34] : memref<1x1024xf32, #tpu.memory_space<vmem>>, vector<1x256xf32>
    %cst_35 = arith.constant dense<0xFF800000> : vector<1x256xf32>
    %66 = vector.multi_reduction <maximumf>, %64, %cst_35 [1] : vector<1x16x256xf32> to vector<1x256xf32>
    %67 = arith.maximumf %65, %66 : vector<1x256xf32>
    %c0_36 = arith.constant 0 : index
    %c0_37 = arith.constant 0 : index
    %68 = vector.load %arg24[%c0_36, %c0_37] : memref<1x1024xf32, #tpu.memory_space<vmem>>, vector<1x256xf32>
    tpu.vector_store %arg24[%c0_36, %c0_37], %67 {strides = array<i32>} : memref<1x1024xf32, #tpu.memory_space<vmem>>, vector<1x256xf32>,
    %c0_38 = arith.constant 0 : index
    %c256 = arith.constant 256 : index
    %69 = vector.load %arg12[%c0_38, %c256] : memref<128x1024xbf16, #tpu.memory_space<vmem>>, vector<128x256xbf16>
    %cst_39 = arith.constant dense<0.000000e+00> : vector<16x256xf32>
    %70 = tpu.matmul %53, %69, %cst_39 {dimension_numbers = #tpu.dot_dimension_numbers<[1], [0], [0], [1], [0, 0, 1, 1], [], []>} : vector<16x128xbf16>, vector<128x256xbf16>, vector<16x256xf32> -> vector<16x256xf32>
    %c0_40 = arith.constant 0 : index
    %c256_41 = arith.constant 256 : index
    %71 = vector.load %arg13[%c0_40, %c256_41] : memref<1x1024xf32, #tpu.memory_space<vmem>>, vector<1x256xf32>
    %72 = vector.broadcast %71 : vector<1x256xf32> to vector<16x256xf32>
    %73 = arith.mulf %70, %72 : vector<16x256xf32>
    %c0_42 = arith.constant 0 : index
    %c256_43 = arith.constant 256 : index
    %74 = vector.load %arg14[%c0_42, %c256_43] : memref<1x1024xf32, #tpu.memory_space<vmem>>, vector<1x256xf32>
    %75 = vector.broadcast %74 : vector<1x256xf32> to vector<16x256xf32>
    %76 = arith.addf %73, %75 : vector<16x256xf32>
    %cst_44 = arith.constant 0.000000e+00 : f32
    %77 = vector.broadcast %cst_44 : f32 to vector<16x256xf32>
    %78 = arith.maximumf %76, %77 : vector<16x256xf32>
    %79 = vector.shape_cast %78 : vector<16x256xf32> to vector<1x16x256xf32>
    %c0_45 = arith.constant 0 : index
    %c256_46 = arith.constant 256 : index
    %80 = vector.load %arg24[%c0_45, %c256_46] : memref<1x1024xf32, #tpu.memory_space<vmem>>, vector<1x256xf32>
    %cst_47 = arith.constant dense<0xFF800000> : vector<1x256xf32>
    %81 = vector.multi_reduction <maximumf>, %79, %cst_47 [1] : vector<1x16x256xf32> to vector<1x256xf32>
    %82 = arith.maximumf %80, %81 : vector<1x256xf32>
    %c0_48 = arith.constant 0 : index
    %c256_49 = arith.constant 256 : index
    %83 = vector.load %arg24[%c0_48, %c256_49] : memref<1x1024xf32, #tpu.memory_space<vmem>>, vector<1x256xf32>
    tpu.vector_store %arg24[%c0_48, %c256_49], %82 {strides = array<i32>} : memref<1x1024xf32, #tpu.memory_space<vmem>>, vector<1x256xf32>,
    %c0_50 = arith.constant 0 : index
    %c512 = arith.constant 512 : index
    %84 = vector.load %arg12[%c0_50, %c512] : memref<128x1024xbf16, #tpu.memory_space<vmem>>, vector<128x256xbf16>
    %cst_51 = arith.constant dense<0.000000e+00> : vector<16x256xf32>
    %85 = tpu.matmul %53, %84, %cst_51 {dimension_numbers = #tpu.dot_dimension_numbers<[1], [0], [0], [1], [0, 0, 1, 1], [], []>} : vector<16x128xbf16>, vector<128x256xbf16>, vector<16x256xf32> -> vector<16x256xf32>
    %c0_52 = arith.constant 0 : index
    %c512_53 = arith.constant 512 : index
    %86 = vector.load %arg13[%c0_52, %c512_53] : memref<1x1024xf32, #tpu.memory_space<vmem>>, vector<1x256xf32>
    %87 = vector.broadcast %86 : vector<1x256xf32> to vector<16x256xf32>
    %88 = arith.mulf %85, %87 : vector<16x256xf32>
    %c0_54 = arith.constant 0 : index
    %c512_55 = arith.constant 512 : index
    %89 = vector.load %arg14[%c0_54, %c512_55] : memref<1x1024xf32, #tpu.memory_space<vmem>>, vector<1x256xf32>
    %90 = vector.broadcast %89 : vector<1x256xf32> to vector<16x256xf32>
    %91 = arith.addf %88, %90 : vector<16x256xf32>
    %cst_56 = arith.constant 0.000000e+00 : f32
    %92 = vector.broadcast %cst_56 : f32 to vector<16x256xf32>
    %93 = arith.maximumf %91, %92 : vector<16x256xf32>
    %94 = vector.shape_cast %93 : vector<16x256xf32> to vector<1x16x256xf32>
    %c0_57 = arith.constant 0 : index
    %c512_58 = arith.constant 512 : index
    %95 = vector.load %arg24[%c0_57, %c512_58] : memref<1x1024xf32, #tpu.memory_space<vmem>>, vector<1x256xf32>
    %cst_59 = arith.constant dense<0xFF800000> : vector<1x256xf32>
    %96 = vector.multi_reduction <maximumf>, %94, %cst_59 [1] : vector<1x16x256xf32> to vector<1x256xf32>
    %97 = arith.maximumf %95, %96 : vector<1x256xf32>
    %c0_60 = arith.constant 0 : index
    %c512_61 = arith.constant 512 : index
    %98 = vector.load %arg24[%c0_60, %c512_61] : memref<1x1024xf32, #tpu.memory_space<vmem>>, vector<1x256xf32>
    tpu.vector_store %arg24[%c0_60, %c512_61], %97 {strides = array<i32>} : memref<1x1024xf32, #tpu.memory_space<vmem>>, vector<1x256xf32>,
    %c0_62 = arith.constant 0 : index
    %c768 = arith.constant 768 : index
    %99 = vector.load %arg12[%c0_62, %c768] : memref<128x1024xbf16, #tpu.memory_space<vmem>>, vector<128x256xbf16>
    %cst_63 = arith.constant dense<0.000000e+00> : vector<16x256xf32>
    %100 = tpu.matmul %53, %99, %cst_63 {dimension_numbers = #tpu.dot_dimension_numbers<[1], [0], [0], [1], [0, 0, 1, 1], [], []>} : vector<16x128xbf16>, vector<128x256xbf16>, vector<16x256xf32> -> vector<16x256xf32>
    %c0_64 = arith.constant 0 : index
    %c768_65 = arith.constant 768 : index
    %101 = vector.load %arg13[%c0_64, %c768_65] : memref<1x1024xf32, #tpu.memory_space<vmem>>, vector<1x256xf32>
    %102 = vector.broadcast %101 : vector<1x256xf32> to vector<16x256xf32>
    %103 = arith.mulf %100, %102 : vector<16x256xf32>
    %c0_66 = arith.constant 0 : index
    %c768_67 = arith.constant 768 : index
    %104 = vector.load %arg14[%c0_66, %c768_67] : memref<1x1024xf32, #tpu.memory_space<vmem>>, vector<1x256xf32>
    %105 = vector.broadcast %104 : vector<1x256xf32> to vector<16x256xf32>
    %106 = arith.addf %103, %105 : vector<16x256xf32>
    %cst_68 = arith.constant 0.000000e+00 : f32
    %107 = vector.broadcast %cst_68 : f32 to vector<16x256xf32>
    %108 = arith.maximumf %106, %107 : vector<16x256xf32>
    %109 = vector.shape_cast %108 : vector<16x256xf32> to vector<1x16x256xf32>
    %c0_69 = arith.constant 0 : index
    %c768_70 = arith.constant 768 : index
    %110 = vector.load %arg24[%c0_69, %c768_70] : memref<1x1024xf32, #tpu.memory_space<vmem>>, vector<1x256xf32>
    %cst_71 = arith.constant dense<0xFF800000> : vector<1x256xf32>
    %111 = vector.multi_reduction <maximumf>, %109, %cst_71 [1] : vector<1x16x256xf32> to vector<1x256xf32>
    %112 = arith.maximumf %110, %111 : vector<1x256xf32>
    %c0_72 = arith.constant 0 : index
    %c768_73 = arith.constant 768 : index
    %113 = vector.load %arg24[%c0_72, %c768_73] : memref<1x1024xf32, #tpu.memory_space<vmem>>, vector<1x256xf32>
    tpu.vector_store %arg24[%c0_72, %c768_73], %112 {strides = array<i32>} : memref<1x1024xf32, #tpu.memory_space<vmem>>, vector<1x256xf32>,
    %c0_i32_74 = arith.constant 0 : i32
    %114 = arith.cmpi eq, %arg1, %c0_i32_74 : i32
    %115 = arith.extui %114 : i1 to i32
    %c0_i32_75 = arith.constant 0 : i32
    %116 = arith.cmpi ne, %115, %c0_i32_75 : i32
    scf.if %116 {
      %c0_76 = arith.constant 0 : index
      %c0_77 = arith.constant 0 : index
      %117 = vector.load %arg24[%c0_76, %c0_77] : memref<1x1024xf32, #tpu.memory_space<vmem>>, vector<1x1024xf32>
      %118 = arith.truncf %117 : vector<1x1024xf32> to vector<1x1024xbf16>
      %c0_78 = arith.constant 0 : index
      %c0_79 = arith.constant 0 : index
      %119 = vector.load %arg15[%c0_78, %c0_79] : memref<1024x512xbf16, #tpu.memory_space<vmem>>, vector<1024x512xbf16>
      %cst_80 = arith.constant dense<0.000000e+00> : vector<1x512xf32>
      %120 = tpu.matmul %118, %119, %cst_80 {dimension_numbers = #tpu.dot_dimension_numbers<[1], [0], [0], [1], [0, 0, 1, 1], [], []>} : vector<1x1024xbf16>, vector<1024x512xbf16>, vector<1x512xf32> -> vector<1x512xf32>
      %c0_81 = arith.constant 0 : index
      %c0_82 = arith.constant 0 : index
      %121 = vector.load %arg16[%c0_81, %c0_82] : memref<1x512xf32, #tpu.memory_space<vmem>>, vector<1x512xf32>
      %122 = arith.mulf %120, %121 : vector<1x512xf32>
      %c0_83 = arith.constant 0 : index
      %c0_84 = arith.constant 0 : index
      %123 = vector.load %arg17[%c0_83, %c0_84] : memref<1x512xf32, #tpu.memory_space<vmem>>, vector<1x512xf32>
      %124 = arith.addf %122, %123 : vector<1x512xf32>
      %cst_85 = arith.constant 0.000000e+00 : f32
      %125 = vector.broadcast %cst_85 : f32 to vector<1x512xf32>
      %126 = arith.maximumf %124, %125 : vector<1x512xf32>
      %127 = arith.truncf %126 : vector<1x512xf32> to vector<1x512xbf16>
      %c0_86 = arith.constant 0 : index
      %c0_87 = arith.constant 0 : index
      %128 = vector.load %arg18[%c0_86, %c0_87] : memref<512x256xbf16, #tpu.memory_space<vmem>>, vector<512x256xbf16>
      %cst_88 = arith.constant dense<0.000000e+00> : vector<1x256xf32>
      %129 = tpu.matmul %127, %128, %cst_88 {dimension_numbers = #tpu.dot_dimension_numbers<[1], [0], [0], [1], [0, 0, 1, 1], [], []>} : vector<1x512xbf16>, vector<512x256xbf16>, vector<1x256xf32> -> vector<1x256xf32>
      %c0_89 = arith.constant 0 : index
      %c0_90 = arith.constant 0 : index
      %130 = vector.load %arg19[%c0_89, %c0_90] : memref<1x256xf32, #tpu.memory_space<vmem>>, vector<1x256xf32>
      %131 = arith.mulf %129, %130 : vector<1x256xf32>
      %c0_91 = arith.constant 0 : index
      %c0_92 = arith.constant 0 : index
      %132 = vector.load %arg20[%c0_91, %c0_92] : memref<1x256xf32, #tpu.memory_space<vmem>>, vector<1x256xf32>
      %133 = arith.addf %131, %132 : vector<1x256xf32>
      %cst_93 = arith.constant 0.000000e+00 : f32
      %134 = vector.broadcast %cst_93 : f32 to vector<1x256xf32>
      %135 = arith.maximumf %133, %134 : vector<1x256xf32>
      %136 = arith.truncf %135 : vector<1x256xf32> to vector<1x256xbf16>
      %c0_94 = arith.constant 0 : index
      %c0_95 = arith.constant 0 : index
      %137 = vector.load %arg21[%c0_94, %c0_95] : memref<256x128xbf16, #tpu.memory_space<vmem>>, vector<256x128xbf16>
      %cst_96 = arith.constant dense<0.000000e+00> : vector<1x128xf32>
      %138 = tpu.matmul %136, %137, %cst_96 {dimension_numbers = #tpu.dot_dimension_numbers<[1], [0], [0], [1], [0, 0, 1, 1], [], []>} : vector<1x256xbf16>, vector<256x128xbf16>, vector<1x128xf32> -> vector<1x128xf32>
      %c0_97 = arith.constant 0 : index
      %c0_98 = arith.constant 0 : index
      %139 = vector.load %arg22[%c0_97, %c0_98] : memref<1x128xf32, #tpu.memory_space<vmem>>, vector<1x128xf32>
      %140 = arith.addf %138, %139 : vector<1x128xf32>
      %141 = vector.shape_cast %140 : vector<1x128xf32> to vector<1x1x128xf32>
      %c0_99 = arith.constant 0 : index
      %c0_100 = arith.constant 0 : index
      %c0_101 = arith.constant 0 : index
      %142 = vector.load %arg23[%c0_99, %c0_100, %c0_101] : memref<1x1x128xf32, #tpu.memory_space<vmem>>, vector<1x1x128xf32>
      tpu.vector_store %arg23[%c0_99, %c0_100, %c0_101], %141 {strides = array<i32>} : memref<1x1x128xf32, #tpu.memory_space<vmem>>, vector<1x1x128xf32>,
    } else {
    }
    return
  }
  func.func @transform_0(%arg0: i32, %arg1: i32) -> (i32, i32, i32) {
    %c0_i32 = arith.constant 0 : i32
    %c0_i32_0 = arith.constant 0 : i32
    return %arg0, %arg1, %c0_i32 : i32, i32, i32
  }
  func.func @transform_1(%arg0: i32, %arg1: i32) -> (i32, i32) {
    %c0_i32 = arith.constant 0 : i32
    %c0_i32_0 = arith.constant 0 : i32
    %c0_i32_1 = arith.constant 0 : i32
    return %c0_i32, %c0_i32_0 : i32, i32
  }
  func.func @transform_2(%arg0: i32, %arg1: i32) -> (i32, i32) {
    %c0_i32 = arith.constant 0 : i32
    %c0_i32_0 = arith.constant 0 : i32
    %c0_i32_1 = arith.constant 0 : i32
    return %c0_i32, %c0_i32_0 : i32, i32
  }
  func.func @transform_3(%arg0: i32, %arg1: i32) -> (i32, i32) {
    %c0_i32 = arith.constant 0 : i32
    %c0_i32_0 = arith.constant 0 : i32
    %c0_i32_1 = arith.constant 0 : i32
    return %c0_i32, %c0_i32_0 : i32, i32
  }
  func.func @transform_4(%arg0: i32, %arg1: i32) -> (i32, i32) {
    %c0_i32 = arith.constant 0 : i32
    %c0_i32_0 = arith.constant 0 : i32
    %c0_i32_1 = arith.constant 0 : i32
    return %c0_i32, %c0_i32_0 : i32, i32
  }
  func.func @transform_5(%arg0: i32, %arg1: i32) -> (i32, i32) {
    %c0_i32 = arith.constant 0 : i32
    %c0_i32_0 = arith.constant 0 : i32
    %c0_i32_1 = arith.constant 0 : i32
    return %c0_i32, %c0_i32_0 : i32, i32
  }
  func.func @transform_6(%arg0: i32, %arg1: i32) -> (i32, i32) {
    %c0_i32 = arith.constant 0 : i32
    %c0_i32_0 = arith.constant 0 : i32
    %c0_i32_1 = arith.constant 0 : i32
    return %c0_i32, %c0_i32_0 : i32, i32
  }
  func.func @transform_7(%arg0: i32, %arg1: i32) -> (i32, i32) {
    %c0_i32 = arith.constant 0 : i32
    %c0_i32_0 = arith.constant 0 : i32
    %c0_i32_1 = arith.constant 0 : i32
    return %c0_i32, %c0_i32_0 : i32, i32
  }
  func.func @transform_8(%arg0: i32, %arg1: i32) -> (i32, i32) {
    %c0_i32 = arith.constant 0 : i32
    %c0_i32_0 = arith.constant 0 : i32
    %c0_i32_1 = arith.constant 0 : i32
    return %c0_i32, %c0_i32_0 : i32, i32
  }
  func.func @transform_9(%arg0: i32, %arg1: i32) -> (i32, i32) {
    %c0_i32 = arith.constant 0 : i32
    %c0_i32_0 = arith.constant 0 : i32
    %c0_i32_1 = arith.constant 0 : i32
    return %c0_i32, %c0_i32_0 : i32, i32
  }
  func.func @transform_10(%arg0: i32, %arg1: i32) -> (i32, i32) {
    %c0_i32 = arith.constant 0 : i32
    %c0_i32_0 = arith.constant 0 : i32
    %c0_i32_1 = arith.constant 0 : i32
    return %c0_i32, %c0_i32_0 : i32, i32
  }
  func.func @transform_11(%arg0: i32, %arg1: i32) -> (i32, i32) {
    %c0_i32 = arith.constant 0 : i32
    %c0_i32_0 = arith.constant 0 : i32
    %c0_i32_1 = arith.constant 0 : i32
    return %c0_i32, %c0_i32_0 : i32, i32
  }
  func.func @transform_12(%arg0: i32, %arg1: i32) -> (i32, i32) {
    %c0_i32 = arith.constant 0 : i32
    %c0_i32_0 = arith.constant 0 : i32
    %c0_i32_1 = arith.constant 0 : i32
    return %c0_i32, %c0_i32_0 : i32, i32
  }
  func.func @transform_13(%arg0: i32, %arg1: i32) -> (i32, i32) {
    %c0_i32 = arith.constant 0 : i32
    %c0_i32_0 = arith.constant 0 : i32
    %c0_i32_1 = arith.constant 0 : i32
    return %c0_i32, %c0_i32_0 : i32, i32
  }
  func.func @transform_14(%arg0: i32, %arg1: i32) -> (i32, i32) {
    %c0_i32 = arith.constant 0 : i32
    %c0_i32_0 = arith.constant 0 : i32
    %c0_i32_1 = arith.constant 0 : i32
    return %c0_i32, %c0_i32_0 : i32, i32
  }
  func.func @transform_15(%arg0: i32, %arg1: i32) -> (i32, i32) {
    %c0_i32 = arith.constant 0 : i32
    %c0_i32_0 = arith.constant 0 : i32
    %c0_i32_1 = arith.constant 0 : i32
    return %c0_i32, %c0_i32_0 : i32, i32
  }
  func.func @transform_16(%arg0: i32, %arg1: i32) -> (i32, i32) {
    %c0_i32 = arith.constant 0 : i32
    %c0_i32_0 = arith.constant 0 : i32
    %c0_i32_1 = arith.constant 0 : i32
    return %c0_i32, %c0_i32_0 : i32, i32
  }
  func.func @transform_17(%arg0: i32, %arg1: i32) -> (i32, i32) {
    %c0_i32 = arith.constant 0 : i32
    %c0_i32_0 = arith.constant 0 : i32
    %c0_i32_1 = arith.constant 0 : i32
    return %c0_i32, %c0_i32_0 : i32, i32
  }
  func.func @transform_18(%arg0: i32, %arg1: i32) -> (i32, i32) {
    %c0_i32 = arith.constant 0 : i32
    %c0_i32_0 = arith.constant 0 : i32
    %c0_i32_1 = arith.constant 0 : i32
    return %c0_i32, %c0_i32_0 : i32, i32
  }
  func.func @transform_19(%arg0: i32, %arg1: i32) -> (i32, i32) {
    %c0_i32 = arith.constant 0 : i32
    %c0_i32_0 = arith.constant 0 : i32
    %c0_i32_1 = arith.constant 0 : i32
    return %c0_i32, %c0_i32_0 : i32, i32
  }
  func.func @transform_20(%arg0: i32, %arg1: i32) -> (i32, i32) {
    %c0_i32 = arith.constant 0 : i32
    %c0_i32_0 = arith.constant 0 : i32
    %c0_i32_1 = arith.constant 0 : i32
    return %c0_i32, %c0_i32_0 : i32, i32
  }
  func.func @transform_21(%arg0: i32, %arg1: i32) -> (i32, i32, i32) {
    %c0_i32 = arith.constant 0 : i32
    %c0_i32_0 = arith.constant 0 : i32
    %c0_i32_1 = arith.constant 0 : i32
    return %arg0, %c0_i32, %c0_i32_0 : i32, i32, i32
  }
}

</mosaic_0001>

<llo_original>
// kernel: tpu_custom_call.1
$region0: #{tpu_custom_call.1}
  #allocation0 [shape = 'u32[]', space=smem, size = 0x4, offset = 0x4, fixed_abs, tag = 'smem constant byte address 0x4 - core index']
  #allocation1 [shape = 'u32[144,128]{1,0:T(1,128)}', space=vmem, size = 0x12000, scoped, tag = 'internal scratch']
  #allocation2 [shape = 'f32[1,1024]{1,0:T(1,128)}', space=vmem, size = 0x1000, scoped, tag = 'scratch operand']
  %s0 = inlined_call_operand.vmem [shape: f32[2,16,3], index: 0, kind: input, shape index: {}]
  %s1 = inlined_call_operand.hbm [shape: f32[3,64], index: 1, kind: input, shape index: {}]
  %s2 = inlined_call_operand.hbm [shape: f32[1,64], index: 2, kind: input, shape index: {}]
  %s3 = inlined_call_operand.hbm [shape: f32[1,64], index: 3, kind: input, shape index: {}]
  %s4 = inlined_call_operand.vmem [shape: bf16[64,64], index: 4, kind: input, shape index: {}]
  %s5 = inlined_call_operand.hbm [shape: f32[1,64], index: 5, kind: input, shape index: {}]
  %s6 = inlined_call_operand.hbm [shape: f32[1,64], index: 6, kind: input, shape index: {}]
  %s7 = inlined_call_operand.hbm [shape: bf16[64,128], index: 7, kind: input, shape index: {}]
  %s8 = inlined_call_operand.hbm [shape: f32[1,128], index: 8, kind: input, shape index: {}]
  %s9 = inlined_call_operand.hbm [shape: f32[1,128], index: 9, kind: input, shape index: {}]
  %s10 = inlined_call_operand.hbm [shape: bf16[128,1024], index: 10, kind: input, shape index: {}]
  %s11 = inlined_call_operand.vmem [shape: f32[1,1024], index: 11, kind: input, shape index: {}]
  %s12 = inlined_call_operand.vmem [shape: f32[1,1024], index: 12, kind: input, shape index: {}]
  %s13 = inlined_call_operand.hbm [shape: bf16[1024,512], index: 13, kind: input, shape index: {}]
  %s14 = inlined_call_operand.vmem [shape: f32[1,512], index: 14, kind: input, shape index: {}]
  %s15 = inlined_call_operand.vmem [shape: f32[1,512], index: 15, kind: input, shape index: {}]
  %s16 = inlined_call_operand.hbm [shape: bf16[512,256], index: 16, kind: input, shape index: {}]
  %s17 = inlined_call_operand.vmem [shape: f32[1,256], index: 17, kind: input, shape index: {}]
  %s18 = inlined_call_operand.vmem [shape: f32[1,256], index: 18, kind: input, shape index: {}]
  %s19 = inlined_call_operand.hbm [shape: bf16[256,128], index: 19, kind: input, shape index: {}]
  %s20 = inlined_call_operand.vmem [shape: f32[1,128], index: 20, kind: input, shape index: {}]
  %s21 = inlined_call_operand.hbm [shape: f32[2,1,128], index: 21, kind: output, shape index: {}]
  %s22 = sld [smem:[#allocation0]]
  $region173: #{tpu_custom_call.1} parent=0
    _
  %s24 = ssub.s32 1, %s22
  %s25 = scalar_select 0, %s24, %s22
  $region1: #{tpu_custom_call.1} parent=0
    #allocation3 [shape = 'u8[2048]{0}', space=vmem, size = 0x800, scoped, tag = 'input window, operand 1, single buffered']
    #allocation4 [shape = 's32[2]{0}', space=sflag, size = 0x8, scoped, tag = 'scoped memory for tpu_custom_call.1']
    #allocation5 [shape = 's32[2]{0}', space=sflag, size = 0x8, scoped, tag = 'scoped memory for tpu_custom_call.1']
    #allocation6 [shape = 'u8[512]{0}', space=vmem, size = 0x400, scoped, tag = 'input window, operand 2, single buffered']
    #allocation7 [shape = 's32[1]{0}', space=sflag, size = 0x4, scoped, tag = 'scoped memory for tpu_custom_call.1']
    #allocation8 [shape = 'u8[512]{0}', space=vmem, size = 0x400, scoped, tag = 'input window, operand 3, single buffered']
    #allocation9 [shape = 'u8[512]{0}', space=vmem, size = 0x400, scoped, tag = 'input window, operand 5, single buffered']
    #allocation10 [shape = 's32[1]{0}', space=sflag, size = 0x4, scoped, tag = 'scoped memory for tpu_custom_call.1']
    #allocation11 [shape = 'u8[512]{0}', space=vmem, size = 0x400, scoped, tag = 'input window, operand 6, single buffered']
    #allocation12 [shape = 'u8[16384]{0}', space=vmem, size = 0x4000, scoped, tag = 'input window, operand 7, single buffered']
    #allocation13 [shape = 's32[1]{0}', space=sflag, size = 0x4, scoped, tag = 'scoped memory for tpu_custom_call.1']
    #allocation14 [shape = 'u8[512]{0}', space=vmem, size = 0x400, scoped, tag = 'input window, operand 8, single buffered']
    #allocation15 [shape = 'u8[512]{0}', space=vmem, size = 0x400, scoped, tag = 'input window, operand 9, single buffered']
    #allocation16 [shape = 's32[1]{0}', space=sflag, size = 0x4, scoped, tag = 'scoped memory for tpu_custom_call.1']
    #allocation17 [shape = 'u8[262144]{0}', space=vmem, size = 0x40000, scoped, tag = 'input window, operand 10, single buffered']
    #allocation18 [shape = 'u8[1048576]{0}', space=vmem, size = 0x100000, scoped, tag = 'input window, operand 13, single buffered']
    #allocation19 [shape = 's32[1]{0}', space=sflag, size = 0x4, scoped, tag = 'scoped memory for tpu_custom_call.1']
    #allocation20 [shape = 'u8[262144]{0}', space=vmem, size = 0x40000, scoped, tag = 'input window, operand 16, single buffered']
    #allocation21 [shape = 'u8[65536]{0}', space=vmem, size = 0x10000, scoped, tag = 'input window, operand 19, single buffered']
    #allocation22 [shape = 's32[1]{0}', space=sflag, size = 0x4, scoped, tag = 'scoped memory for tpu_custom_call.1']
    #allocation23 [shape = 'u8[1024]{0}', space=vmem, size = 0x400, scoped, tag = 'output window, operand 0']
    %26 = vsyncpa [#allocation4], 0
    %27 = vsyncpa [#allocation7], 0
    %28 = vsyncpa [#allocation10], 0
    %29 = vsyncpa [#allocation13], 0
    %30 = vsyncpa [#allocation16], 0
    %31 = vsyncpa [#allocation19], 0
    %32 = vsyncpa [#allocation22], 0
    %33 = vsyncpa [#allocation5], 0
    %s34 = scalar_lea.sflag [#allocation5], 1
    %35 = vsyncpa %s34, 0
    loop: start=0, step=1, limit=4
    $region2: #{tpu_custom_call.1} parent=1 // loop_pre_header
      _
    $region3: #{tpu_custom_call.1} parent=1 // loop_header
      %s37 = sphi 0, %s41
      %p38 = scmp.ge.s32.totalorder %s37, 4
      %s44 = sphi 0, %s56
      %s45 = sphi 0, %s52
      %s46 = sphi 0, %s44
      %s47 = sphi 0, %s45
      %s48 = sphi 0, %s46
      %s49 = sphi 0, %s47
      %s61 = sphi 0, %s63
      %s64 = sphi 0, %s61
      %s65 = sphi 0, %s64
      %s81 = sphi 0, %s65
      %s85 = sphi 0, %s85
      %s87 = sphi 0, %s85
      %s88 = sphi 0, %s87
      %s102 = sphi 0, %s88
      %s106 = sphi 0, %s106
      %s108 = sphi 0, %s106
      %s109 = sphi 0, %s108
      %s123 = sphi 0, %s109
      %s127 = sphi 0, %s127
      %s129 = sphi 0, %s127
      %s130 = sphi 0, %s129
      %s144 = sphi 0, %s130
      %s148 = sphi 0, %s148
      %s150 = sphi 0, %s148
      %s151 = sphi 0, %s150
      %s165 = sphi 0, %s151
      %s169 = sphi 0, %s169
      %s171 = sphi 0, %s169
      %s172 = sphi 0, %s171
      %s186 = sphi 0, %s172
      %s190 = sphi 0, %s190
      %s192 = sphi 0, %s190
      %s193 = sphi 0, %s192
      %s207 = sphi 0, %s193
      %s211 = sphi 0, %s211
      %s213 = sphi 0, %s211
      %s214 = sphi 0, %s213
      %s228 = sphi 0, %s214
      %s232 = sphi 0, %s232
      %s234 = sphi 0, %s232
      %s235 = sphi 0, %s234
      %s249 = sphi 0, %s235
      %s253 = sphi 0, %s253
      %s255 = sphi 0, %s253
      %s256 = sphi 0, %s255
      %s270 = sphi 0, %s256
      %s274 = sphi 0, %s274
      %s276 = sphi 0, %s274
      %s277 = sphi 0, %s276
      %s291 = sphi 0, %s277
      %s295 = sphi 0, %s295
      %s297 = sphi 0, %s295
      %s298 = sphi 0, %s297
      %s312 = sphi 0, %s298
      %s316 = sphi 0, %s316
      %s318 = sphi 0, %s316
      %s319 = sphi 0, %s318
      %s333 = sphi 0, %s319
      %s337 = sphi 0, %s337
      %s339 = sphi 0, %s337
      %s340 = sphi 0, %s339
      %s354 = sphi 0, %s340
      %s358 = sphi 0, %s358
      %s360 = sphi 0, %s358
      %s361 = sphi 0, %s360
      %s375 = sphi 0, %s361
      %s379 = sphi 0, %s379
      %s381 = sphi 0, %s379
      %s382 = sphi 0, %s381
      %s396 = sphi 0, %s382
      %s400 = sphi 0, %s400
      %s402 = sphi 0, %s400
      %s403 = sphi 0, %s402
      %s417 = sphi 0, %s403
      %s421 = sphi 0, %s421
      %s423 = sphi 0, %s421
      %s424 = sphi 0, %s423
      %s438 = sphi 0, %s424
      %s442 = sphi 0, %s442
      %s444 = sphi 0, %s442
      %s445 = sphi 0, %s444
      %s459 = sphi 0, %s445
      %s463 = sphi 0, %s463
      %s465 = sphi 0, %s463
      %s466 = sphi 0, %s465
      %s480 = sphi 0, %s466
      %s484 = sphi 0, %s484
      %s486 = sphi 0, %s484
      %s487 = sphi 0, %s486
      %s501 = sphi 0, %s487
      %s507 = sphi 0, %s509
      %s510 = sphi 0, %s507
      %s511 = sphi 0, %s510
      %s527 = sphi 0, %s511
    $region4: #{tpu_custom_call.1} parent=1 // loop_header_branch
      %40 = sbr.rel (%p38) target = $region8
    $region5: #{tpu_custom_call.1} parent=1 // loop_body
      %s42 = ssub.s32 %s37, 1
      %s43 = ssub.s32 %s37, 2
      %s50 = sadd.s32 1, %s45
      %p51 = scmp.ge.s32.totalorder %s50, 1
      %s52 = scalar_select %p51, 0, %s50
      %s53 = sadd.s32 1, %s44
      %s54 = scalar_select %p51, %s53, %s44
      %p55 = scmp.ge.s32.totalorder %s54, 2
      %s56 = scalar_select %p55, 0, %s54
      %s57 = ssub.s32 %s44, %s56
      %s58 = ssub.s32 %s45, %s52
      %s59 = sor.u32 %s57, %s58
      %p60 = scmp.eq.s32.totalorder %s59, 0
      %s62 = sadd.s32 %s61, 1
      %s63 = scalar_select %p60, %s61, %s62
      %p66 = pneg %p60
      %p67 = scmp.eq.s32.totalorder %s37, 1
      %p68 = por %p66, %p67
      %p69 = scmp.ne.s32.totalorder %s61, %s64
      %p70 = scmp.eq.s32.totalorder %s37, 0
      %p71 = por %p69, %p70
      %p72 = scmp.ne.s32.totalorder %s61, %s64
      %p73 = scmp.eq.s32.totalorder %s42, 1
      %p74 = por %p72, %p73
      %p75 = scmp.ne.s32.totalorder %s64, %s65
      %p76 = scmp.eq.s32.totalorder %s42, 0
      %p77 = por %p75, %p76
      %p78 = scmp.ne.s32.totalorder %s64, %s65
      %p79 = scmp.eq.s32.totalorder %s43, 1
      %p80 = por %p78, %p79
      %p82 = scmp.ne.s32.totalorder %s65, %s81
      %p83 = scmp.eq.s32.totalorder %s43, 0
      %p84 = por %p82, %p83
      %s86 = sadd.s32 %s85, 1
      %p89 = scmp.eq.s32.totalorder %s37, 1
      %p90 = scmp.ne.s32.totalorder %s85, %s87
      %p91 = scmp.eq.s32.totalorder %s37, 0
      %p92 = por %p90, %p91
      %p93 = scmp.ne.s32.totalorder %s85, %s87
      %p94 = scmp.eq.s32.totalorder %s42, 1
      %p95 = por %p93, %p94
      %p96 = scmp.ne.s32.totalorder %s87, %s88
      %p97 = scmp.eq.s32.totalorder %s42, 0
      %p98 = por %p96, %p97
      %p99 = scmp.ne.s32.totalorder %s87, %s88
      %p100 = scmp.eq.s32.totalorder %s43, 1
      %p101 = por %p99, %p100
      %p103 = scmp.ne.s32.totalorder %s88, %s102
      %p104 = scmp.eq.s32.totalorder %s43, 0
      %p105 = por %p103, %p104
      %s107 = sadd.s32 %s106, 1
      %p110 = scmp.eq.s32.totalorder %s37, 1
      %p111 = scmp.ne.s32.totalorder %s106, %s108
      %p112 = scmp.eq.s32.totalorder %s37, 0
      %p113 = por %p111, %p112
      %p114 = scmp.ne.s32.totalorder %s106, %s108
      %p115 = scmp.eq.s32.totalorder %s42, 1
      %p116 = por %p114, %p115
      %p117 = scmp.ne.s32.totalorder %s108, %s109
      %p118 = scmp.eq.s32.totalorder %s42, 0
      %p119 = por %p117, %p118
      %p120 = scmp.ne.s32.totalorder %s108, %s109
      %p121 = scmp.eq.s32.totalorder %s43, 1
      %p122 = por %p120, %p121
      %p124 = scmp.ne.s32.totalorder %s109, %s123
      %p125 = scmp.eq.s32.totalorder %s43, 0
      %p126 = por %p124, %p125
      %s128 = sadd.s32 %s127, 1
      %p131 = scmp.eq.s32.totalorder %s37, 1
      %p132 = scmp.ne.s32.totalorder %s127, %s129
      %p133 = scmp.eq.s32.totalorder %s37, 0
      %p134 = por %p132, %p133
      %p135 = scmp.ne.s32.totalorder %s127, %s129
      %p136 = scmp.eq.s32.totalorder %s42, 1
      %p137 = por %p135, %p136
      %p138 = scmp.ne.s32.totalorder %s129, %s130
      %p139 = scmp.eq.s32.totalorder %s42, 0
      %p140 = por %p138, %p139
      %p141 = scmp.ne.s32.totalorder %s129, %s130
      %p142 = scmp.eq.s32.totalorder %s43, 1
      %p143 = por %p141, %p142
      %p145 = scmp.ne.s32.totalorder %s130, %s144
      %p146 = scmp.eq.s32.totalorder %s43, 0
      %p147 = por %p145, %p146
      %s149 = sadd.s32 %s148, 1
      %p152 = scmp.eq.s32.totalorder %s37, 1
      %p153 = scmp.ne.s32.totalorder %s148, %s150
      %p154 = scmp.eq.s32.totalorder %s37, 0
      %p155 = por %p153, %p154
      %p156 = scmp.ne.s32.totalorder %s148, %s150
      %p157 = scmp.eq.s32.totalorder %s42, 1
      %p158 = por %p156, %p157
      %p159 = scmp.ne.s32.totalorder %s150, %s151
      %p160 = scmp.eq.s32.totalorder %s42, 0
      %p161 = por %p159, %p160
      %p162 = scmp.ne.s32.totalorder %s150, %s151
      %p163 = scmp.eq.s32.totalorder %s43, 1
      %p164 = por %p162, %p163
      %p166 = scmp.ne.s32.totalorder %s151, %s165
      %p167 = scmp.eq.s32.totalorder %s43, 0
      %p168 = por %p166, %p167
      %s170 = sadd.s32 %s169, 1
      %p173 = scmp.eq.s32.totalorder %s37, 1
      %p174 = scmp.ne.s32.totalorder %s169, %s171
      %p175 = scmp.eq.s32.totalorder %s37, 0
      %p176 = por %p174, %p175
      %p177 = scmp.ne.s32.totalorder %s169, %s171
      %p178 = scmp.eq.s32.totalorder %s42, 1
      %p179 = por %p177, %p178
      %p180 = scmp.ne.s32.totalorder %s171, %s172
      %p181 = scmp.eq.s32.totalorder %s42, 0
      %p182 = por %p180, %p181
      %p183 = scmp.ne.s32.totalorder %s171, %s172
      %p184 = scmp.eq.s32.totalorder %s43, 1
      %p185 = por %p183, %p184
      %p187 = scmp.ne.s32.totalorder %s172, %s186
      %p188 = scmp.eq.s32.totalorder %s43, 0
      %p189 = por %p187, %p188
      %s191 = sadd.s32 %s190, 1
      %p194 = scmp.eq.s32.totalorder %s37, 1
      %p195 = scmp.ne.s32.totalorder %s190, %s192
      %p196 = scmp.eq.s32.totalorder %s37, 0
      %p197 = por %p195, %p196
      %p198 = scmp.ne.s32.totalorder %s190, %s192
      %p199 = scmp.eq.s32.totalorder %s42, 1
      %p200 = por %p198, %p199
      %p201 = scmp.ne.s32.totalorder %s192, %s193
      %p202 = scmp.eq.s32.totalorder %s42, 0
      %p203 = por %p201, %p202
      %p204 = scmp.ne.s32.totalorder %s192, %s193
      %p205 = scmp.eq.s32.totalorder %s43, 1
      %p206 = por %p204, %p205
      %p208 = scmp.ne.s32.totalorder %s193, %s207
      %p209 = scmp.eq.s32.totalorder %s43, 0
      %p210 = por %p208, %p209
      %s212 = sadd.s32 %s211, 1
      %p215 = scmp.eq.s32.totalorder %s37, 1
      %p216 = scmp.ne.s32.totalorder %s211, %s213
      %p217 = scmp.eq.s32.totalorder %s37, 0
      %p218 = por %p216, %p217
      %p219 = scmp.ne.s32.totalorder %s211, %s213
      %p220 = scmp.eq.s32.totalorder %s42, 1
      %p221 = por %p219, %p220
      %p222 = scmp.ne.s32.totalorder %s213, %s214
      %p223 = scmp.eq.s32.totalorder %s42, 0
      %p224 = por %p222, %p223
      %p225 = scmp.ne.s32.totalorder %s213, %s214
      %p226 = scmp.eq.s32.totalorder %s43, 1
      %p227 = por %p225, %p226
      %p229 = scmp.ne.s32.totalorder %s214, %s228
      %p230 = scmp.eq.s32.totalorder %s43, 0
      %p231 = por %p229, %p230
      %s233 = sadd.s32 %s232, 1
      %p236 = scmp.eq.s32.totalorder %s37, 1
      %p237 = scmp.ne.s32.totalorder %s232, %s234
      %p238 = scmp.eq.s32.totalorder %s37, 0
      %p239 = por %p237, %p238
      %p240 = scmp.ne.s32.totalorder %s232, %s234
      %p241 = scmp.eq.s32.totalorder %s42, 1
      %p242 = por %p240, %p241
      %p243 = scmp.ne.s32.totalorder %s234, %s235
      %p244 = scmp.eq.s32.totalorder %s42, 0
      %p245 = por %p243, %p244
      %p246 = scmp.ne.s32.totalorder %s234, %s235
      %p247 = scmp.eq.s32.totalorder %s43, 1
      %p248 = por %p246, %p247
      %p250 = scmp.ne.s32.totalorder %s235, %s249
      %p251 = scmp.eq.s32.totalorder %s43, 0
      %p252 = por %p250, %p251
      %s254 = sadd.s32 %s253, 1
      %p257 = scmp.eq.s32.totalorder %s37, 1
      %p258 = scmp.ne.s32.totalorder %s253, %s255
      %p259 = scmp.eq.s32.totalorder %s37, 0
      %p260 = por %p258, %p259
      %p261 = scmp.ne.s32.totalorder %s253, %s255
      %p262 = scmp.eq.s32.totalorder %s42, 1
      %p263 = por %p261, %p262
      %p264 = scmp.ne.s32.totalorder %s255, %s256
      %p265 = scmp.eq.s32.totalorder %s42, 0
      %p266 = por %p264, %p265
      %p267 = scmp.ne.s32.totalorder %s255, %s256
      %p268 = scmp.eq.s32.totalorder %s43, 1
      %p269 = por %p267, %p268
      %p271 = scmp.ne.s32.totalorder %s256, %s270
      %p272 = scmp.eq.s32.totalorder %s43, 0
      %p273 = por %p271, %p272
      %s275 = sadd.s32 %s274, 1
      %p278 = scmp.eq.s32.totalorder %s37, 1
      %p279 = scmp.ne.s32.totalorder %s274, %s276
      %p280 = scmp.eq.s32.totalorder %s37, 0
      %p281 = por %p279, %p280
      %p282 = scmp.ne.s32.totalorder %s274, %s276
      %p283 = scmp.eq.s32.totalorder %s42, 1
      %p284 = por %p282, %p283
      %p285 = scmp.ne.s32.totalorder %s276, %s277
      %p286 = scmp.eq.s32.totalorder %s42, 0
      %p287 = por %p285, %p286
      %p288 = scmp.ne.s32.totalorder %s276, %s277
      %p289 = scmp.eq.s32.totalorder %s43, 1
      %p290 = por %p288, %p289
      %p292 = scmp.ne.s32.totalorder %s277, %s291
      %p293 = scmp.eq.s32.totalorder %s43, 0
      %p294 = por %p292, %p293
      %s296 = sadd.s32 %s295, 1
      %p299 = scmp.eq.s32.totalorder %s37, 1
      %p300 = scmp.ne.s32.totalorder %s295, %s297
      %p301 = scmp.eq.s32.totalorder %s37, 0
      %p302 = por %p300, %p301
      %p303 = scmp.ne.s32.totalorder %s295, %s297
      %p304 = scmp.eq.s32.totalorder %s42, 1
      %p305 = por %p303, %p304
      %p306 = scmp.ne.s32.totalorder %s297, %s298
      %p307 = scmp.eq.s32.totalorder %s42, 0
      %p308 = por %p306, %p307
      %p309 = scmp.ne.s32.totalorder %s297, %s298
      %p310 = scmp.eq.s32.totalorder %s43, 1
      %p311 = por %p309, %p310
      %p313 = scmp.ne.s32.totalorder %s298, %s312
      %p314 = scmp.eq.s32.totalorder %s43, 0
      %p315 = por %p313, %p314
      %s317 = sadd.s32 %s316, 1
      %p320 = scmp.eq.s32.totalorder %s37, 1
      %p321 = scmp.ne.s32.totalorder %s316, %s318
      %p322 = scmp.eq.s32.totalorder %s37, 0
      %p323 = por %p321, %p322
      %p324 = scmp.ne.s32.totalorder %s316, %s318
      %p325 = scmp.eq.s32.totalorder %s42, 1
      %p326 = por %p324, %p325
      %p327 = scmp.ne.s32.totalorder %s318, %s319
      %p328 = scmp.eq.s32.totalorder %s42, 0
      %p329 = por %p327, %p328
      %p330 = scmp.ne.s32.totalorder %s318, %s319
      %p331 = scmp.eq.s32.totalorder %s43, 1
      %p332 = por %p330, %p331
      %p334 = scmp.ne.s32.totalorder %s319, %s333
      %p335 = scmp.eq.s32.totalorder %s43, 0
      %p336 = por %p334, %p335
      %s338 = sadd.s32 %s337, 1
      %p341 = scmp.eq.s32.totalorder %s37, 1
      %p342 = scmp.ne.s32.totalorder %s337, %s339
      %p343 = scmp.eq.s32.totalorder %s37, 0
      %p344 = por %p342, %p343
      %p345 = scmp.ne.s32.totalorder %s337, %s339
      %p346 = scmp.eq.s32.totalorder %s42, 1
      %p347 = por %p345, %p346
      %p348 = scmp.ne.s32.totalorder %s339, %s340
      %p349 = scmp.eq.s32.totalorder %s42, 0
      %p350 = por %p348, %p349
      %p351 = scmp.ne.s32.totalorder %s339, %s340
      %p352 = scmp.eq.s32.totalorder %s43, 1
      %p353 = por %p351, %p352
      %p355 = scmp.ne.s32.totalorder %s340, %s354
      %p356 = scmp.eq.s32.totalorder %s43, 0
      %p357 = por %p355, %p356
      %s359 = sadd.s32 %s358, 1
      %p362 = scmp.eq.s32.totalorder %s37, 1
      %p363 = scmp.ne.s32.totalorder %s358, %s360
      %p364 = scmp.eq.s32.totalorder %s37, 0
      %p365 = por %p363, %p364
      %p366 = scmp.ne.s32.totalorder %s358, %s360
      %p367 = scmp.eq.s32.totalorder %s42, 1
      %p368 = por %p366, %p367
      %p369 = scmp.ne.s32.totalorder %s360, %s361
      %p370 = scmp.eq.s32.totalorder %s42, 0
      %p371 = por %p369, %p370
      %p372 = scmp.ne.s32.totalorder %s360, %s361
      %p373 = scmp.eq.s32.totalorder %s43, 1
      %p374 = por %p372, %p373
      %p376 = scmp.ne.s32.totalorder %s361, %s375
      %p377 = scmp.eq.s32.totalorder %s43, 0
      %p378 = por %p376, %p377
      %s380 = sadd.s32 %s379, 1
      %p383 = scmp.eq.s32.totalorder %s37, 1
      %p384 = scmp.ne.s32.totalorder %s379, %s381
      %p385 = scmp.eq.s32.totalorder %s37, 0
      %p386 = por %p384, %p385
      %p387 = scmp.ne.s32.totalorder %s379, %s381
      %p388 = scmp.eq.s32.totalorder %s42, 1
      %p389 = por %p387, %p388
      %p390 = scmp.ne.s32.totalorder %s381, %s382
      %p391 = scmp.eq.s32.totalorder %s42, 0
      %p392 = por %p390, %p391
      %p393 = scmp.ne.s32.totalorder %s381, %s382
      %p394 = scmp.eq.s32.totalorder %s43, 1
      %p395 = por %p393, %p394
      %p397 = scmp.ne.s32.totalorder %s382, %s396
      %p398 = scmp.eq.s32.totalorder %s43, 0
      %p399 = por %p397, %p398
      %s401 = sadd.s32 %s400, 1
      %p404 = scmp.eq.s32.totalorder %s37, 1
      %p405 = scmp.ne.s32.totalorder %s400, %s402
      %p406 = scmp.eq.s32.totalorder %s37, 0
      %p407 = por %p405, %p406
      %p408 = scmp.ne.s32.totalorder %s400, %s402
      %p409 = scmp.eq.s32.totalorder %s42, 1
      %p410 = por %p408, %p409
      %p411 = scmp.ne.s32.totalorder %s402, %s403
      %p412 = scmp.eq.s32.totalorder %s42, 0
      %p413 = por %p411, %p412
      %p414 = scmp.ne.s32.totalorder %s402, %s403
      %p415 = scmp.eq.s32.totalorder %s43, 1
      %p416 = por %p414, %p415
      %p418 = scmp.ne.s32.totalorder %s403, %s417
      %p419 = scmp.eq.s32.totalorder %s43, 0
      %p420 = por %p418, %p419
      %s422 = sadd.s32 %s421, 1
      %p425 = scmp.eq.s32.totalorder %s37, 1
      %p426 = scmp.ne.s32.totalorder %s421, %s423
      %p427 = scmp.eq.s32.totalorder %s37, 0
      %p428 = por %p426, %p427
      %p429 = scmp.ne.s32.totalorder %s421, %s423
      %p430 = scmp.eq.s32.totalorder %s42, 1
      %p431 = por %p429, %p430
      %p432 = scmp.ne.s32.totalorder %s423, %s424
      %p433 = scmp.eq.s32.totalorder %s42, 0
      %p434 = por %p432, %p433
      %p435 = scmp.ne.s32.totalorder %s423, %s424
      %p436 = scmp.eq.s32.totalorder %s43, 1
      %p437 = por %p435, %p436
      %p439 = scmp.ne.s32.totalorder %s424, %s438
      %p440 = scmp.eq.s32.totalorder %s43, 0
      %p441 = por %p439, %p440
      %s443 = sadd.s32 %s442, 1
      %p446 = scmp.eq.s32.totalorder %s37, 1
      %p447 = scmp.ne.s32.totalorder %s442, %s444
      %p448 = scmp.eq.s32.totalorder %s37, 0
      %p449 = por %p447, %p448
      %p450 = scmp.ne.s32.totalorder %s442, %s444
      %p451 = scmp.eq.s32.totalorder %s42, 1
      %p452 = por %p450, %p451
      %p453 = scmp.ne.s32.totalorder %s444, %s445
      %p454 = scmp.eq.s32.totalorder %s42, 0
      %p455 = por %p453, %p454
      %p456 = scmp.ne.s32.totalorder %s444, %s445
      %p457 = scmp.eq.s32.totalorder %s43, 1
      %p458 = por %p456, %p457
      %p460 = scmp.ne.s32.totalorder %s445, %s459
      %p461 = scmp.eq.s32.totalorder %s43, 0
      %p462 = por %p460, %p461
      %s464 = sadd.s32 %s463, 1
      %p467 = scmp.eq.s32.totalorder %s37, 1
      %p468 = scmp.ne.s32.totalorder %s463, %s465
      %p469 = scmp.eq.s32.totalorder %s37, 0
      %p470 = por %p468, %p469
      %p471 = scmp.ne.s32.totalorder %s463, %s465
      %p472 = scmp.eq.s32.totalorder %s42, 1
      %p473 = por %p471, %p472
      %p474 = scmp.ne.s32.totalorder %s465, %s466
      %p475 = scmp.eq.s32.totalorder %s42, 0
      %p476 = por %p474, %p475
      %p477 = scmp.ne.s32.totalorder %s465, %s466
      %p478 = scmp.eq.s32.totalorder %s43, 1
      %p479 = por %p477, %p478
      %p481 = scmp.ne.s32.totalorder %s466, %s480
      %p482 = scmp.eq.s32.totalorder %s43, 0
      %p483 = por %p481, %p482
      %s485 = sadd.s32 %s484, 1
      %p488 = scmp.eq.s32.totalorder %s37, 1
      %p489 = scmp.ne.s32.totalorder %s484, %s486
      %p490 = scmp.eq.s32.totalorder %s37, 0
      %p491 = por %p489, %p490
      %p492 = scmp.ne.s32.totalorder %s484, %s486
      %p493 = scmp.eq.s32.totalorder %s42, 1
      %p494 = por %p492, %p493
      %p495 = scmp.ne.s32.totalorder %s486, %s487
      %p496 = scmp.eq.s32.totalorder %s42, 0
      %p497 = por %p495, %p496
      %p498 = scmp.ne.s32.totalorder %s486, %s487
      %p499 = scmp.eq.s32.totalorder %s43, 1
      %p500 = por %p498, %p499
      %p502 = scmp.ne.s32.totalorder %s487, %s501
      %p503 = scmp.eq.s32.totalorder %s43, 0
      %p504 = por %p502, %p503
      %s505 = ssub.s32 %s44, %s56
      %p506 = scmp.eq.s32.totalorder %s505, 0
      %s508 = sadd.s32 %s507, 1
      %s509 = scalar_select %p506, %s507, %s508
      %p512 = pneg %p506
      %p513 = scmp.eq.s32.totalorder %s37, 1
      %p514 = por %p512, %p513
      %p515 = scmp.ne.s32.totalorder %s507, %s510
      %p516 = scmp.eq.s32.totalorder %s37, 0
      %p517 = por %p515, %p516
      %p518 = scmp.ne.s32.totalorder %s507, %s510
      %p519 = scmp.eq.s32.totalorder %s42, 1
      %p520 = por %p518, %p519
      %p521 = scmp.ne.s32.totalorder %s510, %s511
      %p522 = scmp.eq.s32.totalorder %s42, 0
      %p523 = por %p521, %p522
      %p524 = scmp.ne.s32.totalorder %s510, %s511
      %p525 = scmp.eq.s32.totalorder %s43, 1
      %p526 = por %p524, %p525
      %p528 = scmp.ne.s32.totalorder %s511, %s527
      %p529 = scmp.eq.s32.totalorder %s43, 0
      %p530 = por %p528, %p529
      %p531 = scmp.le.s32.totalorder 1, %s37
      %p532 = scmp.lt.s32.totalorder %s37, 3
      %p533 = pnand %p531, %p532
      %p534 = pneg %p533
      // Predicated region
      $region9: #{tpu_custom_call.1} parent=5 // pred_check
        _
      $region10: #{tpu_custom_call.1} parent=5 // pred_check_branch
        %536 = sbr.rel (%p533) target = $region12
      $region11: #{tpu_custom_call.1} parent=5 // pred_region
        %s537 = ssub.s32 %s37, 1
        // Predicated region
        $region13: #{tpu_custom_call.1} parent=11 // pred_check
          %p538 = pneg %p98
        $region14: #{tpu_custom_call.1} parent=11 // pred_check_branch
          %540 = sbr.rel (%p538) target = $region16
        $region15: #{tpu_custom_call.1} parent=11 // pred_region
          %s542 = ssub.s32 64, 64
          %543 = vsyncadd [#allocation4], %s542
          %s545 = sshll.u32 [#allocation3], 4
          %s546 = int_to_ptr.vmem [resolvable:$true] %s545
          %548 = dma.hbm_to_vmem [thread:$0]  %s1, 64, %s546, [#allocation4]
        $region16: #{tpu_custom_call.1} parent=11 // pred_fallthru
          _
        // Predicated region
        $region17: #{tpu_custom_call.1} parent=11 // pred_check
          %p549 = pneg %p119
        $region18: #{tpu_custom_call.1} parent=11 // pred_check_branch
          %551 = sbr.rel (%p549) target = $region20
        $region19: #{tpu_custom_call.1} parent=11 // pred_region
          %s553 = ssub.s32 16, 16
          %554 = vsyncadd [#allocation7], %s553
          %s556 = sshll.u32 [#allocation6], 4
          %s557 = int_to_ptr.vmem [resolvable:$true] %s556
          %559 = dma.hbm_to_vmem [thread:$0]  %s2, 16, %s557, [#allocation7]
        $region20: #{tpu_custom_call.1} parent=11 // pred_fallthru
          _
        // Predicated region
        $region21: #{tpu_custom_call.1} parent=11 // pred_check
          %p560 = pneg %p140
        $region22: #{tpu_custom_call.1} parent=11 // pred_check_branch
          %562 = sbr.rel (%p560) target = $region24
        $region23: #{tpu_custom_call.1} parent=11 // pred_region
          %s564 = ssub.s32 16, 16
          %565 = vsyncadd [#allocation7], %s564
          %s567 = sshll.u32 [#allocation8], 4
          %s568 = int_to_ptr.vmem [resolvable:$true] %s567
          %570 = dma.hbm_to_vmem [thread:$0]  %s3, 16, %s568, [#allocation7]
        $region24: #{tpu_custom_call.1} parent=11 // pred_fallthru
          _
        // Predicated region
        $region25: #{tpu_custom_call.1} parent=11 // pred_check
          %p571 = pneg %p161
        $region26: #{tpu_custom_call.1} parent=11 // pred_check_branch
          %573 = sbr.rel (%p571) target = $region28
        $region27: #{tpu_custom_call.1} parent=11 // pred_region
          _
        $region28: #{tpu_custom_call.1} parent=11 // pred_fallthru
          _
        // Predicated region
        $region29: #{tpu_custom_call.1} parent=11 // pred_check
          %p574 = pneg %p182
        $region30: #{tpu_custom_call.1} parent=11 // pred_check_branch
          %576 = sbr.rel (%p574) target = $region32
        $region31: #{tpu_custom_call.1} parent=11 // pred_region
          %s578 = ssub.s32 16, 16
          %579 = vsyncadd [#allocation10], %s578
          %s581 = sshll.u32 [#allocation9], 4
          %s582 = int_to_ptr.vmem [resolvable:$true] %s581
          %584 = dma.hbm_to_vmem [thread:$0]  %s5, 16, %s582, [#allocation10]
        $region32: #{tpu_custom_call.1} parent=11 // pred_fallthru
          _
        // Predicated region
        $region33: #{tpu_custom_call.1} parent=11 // pred_check
          %p585 = pneg %p203
        $region34: #{tpu_custom_call.1} parent=11 // pred_check_branch
          %587 = sbr.rel (%p585) target = $region36
        $region35: #{tpu_custom_call.1} parent=11 // pred_region
          %s589 = ssub.s32 16, 16
          %590 = vsyncadd [#allocation10], %s589
          %s592 = sshll.u32 [#allocation11], 4
          %s593 = int_to_ptr.vmem [resolvable:$true] %s592
          %595 = dma.hbm_to_vmem [thread:$0]  %s6, 16, %s593, [#allocation10]
        $region36: #{tpu_custom_call.1} parent=11 // pred_fallthru
          _
        // Predicated region
        $region37: #{tpu_custom_call.1} parent=11 // pred_check
          %p596 = pneg %p224
        $region38: #{tpu_custom_call.1} parent=11 // pred_check_branch
          %598 = sbr.rel (%p596) target = $region40
        $region39: #{tpu_custom_call.1} parent=11 // pred_region
          %s600 = ssub.s32 512, 512
          %601 = vsyncadd [#allocation13], %s600
          %s602 = sshll.u32 [#allocation12], 4
          %s603 = int_to_ptr.vmem [resolvable:$true] %s602
          %608 = dma.hbm_to_vmem [thread:$0]  %s7, 512, %s603, [#allocation13], 64, 64, 4
        $region40: #{tpu_custom_call.1} parent=11 // pred_fallthru
          _
        // Predicated region
        $region41: #{tpu_custom_call.1} parent=11 // pred_check
          %p609 = pneg %p245
        $region42: #{tpu_custom_call.1} parent=11 // pred_check_branch
          %611 = sbr.rel (%p609) target = $region44
        $region43: #{tpu_custom_call.1} parent=11 // pred_region
          %s613 = ssub.s32 16, 16
          %614 = vsyncadd [#allocation13], %s613
          %s616 = sshll.u32 [#allocation14], 4
          %s617 = int_to_ptr.vmem [resolvable:$true] %s616
          %619 = dma.hbm_to_vmem [thread:$0]  %s8, 16, %s617, [#allocation13]
        $region44: #{tpu_custom_call.1} parent=11 // pred_fallthru
          _
        // Predicated region
        $region45: #{tpu_custom_call.1} parent=11 // pred_check
          %p620 = pneg %p266
        $region46: #{tpu_custom_call.1} parent=11 // pred_check_branch
          %622 = sbr.rel (%p620) target = $region48
        $region47: #{tpu_custom_call.1} parent=11 // pred_region
          %s624 = ssub.s32 16, 16
          %625 = vsyncadd [#allocation16], %s624
          %s627 = sshll.u32 [#allocation15], 4
          %s628 = int_to_ptr.vmem [resolvable:$true] %s627
          %630 = dma.hbm_to_vmem [thread:$0]  %s9, 16, %s628, [#allocation16]
        $region48: #{tpu_custom_call.1} parent=11 // pred_fallthru
          _
        // Predicated region
        $region49: #{tpu_custom_call.1} parent=11 // pred_check
          %p631 = pneg %p287
        $region50: #{tpu_custom_call.1} parent=11 // pred_check_branch
          %633 = sbr.rel (%p631) target = $region52
        $region51: #{tpu_custom_call.1} parent=11 // pred_region
          %s635 = ssub.s32 8192, 8192
          %636 = vsyncadd [#allocation16], %s635
          %s637 = sshll.u32 [#allocation17], 4
          %s638 = int_to_ptr.vmem [resolvable:$true] %s637
          %643 = dma.hbm_to_vmem [thread:$0]  %s10, 8192, %s638, [#allocation16], 512, 512, 32
        $region52: #{tpu_custom_call.1} parent=11 // pred_fallthru
          _
        // Predicated region
        $region53: #{tpu_custom_call.1} parent=11 // pred_check
          %p644 = pneg %p308
        $region54: #{tpu_custom_call.1} parent=11 // pred_check_branch
          %646 = sbr.rel (%p644) target = $region56
        $region55: #{tpu_custom_call.1} parent=11 // pred_region
          _
        $region56: #{tpu_custom_call.1} parent=11 // pred_fallthru
          _
        // Predicated region
        $region57: #{tpu_custom_call.1} parent=11 // pred_check
          %p647 = pneg %p329
        $region58: #{tpu_custom_call.1} parent=11 // pred_check_branch
          %649 = sbr.rel (%p647) target = $region60
        $region59: #{tpu_custom_call.1} parent=11 // pred_region
          _
        $region60: #{tpu_custom_call.1} parent=11 // pred_fallthru
          _
        // Predicated region
        $region61: #{tpu_custom_call.1} parent=11 // pred_check
          %p650 = pneg %p350
        $region62: #{tpu_custom_call.1} parent=11 // pred_check_branch
          %652 = sbr.rel (%p650) target = $region64
        $region63: #{tpu_custom_call.1} parent=11 // pred_region
          %s654 = ssub.s32 32768, 32768
          %655 = vsyncadd [#allocation19], %s654
          %s656 = sshll.u32 [#allocation18], 4
          %s657 = int_to_ptr.vmem [resolvable:$true] %s656
          %662 = dma.hbm_to_vmem [thread:$0]  %s13, 32768, %s657, [#allocation19], 256, 256, 16
        $region64: #{tpu_custom_call.1} parent=11 // pred_fallthru
          _
        // Predicated region
        $region65: #{tpu_custom_call.1} parent=11 // pred_check
          %p663 = pneg %p371
        $region66: #{tpu_custom_call.1} parent=11 // pred_check_branch
          %665 = sbr.rel (%p663) target = $region68
        $region67: #{tpu_custom_call.1} parent=11 // pred_region
          _
        $region68: #{tpu_custom_call.1} parent=11 // pred_fallthru
          _
        // Predicated region
        $region69: #{tpu_custom_call.1} parent=11 // pred_check
          %p666 = pneg %p392
        $region70: #{tpu_custom_call.1} parent=11 // pred_check_branch
          %668 = sbr.rel (%p666) target = $region72
        $region71: #{tpu_custom_call.1} parent=11 // pred_region
          _
        $region72: #{tpu_custom_call.1} parent=11 // pred_fallthru
          _
        // Predicated region
        $region73: #{tpu_custom_call.1} parent=11 // pred_check
          %p669 = pneg %p413
        $region74: #{tpu_custom_call.1} parent=11 // pred_check_branch
          %671 = sbr.rel (%p669) target = $region76
        $region75: #{tpu_custom_call.1} parent=11 // pred_region
          %s673 = ssub.s32 8192, 8192
          %674 = vsyncadd [#allocation19], %s673
          %s675 = sshll.u32 [#allocation20], 4
          %s676 = int_to_ptr.vmem [resolvable:$true] %s675
          %681 = dma.hbm_to_vmem [thread:$0]  %s16, 8192, %s676, [#allocation19], 128, 128, 8
        $region76: #{tpu_custom_call.1} parent=11 // pred_fallthru
          _
        // Predicated region
        $region77: #{tpu_custom_call.1} parent=11 // pred_check
          %p682 = pneg %p434
        $region78: #{tpu_custom_call.1} parent=11 // pred_check_branch
          %684 = sbr.rel (%p682) target = $region80
        $region79: #{tpu_custom_call.1} parent=11 // pred_region
          _
        $region80: #{tpu_custom_call.1} parent=11 // pred_fallthru
          _
        // Predicated region
        $region81: #{tpu_custom_call.1} parent=11 // pred_check
          %p685 = pneg %p455
        $region82: #{tpu_custom_call.1} parent=11 // pred_check_branch
          %687 = sbr.rel (%p685) target = $region84
        $region83: #{tpu_custom_call.1} parent=11 // pred_region
          _
        $region84: #{tpu_custom_call.1} parent=11 // pred_fallthru
          _
        // Predicated region
        $region85: #{tpu_custom_call.1} parent=11 // pred_check
          %p688 = pneg %p476
        $region86: #{tpu_custom_call.1} parent=11 // pred_check_branch
          %690 = sbr.rel (%p688) target = $region88
        $region87: #{tpu_custom_call.1} parent=11 // pred_region
          %s692 = ssub.s32 2048, 2048
          %693 = vsyncadd [#allocation22], %s692
          %s694 = sshll.u32 [#allocation21], 4
          %s695 = int_to_ptr.vmem [resolvable:$true] %s694
          %700 = dma.hbm_to_vmem [thread:$0]  %s19, 2048, %s695, [#allocation22], 64, 64, 4
        $region88: #{tpu_custom_call.1} parent=11 // pred_fallthru
          _
        // Predicated region
        $region89: #{tpu_custom_call.1} parent=11 // pred_check
          %p701 = pneg %p497
        $region90: #{tpu_custom_call.1} parent=11 // pred_check_branch
          %703 = sbr.rel (%p701) target = $region92
        $region91: #{tpu_custom_call.1} parent=11 // pred_region
          _
        $region92: #{tpu_custom_call.1} parent=11 // pred_fallthru
          _
      $region12: #{tpu_custom_call.1} parent=5 // pred_fallthru
        _
      %p704 = scmp.lt.s32.totalorder %s37, 2
      // Predicated region
      $region93: #{tpu_custom_call.1} parent=5 // pred_check
        %p705 = pneg %p704
      $region94: #{tpu_custom_call.1} parent=5 // pred_check_branch
        %707 = sbr.rel (%p705) target = $region96
      $region95: #{tpu_custom_call.1} parent=5 // pred_region
        // Predicated region
        $region97: #{tpu_custom_call.1} parent=95 // pred_check
          %p708 = pneg %p71
        $region98: #{tpu_custom_call.1} parent=95 // pred_check_branch
          %710 = sbr.rel (%p708) target = $region100
        $region99: #{tpu_custom_call.1} parent=95 // pred_region
          %s711 = smul.u32 2, %s45
          %p712 = scmp.lt.s32.totalorder %s44, 1
          %s713 = scalar_select %p712, %s44, 1
          %p714 = scmp.lt.s32.totalorder %s711, 1
          %s715 = scalar_select %p714, %s711, 1
          %s716 = smul.addr %s713, 2
          %s717 = sadd.s32 %s715, %s716
          %s718 = smul.addr %s717, 8
          %s719 = scalar_lea.vmem %s0, %s718
          %s720 = smul.u32 2, %s45
        $region100: #{tpu_custom_call.1} parent=95 // pred_fallthru
          _
      $region96: #{tpu_custom_call.1} parent=5 // pred_fallthru
        _
      %p721 = scmp.le.s32.totalorder 1, %s37
      %p722 = scmp.lt.s32.totalorder %s37, 3
      %p723 = pnand %p721, %p722
      %p724 = pneg %p723
      // Predicated region
      $region101: #{tpu_custom_call.1} parent=5 // pred_check
        _
      $region102: #{tpu_custom_call.1} parent=5 // pred_check_branch
        %726 = sbr.rel (%p723) target = $region104
      $region103: #{tpu_custom_call.1} parent=5 // pred_region
        %s727 = ssub.s32 %s37, 1
        // Predicated region
        $region105: #{tpu_custom_call.1} parent=103 // pred_check
          %p728 = pneg %p98
        $region106: #{tpu_custom_call.1} parent=103 // pred_check_branch
          %730 = sbr.rel (%p728) target = $region108
        $region107: #{tpu_custom_call.1} parent=103 // pred_region
          %731 = dma.done [#allocation4], 64
        $region108: #{tpu_custom_call.1} parent=103 // pred_fallthru
          _
        // Predicated region
        $region109: #{tpu_custom_call.1} parent=103 // pred_check
          %p732 = pneg %p119
        $region110: #{tpu_custom_call.1} parent=103 // pred_check_branch
          %734 = sbr.rel (%p732) target = $region112
        $region111: #{tpu_custom_call.1} parent=103 // pred_region
          %735 = dma.done [#allocation7], 16
        $region112: #{tpu_custom_call.1} parent=103 // pred_fallthru
          _
        // Predicated region
        $region113: #{tpu_custom_call.1} parent=103 // pred_check
          %p736 = pneg %p140
        $region114: #{tpu_custom_call.1} parent=103 // pred_check_branch
          %738 = sbr.rel (%p736) target = $region116
        $region115: #{tpu_custom_call.1} parent=103 // pred_region
          %739 = dma.done [#allocation7], 16
        $region116: #{tpu_custom_call.1} parent=103 // pred_fallthru
          _
        // Predicated region
        $region117: #{tpu_custom_call.1} parent=103 // pred_check
          %p740 = pneg %p182
        $region118: #{tpu_custom_call.1} parent=103 // pred_check_branch
          %742 = sbr.rel (%p740) target = $region120
        $region119: #{tpu_custom_call.1} parent=103 // pred_region
          %743 = dma.done [#allocation10], 16
        $region120: #{tpu_custom_call.1} parent=103 // pred_fallthru
          _
        // Predicated region
        $region121: #{tpu_custom_call.1} parent=103 // pred_check
          %p744 = pneg %p203
        $region122: #{tpu_custom_call.1} parent=103 // pred_check_branch
          %746 = sbr.rel (%p744) target = $region124
        $region123: #{tpu_custom_call.1} parent=103 // pred_region
          %747 = dma.done [#allocation10], 16
        $region124: #{tpu_custom_call.1} parent=103 // pred_fallthru
          _
        // Predicated region
        $region125: #{tpu_custom_call.1} parent=103 // pred_check
          %p748 = pneg %p224
        $region126: #{tpu_custom_call.1} parent=103 // pred_check_branch
          %750 = sbr.rel (%p748) target = $region128
        $region127: #{tpu_custom_call.1} parent=103 // pred_region
          %751 = dma.done [#allocation13], 512
        $region128: #{tpu_custom_call.1} parent=103 // pred_fallthru
          _
        // Predicated region
        $region129: #{tpu_custom_call.1} parent=103 // pred_check
          %p752 = pneg %p245
        $region130: #{tpu_custom_call.1} parent=103 // pred_check_branch
          %754 = sbr.rel (%p752) target = $region132
        $region131: #{tpu_custom_call.1} parent=103 // pred_region
          %755 = dma.done [#allocation13], 16
        $region132: #{tpu_custom_call.1} parent=103 // pred_fallthru
          _
        // Predicated region
        $region133: #{tpu_custom_call.1} parent=103 // pred_check
          %p756 = pneg %p266
        $region134: #{tpu_custom_call.1} parent=103 // pred_check_branch
          %758 = sbr.rel (%p756) target = $region136
        $region135: #{tpu_custom_call.1} parent=103 // pred_region
          %759 = dma.done [#allocation16], 16
        $region136: #{tpu_custom_call.1} parent=103 // pred_fallthru
          _
        // Predicated region
        $region137: #{tpu_custom_call.1} parent=103 // pred_check
          %p760 = pneg %p287
        $region138: #{tpu_custom_call.1} parent=103 // pred_check_branch
          %762 = sbr.rel (%p760) target = $region140
        $region139: #{tpu_custom_call.1} parent=103 // pred_region
          %763 = dma.done [#allocation16], 8192
        $region140: #{tpu_custom_call.1} parent=103 // pred_fallthru
          _
        // Predicated region
        $region141: #{tpu_custom_call.1} parent=103 // pred_check
          %p764 = pneg %p350
        $region142: #{tpu_custom_call.1} parent=103 // pred_check_branch
          %766 = sbr.rel (%p764) target = $region144
        $region143: #{tpu_custom_call.1} parent=103 // pred_region
          %767 = dma.done [#allocation19], 32768
        $region144: #{tpu_custom_call.1} parent=103 // pred_fallthru
          _
        // Predicated region
        $region145: #{tpu_custom_call.1} parent=103 // pred_check
          %p768 = pneg %p413
        $region146: #{tpu_custom_call.1} parent=103 // pred_check_branch
          %770 = sbr.rel (%p768) target = $region148
        $region147: #{tpu_custom_call.1} parent=103 // pred_region
          %771 = dma.done [#allocation19], 8192
        $region148: #{tpu_custom_call.1} parent=103 // pred_fallthru
          _
        // Predicated region
        $region149: #{tpu_custom_call.1} parent=103 // pred_check
          %p772 = pneg %p476
        $region150: #{tpu_custom_call.1} parent=103 // pred_check_branch
          %774 = sbr.rel (%p772) target = $region152
        $region151: #{tpu_custom_call.1} parent=103 // pred_region
          %775 = dma.done [#allocation22], 2048
        $region152: #{tpu_custom_call.1} parent=103 // pred_fallthru
          _
        %s776 = smul.u32 2, %s47
        %p777 = scmp.lt.s32.totalorder %s46, 1
        %s778 = scalar_select %p777, %s46, 1
        %p779 = scmp.lt.s32.totalorder %s776, 1
        %s780 = scalar_select %p779, %s776, 1
        %s781 = smul.addr %s778, 2
        %s782 = sadd.s32 %s780, %s781
        %s783 = smul.addr %s782, 8
        %s784 = scalar_lea.vmem %s0, %s783
        %p785 = pneg %p77
        %p786 = pneg %p74
        %p787 = pneg %p98
        %p788 = pneg %p95
        %p789 = pneg %p119
        %p790 = pneg %p116
        %p791 = pneg %p140
        %p792 = pneg %p137
        %p793 = pneg %p161
        %p794 = pneg %p158
        %p795 = pneg %p182
        %p796 = pneg %p179
        %p797 = pneg %p203
        %p798 = pneg %p200
        %p799 = pneg %p224
        %p800 = pneg %p221
        %p801 = pneg %p245
        %p802 = pneg %p242
        %p803 = pneg %p266
        %p804 = pneg %p263
        %p805 = pneg %p287
        %p806 = pneg %p284
        %p807 = pneg %p308
        %p808 = pneg %p305
        %p809 = pneg %p329
        %p810 = pneg %p326
        %p811 = pneg %p350
        %p812 = pneg %p347
        %p813 = pneg %p371
        %p814 = pneg %p368
        %p815 = pneg %p392
        %p816 = pneg %p389
        %p817 = pneg %p413
        %p818 = pneg %p410
        %p819 = pneg %p434
        %p820 = pneg %p431
        %p821 = pneg %p455
        %p822 = pneg %p452
        %p823 = pneg %p476
        %p824 = pneg %p473
        %p825 = pneg %p497
        %p826 = pneg %p494
        %p827 = pneg %p523
        %p828 = pneg %p520
        %s829 = sand.u32 %s510, 1
        %s830 = scalar_lea.sflag [#allocation5], %s829
        %s831 = sand.u32 %s510, 1
        %s832 = scalar_lea.vmem [#allocation23], %s831
        %s833 = smul.u32 2, %s47
        %p834 = scmp.lt.s32.totalorder %s46, 1
        %s835 = scalar_select %p834, %s46, 1
        %p836 = scmp.lt.s32.totalorder %s833, 1
        %s837 = scalar_select %p836, %s833, 1
        %s838 = smul.addr %s835, 2
        %s839 = sadd.s32 %s837, %s838
        %s840 = smul.addr %s839, 8
        %s841 = scalar_lea.vmem %s0, %s840
        %s842 = smul.u32 2, %s47
        %p844 = scmp.eq.s32.totalorder %s47, 0
        // Predicated region
        $region153: #{tpu_custom_call.1} parent=103 // pred_check
          %p845 = pneg %p844
        $region154: #{tpu_custom_call.1} parent=103 // pred_check_branch
          %847 = sbr.rel (%p845) target = $region156
        $region155: #{tpu_custom_call.1} parent=103 // pred_region
          %848 = vst [vmem:[#allocation2] sm:$0xff] -inf
        $region156: #{tpu_custom_call.1} parent=103 // pred_fallthru
          _
        %v849 = vld [vmem:[%s841] sm:$0xff]
        %v850 = vld [vmem:[%s841 + $0x8] sm:$0xff]
        %v851 = vld [vmem:[#allocation3] sm:$0x7]
        %853 = vset.pattern.permute.xlu0 0
        %854 = vperm.xlu0 %853, %v849
        %v855 = vpop.permute.xlu0 %854
        %858 = vset.pattern.permute.xlu0 0
        %859 = vperm.xlu0 %858, %v850
        %v860 = vpop.permute.xlu0 %859
        %v862 = vlaneseq
        %v863 = vshrl.u32 %v862, 7
        %v864 = vsub.s32 0, %v863
        %v865 = vrot.slane %v851, %v864
        %v866 = vmul.f32 %v855, %v865
        %v867 = vmul.f32 %v860, %v865
        %868 = vset.pattern.permute.xlu0 1
        %869 = vperm.xlu0 %868, %v849
        %v870 = vpop.permute.xlu0 %869
        %872 = vset.pattern.permute.xlu0 1
        %873 = vperm.xlu0 %872, %v850
        %v874 = vpop.permute.xlu0 %873
        %v876 = vlaneseq
        %v877 = vshrl.u32 %v876, 7
        %v878 = vsub.s32 1, %v877
        %v879 = vrot.slane %v851, %v878
        %v880 = vmul.f32 %v870, %v879
        %v881 = vmul.f32 %v874, %v879
        %v882 = vadd.f32 %v866, %v880
        %v883 = vadd.f32 %v867, %v881
        %884 = vset.pattern.permute.xlu0 2
        %885 = vperm.xlu0 %884, %v849
        %v886 = vpop.permute.xlu0 %885
        %888 = vset.pattern.permute.xlu0 2
        %889 = vperm.xlu0 %888, %v850
        %v890 = vpop.permute.xlu0 %889
        %v892 = vlaneseq
        %v893 = vshrl.u32 %v892, 7
        %v894 = vsub.s32 2, %v893
        %v895 = vrot.slane %v851, %v894
        %v896 = vmul.f32 %v886, %v895
        %v897 = vmul.f32 %v890, %v895
        %v898 = vadd.f32 %v882, %v896
        %v899 = vadd.f32 %v883, %v897
        %v900 = vld [vmem:[#allocation6] sm:$0x1]
        %v902 = vlaneseq
        %v903 = vshrl.u32 %v902, 7
        %v904 = vsub.s32 0, %v903
        %v905 = vrot.slane %v900, %v904
        %v907 = vmul.f32 %v898, %v905
        %v908 = vmul.f32 %v899, %v905
        %v909 = vld [vmem:[#allocation8] sm:$0x1]
        %v911 = vlaneseq
        %v912 = vshrl.u32 %v911, 7
        %v913 = vsub.s32 0, %v912
        %v914 = vrot.slane %v909, %v913
        %v916 = vadd.f32 %v907, %v914
        %v917 = vadd.f32 %v908, %v914
        %v918 = vmax.f32 %v916, 0.0
        %v919 = vmax.f32 %v917, 0.0
        %v920 = vpack.c.bf16 %v919, %v918
        %v921 = vld [vmem:[%s4] sm:$0xf]
        %v922 = vld [vmem:[%s4 + $0x4] sm:$0xf]
        %v923 = vld [vmem:[%s4 + $0x8] sm:$0xf]
        %v924 = vld [vmem:[%s4 + $0xc] sm:$0xf]
        %v925 = vld [vmem:[%s4 + $0x10] sm:$0xf]
        %v926 = vld [vmem:[%s4 + $0x14] sm:$0xf]
        %v927 = vld [vmem:[%s4 + $0x18] sm:$0xf]
        %v928 = vld [vmem:[%s4 + $0x1c] sm:$0xf]
        %v937 = vunpack.c.l.b16 %v921
        %v938 = vunpack.c.l.b16 %v922
        %v939 = vunpack.c.l.b16 %v923
        %v940 = vunpack.c.l.b16 %v924
        %v941 = vunpack.c.l.b16 %v925
        %v942 = vunpack.c.l.b16 %v926
        %v943 = vunpack.c.l.b16 %v927
        %v944 = vunpack.c.l.b16 %v928
        %v945 = vpack.c.b16 %v938, %v937
        %v946 = vpack.c.b16 %v940, %v939
        %v947 = vpack.c.b16 %v942, %v941
        %v948 = vpack.c.b16 %v944, %v943
        %vm953 = vcmask 523264
        %v955 = vsel %vm953, %v920, 0
        %957 = vmatprep.subr.bf16.mxu0 0
        %958 = vmatpush1.bf16.msra.mxu0 0
        %959 = vmatprep.subr.bf16.mxu0 0
        %960 = vmatpush1.bf16.msra.mxu0 0
        %961 = vmatprep.subr.bf16.mxu0 0
        %962 = vmatpush1.bf16.msra.mxu0 0
        %963 = vmatprep.subr.bf16.mxu0 0
        %964 = vmatpush1.bf16.msra.mxu0 0
        %965 = vmatprep.subr.bf16.mxu0 0
        %966 = vmatpush1.bf16.msra.mxu0 %v948
        %967 = vmatprep.subr.bf16.mxu0 0
        %968 = vmatpush1.bf16.msra.mxu0 %v947
        %969 = vmatprep.subr.bf16.mxu0 0
        %970 = vmatpush1.bf16.msra.mxu0 %v946
        %971 = vmatprep.subr.bf16.mxu0 0
        %972 = vmatpush1.bf16.msra.mxu0 %v945
        %973 = vmatprep.subr.bf16.mxu0 0
        %974 = vmatpush2.bf16.msra.mxu0 0
        %975 = vmatprep.subr.bf16.mxu0 0
        %976 = vmatpush2.bf16.msra.mxu0 0
        %977 = vmatprep.subr.bf16.mxu0 0
        %978 = vmatpush2.bf16.msra.mxu0 0
        %979 = vmatprep.subr.bf16.mxu0 0
        %980 = vmatpush2.bf16.msra.mxu0 0
        %981 = vmatprep.subr.bf16.mxu0 0
        %982 = vmatpush2.bf16.msra.mxu0 0
        %983 = vmatprep.subr.bf16.mxu0 0
        %984 = vmatpush2.bf16.msra.mxu0 0
        %985 = vmatprep.subr.bf16.mxu0 0
        %986 = vmatpush2.bf16.msra.mxu0 0
        %987 = vmatprep.subr.bf16.mxu0 0
        %988 = vmatpush2.bf16.msra.mxu0 0
        %989 = vmatprep.mubr.bf16.mxu0 0
        %990 = vmatmul.mubr.bf16.gmra.mxu0 %v955
        %v991 = vpop.f32.mrf.mxu0
        %v992 = vadd.f32 0.0, %v991
        %v993 = vpop.f32.mrf.mxu0
        %v994 = vpop.f32.mrf.mxu0
        %v995 = vadd.f32 0.0, %v994
        %v996 = vpop.f32.mrf.mxu0
        %997 = vdwg.mxu0
        %v998 = vld [vmem:[#allocation9] sm:$0x1]
        %v1000 = vlaneseq
        %v1001 = vshrl.u32 %v1000, 7
        %v1002 = vsub.s32 0, %v1001
        %v1003 = vrot.slane %v998, %v1002
        %v1005 = vmul.f32 %v992, %v1003
        %v1006 = vmul.f32 %v995, %v1003
        %v1007 = vld [vmem:[#allocation11] sm:$0x1]
        %v1009 = vlaneseq
        %v1010 = vshrl.u32 %v1009, 7
        %v1011 = vsub.s32 0, %v1010
        %v1012 = vrot.slane %v1007, %v1011
        %v1014 = vadd.f32 %v1005, %v1012
        %v1015 = vadd.f32 %v1006, %v1012
        %v1016 = vmax.f32 %v1014, 0.0
        %v1017 = vmax.f32 %v1015, 0.0
        %v1018 = vpack.c.bf16 %v1017, %v1016
        %v1019 = vld [vmem:[#allocation12] sm:$0xf]
        %v1020 = vld [vmem:[#allocation12 + $0x4] sm:$0xf]
        %v1021 = vld [vmem:[#allocation12 + $0x8] sm:$0xf]
        %v1022 = vld [vmem:[#allocation12 + $0xc] sm:$0xf]
        %v1023 = vld [vmem:[#allocation12 + $0x10] sm:$0xf]
        %v1024 = vld [vmem:[#allocation12 + $0x14] sm:$0xf]
        %v1025 = vld [vmem:[#allocation12 + $0x18] sm:$0xf]
        %v1026 = vld [vmem:[#allocation12 + $0x1c] sm:$0xf]
        %v1035 = vunpack.c.l.b16 %v1019
        %v1036 = vunpack.c.l.b16 %v1020
        %v1037 = vunpack.c.l.b16 %v1021
        %v1038 = vunpack.c.l.b16 %v1022
        %v1039 = vunpack.c.l.b16 %v1023
        %v1040 = vunpack.c.l.b16 %v1024
        %v1041 = vunpack.c.l.b16 %v1025
        %v1042 = vunpack.c.l.b16 %v1026
        %v1043 = vpack.c.b16 %v1036, %v1035
        %v1044 = vpack.c.b16 %v1038, %v1037
        %v1045 = vpack.c.b16 %v1040, %v1039
        %v1046 = vpack.c.b16 %v1042, %v1041
        %v1052 = vsel %vm953, %v1018, 0
        %1054 = vmatprep.subr.bf16.mxu0 0
        %1055 = vmatpush1.bf16.msra.mxu0 0
        %1056 = vmatprep.subr.bf16.mxu0 0
        %1057 = vmatpush1.bf16.msra.mxu0 0
        %1058 = vmatprep.subr.bf16.mxu0 0
        %1059 = vmatpush1.bf16.msra.mxu0 0
        %1060 = vmatprep.subr.bf16.mxu0 0
        %1061 = vmatpush1.bf16.msra.mxu0 0
        %1062 = vmatprep.subr.bf16.mxu0 0
        %1063 = vmatpush1.bf16.msra.mxu0 %v1046
        %1064 = vmatprep.subr.bf16.mxu0 0
        %1065 = vmatpush1.bf16.msra.mxu0 %v1045
        %1066 = vmatprep.subr.bf16.mxu0 0
        %1067 = vmatpush1.bf16.msra.mxu0 %v1044
        %1068 = vmatprep.subr.bf16.mxu0 0
        %1069 = vmatpush1.bf16.msra.mxu0 %v1043
        %1070 = vmatprep.subr.bf16.mxu0 0
        %1071 = vmatpush2.bf16.msra.mxu0 0
        %1072 = vmatprep.subr.bf16.mxu0 0
        %1073 = vmatpush2.bf16.msra.mxu0 0
        %1074 = vmatprep.subr.bf16.mxu0 0
        %1075 = vmatpush2.bf16.msra.mxu0 0
        %1076 = vmatprep.subr.bf16.mxu0 0
        %1077 = vmatpush2.bf16.msra.mxu0 0
        %1078 = vmatprep.subr.bf16.mxu0 0
        %1079 = vmatpush2.bf16.msra.mxu0 0
        %1080 = vmatprep.subr.bf16.mxu0 0
        %1081 = vmatpush2.bf16.msra.mxu0 0
        %1082 = vmatprep.subr.bf16.mxu0 0
        %1083 = vmatpush2.bf16.msra.mxu0 0
        %1084 = vmatprep.subr.bf16.mxu0 0
        %1085 = vmatpush2.bf16.msra.mxu0 0
        %1086 = vmatprep.mubr.bf16.mxu0 0
        %1087 = vmatmul.mubr.bf16.gmra.mxu0 %v1052
        %v1088 = vpop.f32.mrf.mxu0
        %v1089 = vadd.f32 0.0, %v1088
        %v1090 = vpop.f32.mrf.mxu0
        %v1091 = vpop.f32.mrf.mxu0
        %v1092 = vadd.f32 0.0, %v1091
        %v1093 = vpop.f32.mrf.mxu0
        %1094 = vdwg.mxu0
        %v1095 = vld [vmem:[#allocation14] sm:$0x1]
        %v1097 = vlaneseq
        %v1098 = vshrl.u32 %v1097, 7
        %v1099 = vsub.s32 0, %v1098
        %v1100 = vrot.slane %v1095, %v1099
        %v1102 = vmul.f32 %v1089, %v1100
        %v1103 = vmul.f32 %v1092, %v1100
        %v1104 = vld [vmem:[#allocation15] sm:$0x1]
        %v1106 = vlaneseq
        %v1107 = vshrl.u32 %v1106, 7
        %v1108 = vsub.s32 0, %v1107
        %v1109 = vrot.slane %v1104, %v1108
        %v1111 = vadd.f32 %v1102, %v1109
        %v1112 = vadd.f32 %v1103, %v1109
        %v1113 = vmax.f32 %v1111, 0.0
        %v1114 = vmax.f32 %v1112, 0.0
        %v1115 = vpack.c.bf16 %v1114, %v1113
        %v1116 = vld [vmem:[#allocation17] sm:$0xff]
        %v1117 = vld [vmem:[#allocation17 + $0x20] sm:$0xff]
        %v1118 = vld [vmem:[#allocation17 + $0x40] sm:$0xff]
        %v1119 = vld [vmem:[#allocation17 + $0x60] sm:$0xff]
        %v1120 = vld [vmem:[#allocation17 + $0x80] sm:$0xff]
        %v1121 = vld [vmem:[#allocation17 + $0xa0] sm:$0xff]
        %v1122 = vld [vmem:[#allocation17 + $0xc0] sm:$0xff]
        %v1123 = vld [vmem:[#allocation17 + $0xe0] sm:$0xff]
        %v1124 = vld [vmem:[#allocation17 + $0x100] sm:$0xff]
        %v1125 = vld [vmem:[#allocation17 + $0x120] sm:$0xff]
        %v1126 = vld [vmem:[#allocation17 + $0x140] sm:$0xff]
        %v1127 = vld [vmem:[#allocation17 + $0x160] sm:$0xff]
        %v1128 = vld [vmem:[#allocation17 + $0x180] sm:$0xff]
        %v1129 = vld [vmem:[#allocation17 + $0x1a0] sm:$0xff]
        %v1130 = vld [vmem:[#allocation17 + $0x1c0] sm:$0xff]
        %v1131 = vld [vmem:[#allocation17 + $0x1e0] sm:$0xff]
        %v1148 = vunpack.c.l.b16 %v1116
        %v1149 = vunpack.c.h.b16 %v1116
        %v1150 = vunpack.c.l.b16 %v1117
        %v1151 = vunpack.c.h.b16 %v1117
        %v1152 = vunpack.c.l.b16 %v1118
        %v1153 = vunpack.c.h.b16 %v1118
        %v1154 = vunpack.c.l.b16 %v1119
        %v1155 = vunpack.c.h.b16 %v1119
        %v1156 = vunpack.c.l.b16 %v1120
        %v1157 = vunpack.c.h.b16 %v1120
        %v1158 = vunpack.c.l.b16 %v1121
        %v1159 = vunpack.c.h.b16 %v1121
        %v1160 = vunpack.c.l.b16 %v1122
        %v1161 = vunpack.c.h.b16 %v1122
        %v1162 = vunpack.c.l.b16 %v1123
        %v1163 = vunpack.c.h.b16 %v1123
        %v1164 = vunpack.c.l.b16 %v1124
        %v1165 = vunpack.c.h.b16 %v1124
        %v1166 = vunpack.c.l.b16 %v1125
        %v1167 = vunpack.c.h.b16 %v1125
        %v1168 = vunpack.c.l.b16 %v1126
        %v1169 = vunpack.c.h.b16 %v1126
        %v1170 = vunpack.c.l.b16 %v1127
        %v1171 = vunpack.c.h.b16 %v1127
        %v1172 = vunpack.c.l.b16 %v1128
        %v1173 = vunpack.c.h.b16 %v1128
        %v1174 = vunpack.c.l.b16 %v1129
        %v1175 = vunpack.c.h.b16 %v1129
        %v1176 = vunpack.c.l.b16 %v1130
        %v1177 = vunpack.c.h.b16 %v1130
        %v1178 = vunpack.c.l.b16 %v1131
        %v1179 = vunpack.c.h.b16 %v1131
        %v1180 = vpack.c.b16 %v1150, %v1148
        %v1181 = vpack.c.b16 %v1151, %v1149
        %v1182 = vpack.c.b16 %v1154, %v1152
        %v1183 = vpack.c.b16 %v1155, %v1153
        %v1184 = vpack.c.b16 %v1158, %v1156
        %v1185 = vpack.c.b16 %v1159, %v1157
        %v1186 = vpack.c.b16 %v1162, %v1160
        %v1187 = vpack.c.b16 %v1163, %v1161
        %v1188 = vpack.c.b16 %v1166, %v1164
        %v1189 = vpack.c.b16 %v1167, %v1165
        %v1190 = vpack.c.b16 %v1170, %v1168
        %v1191 = vpack.c.b16 %v1171, %v1169
        %v1192 = vpack.c.b16 %v1174, %v1172
        %v1193 = vpack.c.b16 %v1175, %v1173
        %v1194 = vpack.c.b16 %v1178, %v1176
        %v1195 = vpack.c.b16 %v1179, %v1177
        %1212 = vmatprep.subr.bf16.mxu0 %v1195
        %1213 = vmatpush1.bf16.msra.mxu0 %v1194
        %1214 = vmatprep.subr.bf16.mxu0 %v1193
        %1215 = vmatpush1.bf16.msra.mxu0 %v1192
        %1216 = vmatprep.subr.bf16.mxu0 %v1191
        %1217 = vmatpush1.bf16.msra.mxu0 %v1190
        %1218 = vmatprep.subr.bf16.mxu0 %v1189
        %1219 = vmatpush1.bf16.msra.mxu0 %v1188
        %1220 = vmatprep.subr.bf16.mxu0 %v1187
        %1221 = vmatpush1.bf16.msra.mxu0 %v1186
        %1222 = vmatprep.subr.bf16.mxu0 %v1185
        %1223 = vmatpush1.bf16.msra.mxu0 %v1184
        %1224 = vmatprep.subr.bf16.mxu0 %v1183
        %1225 = vmatpush1.bf16.msra.mxu0 %v1182
        %1226 = vmatprep.subr.bf16.mxu0 %v1181
        %1227 = vmatpush1.bf16.msra.mxu0 %v1180
        %1228 = vmatprep.subr.bf16.mxu0 0
        %1229 = vmatpush2.bf16.msra.mxu0 0
        %1230 = vmatprep.subr.bf16.mxu0 0
        %1231 = vmatpush2.bf16.msra.mxu0 0
        %1232 = vmatprep.subr.bf16.mxu0 0
        %1233 = vmatpush2.bf16.msra.mxu0 0
        %1234 = vmatprep.subr.bf16.mxu0 0
        %1235 = vmatpush2.bf16.msra.mxu0 0
        %1236 = vmatprep.subr.bf16.mxu0 0
        %1237 = vmatpush2.bf16.msra.mxu0 0
        %1238 = vmatprep.subr.bf16.mxu0 0
        %1239 = vmatpush2.bf16.msra.mxu0 0
        %1240 = vmatprep.subr.bf16.mxu0 0
        %1241 = vmatpush2.bf16.msra.mxu0 0
        %1242 = vmatprep.subr.bf16.mxu0 0
        %1243 = vmatpush2.bf16.msra.mxu0 0
        %1244 = vmatprep.mubr.bf16.mxu0 0
        %1245 = vmatmul.mubr.bf16.gmra.mxu0 %v1115
        %v1246 = vpop.f32.mrf.mxu0
        %v1247 = vadd.f32 0.0, %v1246
        %v1248 = vpop.f32.mrf.mxu0
        %v1249 = vadd.f32 0.0, %v1248
        %v1250 = vpop.f32.mrf.mxu0
        %v1251 = vadd.f32 0.0, %v1250
        %v1252 = vpop.f32.mrf.mxu0
        %v1253 = vadd.f32 0.0, %v1252
        %1254 = vdwg.mxu0
        %v1255 = vld [vmem:[%s11] sm:$0x3]
        %v1257 = vlaneseq
        %v1258 = vshrl.u32 %v1257, 7
        %v1259 = vsub.s32 0, %v1258
        %v1260 = vrot.slane %v1255, %v1259
        %v1261 = vlaneseq
        %v1262 = vshrl.u32 %v1261, 7
        %v1263 = vsub.s32 1, %v1262
        %v1264 = vrot.slane %v1255, %v1263
        %v1267 = vmul.f32 %v1247, %v1260
        %v1268 = vmul.f32 %v1249, %v1264
        %v1269 = vmul.f32 %v1251, %v1260
        %v1270 = vmul.f32 %v1253, %v1264
        %v1271 = vld [vmem:[%s12] sm:$0x3]
        %v1273 = vlaneseq
        %v1274 = vshrl.u32 %v1273, 7
        %v1275 = vsub.s32 0, %v1274
        %v1276 = vrot.slane %v1271, %v1275
        %v1277 = vlaneseq
        %v1278 = vshrl.u32 %v1277, 7
        %v1279 = vsub.s32 1, %v1278
        %v1280 = vrot.slane %v1271, %v1279
        %v1283 = vadd.f32 %v1267, %v1276
        %v1284 = vadd.f32 %v1268, %v1280
        %v1285 = vadd.f32 %v1269, %v1276
        %v1286 = vadd.f32 %v1270, %v1280
        %v1287 = vmax.f32 %v1283, 0.0
        %v1288 = vmax.f32 %v1284, 0.0
        %v1289 = vmax.f32 %v1285, 0.0
        %v1290 = vmax.f32 %v1286, 0.0
        %v1291 = vld [vmem:[#allocation2] sm:$0x3]
        %v1292 = vmax.f32 %v1287, %v1289
        %v1293 = vrot.slane %v1292, 4
        %v1294 = vmax.f32 %v1292, %v1293
        %v1295 = vrot.slane %v1294, 2
        %v1296 = vmax.f32 %v1294, %v1295
        %v1297 = vrot.slane %v1296, 1
        %v1298 = vmax.f32 %v1296, %v1297
        %v1299 = vmax.f32 %v1288, %v1290
        %v1300 = vrot.slane %v1299, 4
        %v1301 = vmax.f32 %v1299, %v1300
        %v1302 = vrot.slane %v1301, 2
        %v1303 = vmax.f32 %v1301, %v1302
        %v1304 = vrot.slane %v1303, 1
        %v1305 = vmax.f32 %v1303, %v1304
        %v1308 = vcombine.low %v1298, %v1305
        %v1310 = vunpack.c.l.s4 1966171168
        %v1311 = vunpack.c.0.s8 %v1310
        %v1312 = vlaneseq
        %v1313 = vshrl.u32 %v1312, 7
        %v1314 = vsub.s32 %v1311, %v1313
        %v1315 = vrot.slane %v1308, %v1314
        %v1317 = vunpack.c.l.s4 1966171168
        %v1318 = vunpack.c.0.s8 %v1317
        %v1319 = vlaneseq
        %v1320 = vshrl.u32 %v1319, 7
        %v1321 = vsub.s32 %v1318, %v1320
        %v1322 = vrot.slane %v1315, %v1321
        %v1324 = vmax.f32 %v1291, %v1322
        %v1325 = vlaneseq
        %vm1326 = vcmp.ge.s32.totalorder %v1325, 0
        %vm1327 = vcmp.lt.s32.totalorder %v1325, 256
        %vm1328 = vmand %vm1326, %vm1327
        %1329 = vst.msk [vmem:[#allocation2] sm:$0x3] %vm1328, %v1324
        %v1330 = vld [vmem:[#allocation17 + $0x8] sm:$0xff]
        %v1331 = vld [vmem:[#allocation17 + $0x28] sm:$0xff]
        %v1332 = vld [vmem:[#allocation17 + $0x48] sm:$0xff]
        %v1333 = vld [vmem:[#allocation17 + $0x68] sm:$0xff]
        %v1334 = vld [vmem:[#allocation17 + $0x88] sm:$0xff]
        %v1335 = vld [vmem:[#allocation17 + $0xa8] sm:$0xff]
        %v1336 = vld [vmem:[#allocation17 + $0xc8] sm:$0xff]
        %v1337 = vld [vmem:[#allocation17 + $0xe8] sm:$0xff]
        %v1338 = vld [vmem:[#allocation17 + $0x108] sm:$0xff]
        %v1339 = vld [vmem:[#allocation17 + $0x128] sm:$0xff]
        %v1340 = vld [vmem:[#allocation17 + $0x148] sm:$0xff]
        %v1341 = vld [vmem:[#allocation17 + $0x168] sm:$0xff]
        %v1342 = vld [vmem:[#allocation17 + $0x188] sm:$0xff]
        %v1343 = vld [vmem:[#allocation17 + $0x1a8] sm:$0xff]
        %v1344 = vld [vmem:[#allocation17 + $0x1c8] sm:$0xff]
        %v1345 = vld [vmem:[#allocation17 + $0x1e8] sm:$0xff]
        %v1362 = vunpack.c.l.b16 %v1330
        %v1363 = vunpack.c.h.b16 %v1330
        %v1364 = vunpack.c.l.b16 %v1331
        %v1365 = vunpack.c.h.b16 %v1331
        %v1366 = vunpack.c.l.b16 %v1332
        %v1367 = vunpack.c.h.b16 %v1332
        %v1368 = vunpack.c.l.b16 %v1333
        %v1369 = vunpack.c.h.b16 %v1333
        %v1370 = vunpack.c.l.b16 %v1334
        %v1371 = vunpack.c.h.b16 %v1334
        %v1372 = vunpack.c.l.b16 %v1335
        %v1373 = vunpack.c.h.b16 %v1335
        %v1374 = vunpack.c.l.b16 %v1336
        %v1375 = vunpack.c.h.b16 %v1336
        %v1376 = vunpack.c.l.b16 %v1337
        %v1377 = vunpack.c.h.b16 %v1337
        %v1378 = vunpack.c.l.b16 %v1338
        %v1379 = vunpack.c.h.b16 %v1338
        %v1380 = vunpack.c.l.b16 %v1339
        %v1381 = vunpack.c.h.b16 %v1339
        %v1382 = vunpack.c.l.b16 %v1340
        %v1383 = vunpack.c.h.b16 %v1340
        %v1384 = vunpack.c.l.b16 %v1341
        %v1385 = vunpack.c.h.b16 %v1341
        %v1386 = vunpack.c.l.b16 %v1342
        %v1387 = vunpack.c.h.b16 %v1342
        %v1388 = vunpack.c.l.b16 %v1343
        %v1389 = vunpack.c.h.b16 %v1343
        %v1390 = vunpack.c.l.b16 %v1344
        %v1391 = vunpack.c.h.b16 %v1344
        %v1392 = vunpack.c.l.b16 %v1345
        %v1393 = vunpack.c.h.b16 %v1345
        %v1394 = vpack.c.b16 %v1364, %v1362
        %v1395 = vpack.c.b16 %v1365, %v1363
        %v1396 = vpack.c.b16 %v1368, %v1366
        %v1397 = vpack.c.b16 %v1369, %v1367
        %v1398 = vpack.c.b16 %v1372, %v1370
        %v1399 = vpack.c.b16 %v1373, %v1371
        %v1400 = vpack.c.b16 %v1376, %v1374
        %v1401 = vpack.c.b16 %v1377, %v1375
        %v1402 = vpack.c.b16 %v1380, %v1378
        %v1403 = vpack.c.b16 %v1381, %v1379
        %v1404 = vpack.c.b16 %v1384, %v1382
        %v1405 = vpack.c.b16 %v1385, %v1383
        %v1406 = vpack.c.b16 %v1388, %v1386
        %v1407 = vpack.c.b16 %v1389, %v1387
        %v1408 = vpack.c.b16 %v1392, %v1390
        %v1409 = vpack.c.b16 %v1393, %v1391
        %1426 = vmatprep.subr.bf16.mxu0 %v1409
        %1427 = vmatpush1.bf16.msra.mxu0 %v1408
        %1428 = vmatprep.subr.bf16.mxu0 %v1407
        %1429 = vmatpush1.bf16.msra.mxu0 %v1406
        %1430 = vmatprep.subr.bf16.mxu0 %v1405
        %1431 = vmatpush1.bf16.msra.mxu0 %v1404
        %1432 = vmatprep.subr.bf16.mxu0 %v1403
        %1433 = vmatpush1.bf16.msra.mxu0 %v1402
        %1434 = vmatprep.subr.bf16.mxu0 %v1401
        %1435 = vmatpush1.bf16.msra.mxu0 %v1400
        %1436 = vmatprep.subr.bf16.mxu0 %v1399
        %1437 = vmatpush1.bf16.msra.mxu0 %v1398
        %1438 = vmatprep.subr.bf16.mxu0 %v1397
        %1439 = vmatpush1.bf16.msra.mxu0 %v1396
        %1440 = vmatprep.subr.bf16.mxu0 %v1395
        %1441 = vmatpush1.bf16.msra.mxu0 %v1394
        %1442 = vmatprep.subr.bf16.mxu0 0
        %1443 = vmatpush2.bf16.msra.mxu0 0
        %1444 = vmatprep.subr.bf16.mxu0 0
        %1445 = vmatpush2.bf16.msra.mxu0 0
        %1446 = vmatprep.subr.bf16.mxu0 0
        %1447 = vmatpush2.bf16.msra.mxu0 0
        %1448 = vmatprep.subr.bf16.mxu0 0
        %1449 = vmatpush2.bf16.msra.mxu0 0
        %1450 = vmatprep.subr.bf16.mxu0 0
        %1451 = vmatpush2.bf16.msra.mxu0 0
        %1452 = vmatprep.subr.bf16.mxu0 0
        %1453 = vmatpush2.bf16.msra.mxu0 0
        %1454 = vmatprep.subr.bf16.mxu0 0
        %1455 = vmatpush2.bf16.msra.mxu0 0
        %1456 = vmatprep.subr.bf16.mxu0 0
        %1457 = vmatpush2.bf16.msra.mxu0 0
        %1458 = vmatprep.mubr.bf16.mxu0 0
        %1459 = vmatmul.mubr.bf16.gmra.mxu0 %v1115
        %v1460 = vpop.f32.mrf.mxu0
        %v1461 = vadd.f32 0.0, %v1460
        %v1462 = vpop.f32.mrf.mxu0
        %v1463 = vadd.f32 0.0, %v1462
        %v1464 = vpop.f32.mrf.mxu0
        %v1465 = vadd.f32 0.0, %v1464
        %v1466 = vpop.f32.mrf.mxu0
        %v1467 = vadd.f32 0.0, %v1466
        %1468 = vdwg.mxu0
        %v1469 = vld [vmem:[%s11 + $0x2] sm:$0x3]
        %v1471 = vlaneseq
        %v1472 = vshrl.u32 %v1471, 7
        %v1473 = vsub.s32 0, %v1472
        %v1474 = vrot.slane %v1469, %v1473
        %v1475 = vlaneseq
        %v1476 = vshrl.u32 %v1475, 7
        %v1477 = vsub.s32 1, %v1476
        %v1478 = vrot.slane %v1469, %v1477
        %v1481 = vmul.f32 %v1461, %v1474
        %v1482 = vmul.f32 %v1463, %v1478
        %v1483 = vmul.f32 %v1465, %v1474
        %v1484 = vmul.f32 %v1467, %v1478
        %v1485 = vld [vmem:[%s12 + $0x2] sm:$0x3]
        %v1487 = vlaneseq
        %v1488 = vshrl.u32 %v1487, 7
        %v1489 = vsub.s32 0, %v1488
        %v1490 = vrot.slane %v1485, %v1489
        %v1491 = vlaneseq
        %v1492 = vshrl.u32 %v1491, 7
        %v1493 = vsub.s32 1, %v1492
        %v1494 = vrot.slane %v1485, %v1493
        %v1497 = vadd.f32 %v1481, %v1490
        %v1498 = vadd.f32 %v1482, %v1494
        %v1499 = vadd.f32 %v1483, %v1490
        %v1500 = vadd.f32 %v1484, %v1494
        %v1501 = vmax.f32 %v1497, 0.0
        %v1502 = vmax.f32 %v1498, 0.0
        %v1503 = vmax.f32 %v1499, 0.0
        %v1504 = vmax.f32 %v1500, 0.0
        %v1505 = vld [vmem:[#allocation2 + $0x2] sm:$0x3]
        %v1506 = vmax.f32 %v1501, %v1503
        %v1507 = vrot.slane %v1506, 4
        %v1508 = vmax.f32 %v1506, %v1507
        %v1509 = vrot.slane %v1508, 2
        %v1510 = vmax.f32 %v1508, %v1509
        %v1511 = vrot.slane %v1510, 1
        %v1512 = vmax.f32 %v1510, %v1511
        %v1513 = vmax.f32 %v1502, %v1504
        %v1514 = vrot.slane %v1513, 4
        %v1515 = vmax.f32 %v1513, %v1514
        %v1516 = vrot.slane %v1515, 2
        %v1517 = vmax.f32 %v1515, %v1516
        %v1518 = vrot.slane %v1517, 1
        %v1519 = vmax.f32 %v1517, %v1518
        %v1522 = vcombine.low %v1512, %v1519
        %v1524 = vunpack.c.l.s4 1966171168
        %v1525 = vunpack.c.0.s8 %v1524
        %v1526 = vlaneseq
        %v1527 = vshrl.u32 %v1526, 7
        %v1528 = vsub.s32 %v1525, %v1527
        %v1529 = vrot.slane %v1522, %v1528
        %v1531 = vunpack.c.l.s4 1966171168
        %v1532 = vunpack.c.0.s8 %v1531
        %v1533 = vlaneseq
        %v1534 = vshrl.u32 %v1533, 7
        %v1535 = vsub.s32 %v1532, %v1534
        %v1536 = vrot.slane %v1529, %v1535
        %v1538 = vmax.f32 %v1505, %v1536
        %1539 = vst.msk [vmem:[#allocation2 + $0x2] sm:$0x3] %vm1328, %v1538
        %v1540 = vld [vmem:[#allocation17 + $0x10] sm:$0xff]
        %v1541 = vld [vmem:[#allocation17 + $0x30] sm:$0xff]
        %v1542 = vld [vmem:[#allocation17 + $0x50] sm:$0xff]
        %v1543 = vld [vmem:[#allocation17 + $0x70] sm:$0xff]
        %v1544 = vld [vmem:[#allocation17 + $0x90] sm:$0xff]
        %v1545 = vld [vmem:[#allocation17 + $0xb0] sm:$0xff]
        %v1546 = vld [vmem:[#allocation17 + $0xd0] sm:$0xff]
        %v1547 = vld [vmem:[#allocation17 + $0xf0] sm:$0xff]
        %v1548 = vld [vmem:[#allocation17 + $0x110] sm:$0xff]
        %v1549 = vld [vmem:[#allocation17 + $0x130] sm:$0xff]
        %v1550 = vld [vmem:[#allocation17 + $0x150] sm:$0xff]
        %v1551 = vld [vmem:[#allocation17 + $0x170] sm:$0xff]
        %v1552 = vld [vmem:[#allocation17 + $0x190] sm:$0xff]
        %v1553 = vld [vmem:[#allocation17 + $0x1b0] sm:$0xff]
        %v1554 = vld [vmem:[#allocation17 + $0x1d0] sm:$0xff]
        %v1555 = vld [vmem:[#allocation17 + $0x1f0] sm:$0xff]
        %v1572 = vunpack.c.l.b16 %v1540
        %v1573 = vunpack.c.h.b16 %v1540
        %v1574 = vunpack.c.l.b16 %v1541
        %v1575 = vunpack.c.h.b16 %v1541
        %v1576 = vunpack.c.l.b16 %v1542
        %v1577 = vunpack.c.h.b16 %v1542
        %v1578 = vunpack.c.l.b16 %v1543
        %v1579 = vunpack.c.h.b16 %v1543
        %v1580 = vunpack.c.l.b16 %v1544
        %v1581 = vunpack.c.h.b16 %v1544
        %v1582 = vunpack.c.l.b16 %v1545
        %v1583 = vunpack.c.h.b16 %v1545
        %v1584 = vunpack.c.l.b16 %v1546
        %v1585 = vunpack.c.h.b16 %v1546
        %v1586 = vunpack.c.l.b16 %v1547
        %v1587 = vunpack.c.h.b16 %v1547
        %v1588 = vunpack.c.l.b16 %v1548
        %v1589 = vunpack.c.h.b16 %v1548
        %v1590 = vunpack.c.l.b16 %v1549
        %v1591 = vunpack.c.h.b16 %v1549
        %v1592 = vunpack.c.l.b16 %v1550
        %v1593 = vunpack.c.h.b16 %v1550
        %v1594 = vunpack.c.l.b16 %v1551
        %v1595 = vunpack.c.h.b16 %v1551
        %v1596 = vunpack.c.l.b16 %v1552
        %v1597 = vunpack.c.h.b16 %v1552
        %v1598 = vunpack.c.l.b16 %v1553
        %v1599 = vunpack.c.h.b16 %v1553
        %v1600 = vunpack.c.l.b16 %v1554
        %v1601 = vunpack.c.h.b16 %v1554
        %v1602 = vunpack.c.l.b16 %v1555
        %v1603 = vunpack.c.h.b16 %v1555
        %v1604 = vpack.c.b16 %v1574, %v1572
        %v1605 = vpack.c.b16 %v1575, %v1573
        %v1606 = vpack.c.b16 %v1578, %v1576
        %v1607 = vpack.c.b16 %v1579, %v1577
        %v1608 = vpack.c.b16 %v1582, %v1580
        %v1609 = vpack.c.b16 %v1583, %v1581
        %v1610 = vpack.c.b16 %v1586, %v1584
        %v1611 = vpack.c.b16 %v1587, %v1585
        %v1612 = vpack.c.b16 %v1590, %v1588
        %v1613 = vpack.c.b16 %v1591, %v1589
        %v1614 = vpack.c.b16 %v1594, %v1592
        %v1615 = vpack.c.b16 %v1595, %v1593
        %v1616 = vpack.c.b16 %v1598, %v1596
        %v1617 = vpack.c.b16 %v1599, %v1597
        %v1618 = vpack.c.b16 %v1602, %v1600
        %v1619 = vpack.c.b16 %v1603, %v1601
        %1636 = vmatprep.subr.bf16.mxu0 %v1619
        %1637 = vmatpush1.bf16.msra.mxu0 %v1618
        %1638 = vmatprep.subr.bf16.mxu0 %v1617
        %1639 = vmatpush1.bf16.msra.mxu0 %v1616
        %1640 = vmatprep.subr.bf16.mxu0 %v1615
        %1641 = vmatpush1.bf16.msra.mxu0 %v1614
        %1642 = vmatprep.subr.bf16.mxu0 %v1613
        %1643 = vmatpush1.bf16.msra.mxu0 %v1612
        %1644 = vmatprep.subr.bf16.mxu0 %v1611
        %1645 = vmatpush1.bf16.msra.mxu0 %v1610
        %1646 = vmatprep.subr.bf16.mxu0 %v1609
        %1647 = vmatpush1.bf16.msra.mxu0 %v1608
        %1648 = vmatprep.subr.bf16.mxu0 %v1607
        %1649 = vmatpush1.bf16.msra.mxu0 %v1606
        %1650 = vmatprep.subr.bf16.mxu0 %v1605
        %1651 = vmatpush1.bf16.msra.mxu0 %v1604
        %1652 = vmatprep.subr.bf16.mxu0 0
        %1653 = vmatpush2.bf16.msra.mxu0 0
        %1654 = vmatprep.subr.bf16.mxu0 0
        %1655 = vmatpush2.bf16.msra.mxu0 0
        %1656 = vmatprep.subr.bf16.mxu0 0
        %1657 = vmatpush2.bf16.msra.mxu0 0
        %1658 = vmatprep.subr.bf16.mxu0 0
        %1659 = vmatpush2.bf16.msra.mxu0 0
        %1660 = vmatprep.subr.bf16.mxu0 0
        %1661 = vmatpush2.bf16.msra.mxu0 0
        %1662 = vmatprep.subr.bf16.mxu0 0
        %1663 = vmatpush2.bf16.msra.mxu0 0
        %1664 = vmatprep.subr.bf16.mxu0 0
        %1665 = vmatpush2.bf16.msra.mxu0 0
        %1666 = vmatprep.subr.bf16.mxu0 0
        %1667 = vmatpush2.bf16.msra.mxu0 0
        %1668 = vmatprep.mubr.bf16.mxu0 0
        %1669 = vmatmul.mubr.bf16.gmra.mxu0 %v1115
        %v1670 = vpop.f32.mrf.mxu0
        %v1671 = vadd.f32 0.0, %v1670
        %v1672 = vpop.f32.mrf.mxu0
        %v1673 = vadd.f32 0.0, %v1672
        %v1674 = vpop.f32.mrf.mxu0
        %v1675 = vadd.f32 0.0, %v1674
        %v1676 = vpop.f32.mrf.mxu0
        %v1677 = vadd.f32 0.0, %v1676
        %1678 = vdwg.mxu0
        %v1679 = vld [vmem:[%s11 + $0x4] sm:$0x3]
        %v1681 = vlaneseq
        %v1682 = vshrl.u32 %v1681, 7
        %v1683 = vsub.s32 0, %v1682
        %v1684 = vrot.slane %v1679, %v1683
        %v1685 = vlaneseq
        %v1686 = vshrl.u32 %v1685, 7
        %v1687 = vsub.s32 1, %v1686
        %v1688 = vrot.slane %v1679, %v1687
        %v1691 = vmul.f32 %v1671, %v1684
        %v1692 = vmul.f32 %v1673, %v1688
        %v1693 = vmul.f32 %v1675, %v1684
        %v1694 = vmul.f32 %v1677, %v1688
        %v1695 = vld [vmem:[%s12 + $0x4] sm:$0x3]
        %v1697 = vlaneseq
        %v1698 = vshrl.u32 %v1697, 7
        %v1699 = vsub.s32 0, %v1698
        %v1700 = vrot.slane %v1695, %v1699
        %v1701 = vlaneseq
        %v1702 = vshrl.u32 %v1701, 7
        %v1703 = vsub.s32 1, %v1702
        %v1704 = vrot.slane %v1695, %v1703
        %v1707 = vadd.f32 %v1691, %v1700
        %v1708 = vadd.f32 %v1692, %v1704
        %v1709 = vadd.f32 %v1693, %v1700
        %v1710 = vadd.f32 %v1694, %v1704
        %v1711 = vmax.f32 %v1707, 0.0
        %v1712 = vmax.f32 %v1708, 0.0
        %v1713 = vmax.f32 %v1709, 0.0
        %v1714 = vmax.f32 %v1710, 0.0
        %v1715 = vld [vmem:[#allocation2 + $0x4] sm:$0x3]
        %v1716 = vmax.f32 %v1711, %v1713
        %v1717 = vrot.slane %v1716, 4
        %v1718 = vmax.f32 %v1716, %v1717
        %v1719 = vrot.slane %v1718, 2
        %v1720 = vmax.f32 %v1718, %v1719
        %v1721 = vrot.slane %v1720, 1
        %v1722 = vmax.f32 %v1720, %v1721
        %v1723 = vmax.f32 %v1712, %v1714
        %v1724 = vrot.slane %v1723, 4
        %v1725 = vmax.f32 %v1723, %v1724
        %v1726 = vrot.slane %v1725, 2
        %v1727 = vmax.f32 %v1725, %v1726
        %v1728 = vrot.slane %v1727, 1
        %v1729 = vmax.f32 %v1727, %v1728
        %v1732 = vcombine.low %v1722, %v1729
        %v1734 = vunpack.c.l.s4 1966171168
        %v1735 = vunpack.c.0.s8 %v1734
        %v1736 = vlaneseq
        %v1737 = vshrl.u32 %v1736, 7
        %v1738 = vsub.s32 %v1735, %v1737
        %v1739 = vrot.slane %v1732, %v1738
        %v1741 = vunpack.c.l.s4 1966171168
        %v1742 = vunpack.c.0.s8 %v1741
        %v1743 = vlaneseq
        %v1744 = vshrl.u32 %v1743, 7
        %v1745 = vsub.s32 %v1742, %v1744
        %v1746 = vrot.slane %v1739, %v1745
        %v1748 = vmax.f32 %v1715, %v1746
        %1749 = vst.msk [vmem:[#allocation2 + $0x4] sm:$0x3] %vm1328, %v1748
        %v1750 = vld [vmem:[#allocation17 + $0x18] sm:$0xff]
        %v1751 = vld [vmem:[#allocation17 + $0x38] sm:$0xff]
        %v1752 = vld [vmem:[#allocation17 + $0x58] sm:$0xff]
        %v1753 = vld [vmem:[#allocation17 + $0x78] sm:$0xff]
        %v1754 = vld [vmem:[#allocation17 + $0x98] sm:$0xff]
        %v1755 = vld [vmem:[#allocation17 + $0xb8] sm:$0xff]
        %v1756 = vld [vmem:[#allocation17 + $0xd8] sm:$0xff]
        %v1757 = vld [vmem:[#allocation17 + $0xf8] sm:$0xff]
        %v1758 = vld [vmem:[#allocation17 + $0x118] sm:$0xff]
        %v1759 = vld [vmem:[#allocation17 + $0x138] sm:$0xff]
        %v1760 = vld [vmem:[#allocation17 + $0x158] sm:$0xff]
        %v1761 = vld [vmem:[#allocation17 + $0x178] sm:$0xff]
        %v1762 = vld [vmem:[#allocation17 + $0x198] sm:$0xff]
        %v1763 = vld [vmem:[#allocation17 + $0x1b8] sm:$0xff]
        %v1764 = vld [vmem:[#allocation17 + $0x1d8] sm:$0xff]
        %v1765 = vld [vmem:[#allocation17 + $0x1f8] sm:$0xff]
        %v1782 = vunpack.c.l.b16 %v1750
        %v1783 = vunpack.c.h.b16 %v1750
        %v1784 = vunpack.c.l.b16 %v1751
        %v1785 = vunpack.c.h.b16 %v1751
        %v1786 = vunpack.c.l.b16 %v1752
        %v1787 = vunpack.c.h.b16 %v1752
        %v1788 = vunpack.c.l.b16 %v1753
        %v1789 = vunpack.c.h.b16 %v1753
        %v1790 = vunpack.c.l.b16 %v1754
        %v1791 = vunpack.c.h.b16 %v1754
        %v1792 = vunpack.c.l.b16 %v1755
        %v1793 = vunpack.c.h.b16 %v1755
        %v1794 = vunpack.c.l.b16 %v1756
        %v1795 = vunpack.c.h.b16 %v1756
        %v1796 = vunpack.c.l.b16 %v1757
        %v1797 = vunpack.c.h.b16 %v1757
        %v1798 = vunpack.c.l.b16 %v1758
        %v1799 = vunpack.c.h.b16 %v1758
        %v1800 = vunpack.c.l.b16 %v1759
        %v1801 = vunpack.c.h.b16 %v1759
        %v1802 = vunpack.c.l.b16 %v1760
        %v1803 = vunpack.c.h.b16 %v1760
        %v1804 = vunpack.c.l.b16 %v1761
        %v1805 = vunpack.c.h.b16 %v1761
        %v1806 = vunpack.c.l.b16 %v1762
        %v1807 = vunpack.c.h.b16 %v1762
        %v1808 = vunpack.c.l.b16 %v1763
        %v1809 = vunpack.c.h.b16 %v1763
        %v1810 = vunpack.c.l.b16 %v1764
        %v1811 = vunpack.c.h.b16 %v1764
        %v1812 = vunpack.c.l.b16 %v1765
        %v1813 = vunpack.c.h.b16 %v1765
        %v1814 = vpack.c.b16 %v1784, %v1782
        %v1815 = vpack.c.b16 %v1785, %v1783
        %v1816 = vpack.c.b16 %v1788, %v1786
        %v1817 = vpack.c.b16 %v1789, %v1787
        %v1818 = vpack.c.b16 %v1792, %v1790
        %v1819 = vpack.c.b16 %v1793, %v1791
        %v1820 = vpack.c.b16 %v1796, %v1794
        %v1821 = vpack.c.b16 %v1797, %v1795
        %v1822 = vpack.c.b16 %v1800, %v1798
        %v1823 = vpack.c.b16 %v1801, %v1799
        %v1824 = vpack.c.b16 %v1804, %v1802
        %v1825 = vpack.c.b16 %v1805, %v1803
        %v1826 = vpack.c.b16 %v1808, %v1806
        %v1827 = vpack.c.b16 %v1809, %v1807
        %v1828 = vpack.c.b16 %v1812, %v1810
        %v1829 = vpack.c.b16 %v1813, %v1811
        %1846 = vmatprep.subr.bf16.mxu0 %v1829
        %1847 = vmatpush1.bf16.msra.mxu0 %v1828
        %1848 = vmatprep.subr.bf16.mxu0 %v1827
        %1849 = vmatpush1.bf16.msra.mxu0 %v1826
        %1850 = vmatprep.subr.bf16.mxu0 %v1825
        %1851 = vmatpush1.bf16.msra.mxu0 %v1824
        %1852 = vmatprep.subr.bf16.mxu0 %v1823
        %1853 = vmatpush1.bf16.msra.mxu0 %v1822
        %1854 = vmatprep.subr.bf16.mxu0 %v1821
        %1855 = vmatpush1.bf16.msra.mxu0 %v1820
        %1856 = vmatprep.subr.bf16.mxu0 %v1819
        %1857 = vmatpush1.bf16.msra.mxu0 %v1818
        %1858 = vmatprep.subr.bf16.mxu0 %v1817
        %1859 = vmatpush1.bf16.msra.mxu0 %v1816
        %1860 = vmatprep.subr.bf16.mxu0 %v1815
        %1861 = vmatpush1.bf16.msra.mxu0 %v1814
        %1862 = vmatprep.subr.bf16.mxu0 0
        %1863 = vmatpush2.bf16.msra.mxu0 0
        %1864 = vmatprep.subr.bf16.mxu0 0
        %1865 = vmatpush2.bf16.msra.mxu0 0
        %1866 = vmatprep.subr.bf16.mxu0 0
        %1867 = vmatpush2.bf16.msra.mxu0 0
        %1868 = vmatprep.subr.bf16.mxu0 0
        %1869 = vmatpush2.bf16.msra.mxu0 0
        %1870 = vmatprep.subr.bf16.mxu0 0
        %1871 = vmatpush2.bf16.msra.mxu0 0
        %1872 = vmatprep.subr.bf16.mxu0 0
        %1873 = vmatpush2.bf16.msra.mxu0 0
        %1874 = vmatprep.subr.bf16.mxu0 0
        %1875 = vmatpush2.bf16.msra.mxu0 0
        %1876 = vmatprep.subr.bf16.mxu0 0
        %1877 = vmatpush2.bf16.msra.mxu0 0
        %1878 = vmatprep.mubr.bf16.mxu0 0
        %1879 = vmatmul.mubr.bf16.gmra.mxu0 %v1115
        %v1880 = vpop.f32.mrf.mxu0
        %v1881 = vadd.f32 0.0, %v1880
        %v1882 = vpop.f32.mrf.mxu0
        %v1883 = vadd.f32 0.0, %v1882
        %v1884 = vpop.f32.mrf.mxu0
        %v1885 = vadd.f32 0.0, %v1884
        %v1886 = vpop.f32.mrf.mxu0
        %v1887 = vadd.f32 0.0, %v1886
        %1888 = vdwg.mxu0
        %v1889 = vld [vmem:[%s11 + $0x6] sm:$0x3]
        %v1891 = vlaneseq
        %v1892 = vshrl.u32 %v1891, 7
        %v1893 = vsub.s32 0, %v1892
        %v1894 = vrot.slane %v1889, %v1893
        %v1895 = vlaneseq
        %v1896 = vshrl.u32 %v1895, 7
        %v1897 = vsub.s32 1, %v1896
        %v1898 = vrot.slane %v1889, %v1897
        %v1901 = vmul.f32 %v1881, %v1894
        %v1902 = vmul.f32 %v1883, %v1898
        %v1903 = vmul.f32 %v1885, %v1894
        %v1904 = vmul.f32 %v1887, %v1898
        %v1905 = vld [vmem:[%s12 + $0x6] sm:$0x3]
        %v1907 = vlaneseq
        %v1908 = vshrl.u32 %v1907, 7
        %v1909 = vsub.s32 0, %v1908
        %v1910 = vrot.slane %v1905, %v1909
        %v1911 = vlaneseq
        %v1912 = vshrl.u32 %v1911, 7
        %v1913 = vsub.s32 1, %v1912
        %v1914 = vrot.slane %v1905, %v1913
        %v1917 = vadd.f32 %v1901, %v1910
        %v1918 = vadd.f32 %v1902, %v1914
        %v1919 = vadd.f32 %v1903, %v1910
        %v1920 = vadd.f32 %v1904, %v1914
        %v1921 = vmax.f32 %v1917, 0.0
        %v1922 = vmax.f32 %v1918, 0.0
        %v1923 = vmax.f32 %v1919, 0.0
        %v1924 = vmax.f32 %v1920, 0.0
        %v1925 = vld [vmem:[#allocation2 + $0x6] sm:$0x3]
        %v1926 = vmax.f32 %v1921, %v1923
        %v1927 = vrot.slane %v1926, 4
        %v1928 = vmax.f32 %v1926, %v1927
        %v1929 = vrot.slane %v1928, 2
        %v1930 = vmax.f32 %v1928, %v1929
        %v1931 = vrot.slane %v1930, 1
        %v1932 = vmax.f32 %v1930, %v1931
        %v1933 = vmax.f32 %v1922, %v1924
        %v1934 = vrot.slane %v1933, 4
        %v1935 = vmax.f32 %v1933, %v1934
        %v1936 = vrot.slane %v1935, 2
        %v1937 = vmax.f32 %v1935, %v1936
        %v1938 = vrot.slane %v1937, 1
        %v1939 = vmax.f32 %v1937, %v1938
        %v1942 = vcombine.low %v1932, %v1939
        %v1944 = vunpack.c.l.s4 1966171168
        %v1945 = vunpack.c.0.s8 %v1944
        %v1946 = vlaneseq
        %v1947 = vshrl.u32 %v1946, 7
        %v1948 = vsub.s32 %v1945, %v1947
        %v1949 = vrot.slane %v1942, %v1948
        %v1951 = vunpack.c.l.s4 1966171168
        %v1952 = vunpack.c.0.s8 %v1951
        %v1953 = vlaneseq
        %v1954 = vshrl.u32 %v1953, 7
        %v1955 = vsub.s32 %v1952, %v1954
        %v1956 = vrot.slane %v1949, %v1955
        %v1958 = vmax.f32 %v1925, %v1956
        %1959 = vst.msk [vmem:[#allocation2 + $0x6] sm:$0x3] %vm1328, %v1958
        // Predicated region
        $region157: #{tpu_custom_call.1} parent=103 // pred_check
          %p1960 = pneg %p844
        $region158: #{tpu_custom_call.1} parent=103 // pred_check_branch
          %1962 = sbr.rel (%p1960) target = $region160
        $region159: #{tpu_custom_call.1} parent=103 // pred_region
          %v1963 = vld [vmem:[#allocation2] sm:$0xff]
          %v1965 = vlaneseq
          %v1966 = vshrl.u32 %v1965, 7
          %v1967 = vsub.s32 0, %v1966
          %v1968 = vrot.slane %v1963, %v1967
          %v1969 = vlaneseq
          %v1970 = vshrl.u32 %v1969, 7
          %v1971 = vsub.s32 1, %v1970
          %v1972 = vrot.slane %v1963, %v1971
          %v1973 = vlaneseq
          %v1974 = vshrl.u32 %v1973, 7
          %v1975 = vsub.s32 2, %v1974
          %v1976 = vrot.slane %v1963, %v1975
          %v1977 = vlaneseq
          %v1978 = vshrl.u32 %v1977, 7
          %v1979 = vsub.s32 3, %v1978
          %v1980 = vrot.slane %v1963, %v1979
          %v1981 = vlaneseq
          %v1982 = vshrl.u32 %v1981, 7
          %v1983 = vsub.s32 4, %v1982
          %v1984 = vrot.slane %v1963, %v1983
          %v1985 = vlaneseq
          %v1986 = vshrl.u32 %v1985, 7
          %v1987 = vsub.s32 5, %v1986
          %v1988 = vrot.slane %v1963, %v1987
          %v1989 = vlaneseq
          %v1990 = vshrl.u32 %v1989, 7
          %v1991 = vsub.s32 6, %v1990
          %v1992 = vrot.slane %v1963, %v1991
          %v1993 = vlaneseq
          %v1994 = vshrl.u32 %v1993, 7
          %v1995 = vsub.s32 7, %v1994
          %v1996 = vrot.slane %v1963, %v1995
          %v2005 = vpack.c.bf16 %v1968, %v1968
          %v2006 = vpack.c.bf16 %v1972, %v1972
          %v2007 = vpack.c.bf16 %v1976, %v1976
          %v2008 = vpack.c.bf16 %v1980, %v1980
          %v2009 = vpack.c.bf16 %v1984, %v1984
          %v2010 = vpack.c.bf16 %v1988, %v1988
          %v2011 = vpack.c.bf16 %v1992, %v1992
          %v2012 = vpack.c.bf16 %v1996, %v1996
          %v2013 = vld [vmem:[#allocation18] sm:$0xff]
          %v2014 = vld [vmem:[#allocation18 + $0x8] sm:$0xff]
          %v2015 = vld [vmem:[#allocation18 + $0x10] sm:$0xff]
          %v2016 = vld [vmem:[#allocation18 + $0x18] sm:$0xff]
          %v2017 = vld [vmem:[#allocation18 + $0x20] sm:$0xff]
          %v2018 = vld [vmem:[#allocation18 + $0x28] sm:$0xff]
          %v2019 = vld [vmem:[#allocation18 + $0x30] sm:$0xff]
          %v2020 = vld [vmem:[#allocation18 + $0x38] sm:$0xff]
          %v2021 = vld [vmem:[#allocation18 + $0x40] sm:$0xff]
          %v2022 = vld [vmem:[#allocation18 + $0x48] sm:$0xff]
          %v2023 = vld [vmem:[#allocation18 + $0x50] sm:$0xff]
          %v2024 = vld [vmem:[#allocation18 + $0x58] sm:$0xff]
          %v2025 = vld [vmem:[#allocation18 + $0x60] sm:$0xff]
          %v2026 = vld [vmem:[#allocation18 + $0x68] sm:$0xff]
          %v2027 = vld [vmem:[#allocation18 + $0x70] sm:$0xff]
          %v2028 = vld [vmem:[#allocation18 + $0x78] sm:$0xff]
          %v2029 = vld [vmem:[#allocation18 + $0x80] sm:$0xff]
          %v2030 = vld [vmem:[#allocation18 + $0x88] sm:$0xff]
          %v2031 = vld [vmem:[#allocation18 + $0x90] sm:$0xff]
          %v2032 = vld [vmem:[#allocation18 + $0x98] sm:$0xff]
          %v2033 = vld [vmem:[#allocation18 + $0xa0] sm:$0xff]
          %v2034 = vld [vmem:[#allocation18 + $0xa8] sm:$0xff]
          %v2035 = vld [vmem:[#allocation18 + $0xb0] sm:$0xff]
          %v2036 = vld [vmem:[#allocation18 + $0xb8] sm:$0xff]
          %v2037 = vld [vmem:[#allocation18 + $0xc0] sm:$0xff]
          %v2038 = vld [vmem:[#allocation18 + $0xc8] sm:$0xff]
          %v2039 = vld [vmem:[#allocation18 + $0xd0] sm:$0xff]
          %v2040 = vld [vmem:[#allocation18 + $0xd8] sm:$0xff]
          %v2041 = vld [vmem:[#allocation18 + $0xe0] sm:$0xff]
          %v2042 = vld [vmem:[#allocation18 + $0xe8] sm:$0xff]
          %v2043 = vld [vmem:[#allocation18 + $0xf0] sm:$0xff]
          %v2044 = vld [vmem:[#allocation18 + $0xf8] sm:$0xff]
          %v2045 = vld [vmem:[#allocation18 + $0x100] sm:$0xff]
          %v2046 = vld [vmem:[#allocation18 + $0x108] sm:$0xff]
          %v2047 = vld [vmem:[#allocation18 + $0x110] sm:$0xff]
          %v2048 = vld [vmem:[#allocation18 + $0x118] sm:$0xff]
          %v2049 = vld [vmem:[#allocation18 + $0x120] sm:$0xff]
          %v2050 = vld [vmem:[#allocation18 + $0x128] sm:$0xff]
          %v2051 = vld [vmem:[#allocation18 + $0x130] sm:$0xff]
          %v2052 = vld [vmem:[#allocation18 + $0x138] sm:$0xff]
          %v2053 = vld [vmem:[#allocation18 + $0x140] sm:$0xff]
          %v2054 = vld [vmem:[#allocation18 + $0x148] sm:$0xff]
          %v2055 = vld [vmem:[#allocation18 + $0x150] sm:$0xff]
          %v2056 = vld [vmem:[#allocation18 + $0x158] sm:$0xff]
          %v2057 = vld [vmem:[#allocation18 + $0x160] sm:$0xff]
          %v2058 = vld [vmem:[#allocation18 + $0x168] sm:$0xff]
          %v2059 = vld [vmem:[#allocation18 + $0x170] sm:$0xff]
          %v2060 = vld [vmem:[#allocation18 + $0x178] sm:$0xff]
          %v2061 = vld [vmem:[#allocation18 + $0x180] sm:$0xff]
          %v2062 = vld [vmem:[#allocation18 + $0x188] sm:$0xff]
          %v2063 = vld [vmem:[#allocation18 + $0x190] sm:$0xff]
          %v2064 = vld [vmem:[#allocation18 + $0x198] sm:$0xff]
          %v2065 = vld [vmem:[#allocation18 + $0x1a0] sm:$0xff]
          %v2066 = vld [vmem:[#allocation18 + $0x1a8] sm:$0xff]
          %v2067 = vld [vmem:[#allocation18 + $0x1b0] sm:$0xff]
          %v2068 = vld [vmem:[#allocation18 + $0x1b8] sm:$0xff]
          %v2069 = vld [vmem:[#allocation18 + $0x1c0] sm:$0xff]
          %v2070 = vld [vmem:[#allocation18 + $0x1c8] sm:$0xff]
          %v2071 = vld [vmem:[#allocation18 + $0x1d0] sm:$0xff]
          %v2072 = vld [vmem:[#allocation18 + $0x1d8] sm:$0xff]
          %v2073 = vld [vmem:[#allocation18 + $0x1e0] sm:$0xff]
          %v2074 = vld [vmem:[#allocation18 + $0x1e8] sm:$0xff]
          %v2075 = vld [vmem:[#allocation18 + $0x1f0] sm:$0xff]
          %v2076 = vld [vmem:[#allocation18 + $0x1f8] sm:$0xff]
          %v2077 = vld [vmem:[#allocation18 + $0x200] sm:$0xff]
          %v2078 = vld [vmem:[#allocation18 + $0x208] sm:$0xff]
          %v2079 = vld [vmem:[#allocation18 + $0x210] sm:$0xff]
          %v2080 = vld [vmem:[#allocation18 + $0x218] sm:$0xff]
          %v2081 = vld [vmem:[#allocation18 + $0x220] sm:$0xff]
          %v2082 = vld [vmem:[#allocation18 + $0x228] sm:$0xff]
          %v2083 = vld [vmem:[#allocation18 + $0x230] sm:$0xff]
          %v2084 = vld [vmem:[#allocation18 + $0x238] sm:$0xff]
          %v2085 = vld [vmem:[#allocation18 + $0x240] sm:$0xff]
          %v2086 = vld [vmem:[#allocation18 + $0x248] sm:$0xff]
          %v2087 = vld [vmem:[#allocation18 + $0x250] sm:$0xff]
          %v2088 = vld [vmem:[#allocation18 + $0x258] sm:$0xff]
          %v2089 = vld [vmem:[#allocation18 + $0x260] sm:$0xff]
          %v2090 = vld [vmem:[#allocation18 + $0x268] sm:$0xff]
          %v2091 = vld [vmem:[#allocation18 + $0x270] sm:$0xff]
          %v2092 = vld [vmem:[#allocation18 + $0x278] sm:$0xff]
          %v2093 = vld [vmem:[#allocation18 + $0x280] sm:$0xff]
          %v2094 = vld [vmem:[#allocation18 + $0x288] sm:$0xff]
          %v2095 = vld [vmem:[#allocation18 + $0x290] sm:$0xff]
          %v2096 = vld [vmem:[#allocation18 + $0x298] sm:$0xff]
          %v2097 = vld [vmem:[#allocation18 + $0x2a0] sm:$0xff]
          %v2098 = vld [vmem:[#allocation18 + $0x2a8] sm:$0xff]
          %v2099 = vld [vmem:[#allocation18 + $0x2b0] sm:$0xff]
          %v2100 = vld [vmem:[#allocation18 + $0x2b8] sm:$0xff]
          %v2101 = vld [vmem:[#allocation18 + $0x2c0] sm:$0xff]
          %v2102 = vld [vmem:[#allocation18 + $0x2c8] sm:$0xff]
          %v2103 = vld [vmem:[#allocation18 + $0x2d0] sm:$0xff]
          %v2104 = vld [vmem:[#allocation18 + $0x2d8] sm:$0xff]
          %v2105 = vld [vmem:[#allocation18 + $0x2e0] sm:$0xff]
          %v2106 = vld [vmem:[#allocation18 + $0x2e8] sm:$0xff]
          %v2107 = vld [vmem:[#allocation18 + $0x2f0] sm:$0xff]
          %v2108 = vld [vmem:[#allocation18 + $0x2f8] sm:$0xff]
          %v2109 = vld [vmem:[#allocation18 + $0x300] sm:$0xff]
          %v2110 = vld [vmem:[#allocation18 + $0x308] sm:$0xff]
          %v2111 = vld [vmem:[#allocation18 + $0x310] sm:$0xff]
          %v2112 = vld [vmem:[#allocation18 + $0x318] sm:$0xff]
          %v2113 = vld [vmem:[#allocation18 + $0x320] sm:$0xff]
          %v2114 = vld [vmem:[#allocation18 + $0x328] sm:$0xff]
          %v2115 = vld [vmem:[#allocation18 + $0x330] sm:$0xff]
          %v2116 = vld [vmem:[#allocation18 + $0x338] sm:$0xff]
          %v2117 = vld [vmem:[#allocation18 + $0x340] sm:$0xff]
          %v2118 = vld [vmem:[#allocation18 + $0x348] sm:$0xff]
          %v2119 = vld [vmem:[#allocation18 + $0x350] sm:$0xff]
          %v2120 = vld [vmem:[#allocation18 + $0x358] sm:$0xff]
          %v2121 = vld [vmem:[#allocation18 + $0x360] sm:$0xff]
          %v2122 = vld [vmem:[#allocation18 + $0x368] sm:$0xff]
          %v2123 = vld [vmem:[#allocation18 + $0x370] sm:$0xff]
          %v2124 = vld [vmem:[#allocation18 + $0x378] sm:$0xff]
          %v2125 = vld [vmem:[#allocation18 + $0x380] sm:$0xff]
          %v2126 = vld [vmem:[#allocation18 + $0x388] sm:$0xff]
          %v2127 = vld [vmem:[#allocation18 + $0x390] sm:$0xff]
          %v2128 = vld [vmem:[#allocation18 + $0x398] sm:$0xff]
          %v2129 = vld [vmem:[#allocation18 + $0x3a0] sm:$0xff]
          %v2130 = vld [vmem:[#allocation18 + $0x3a8] sm:$0xff]
          %v2131 = vld [vmem:[#allocation18 + $0x3b0] sm:$0xff]
          %v2132 = vld [vmem:[#allocation18 + $0x3b8] sm:$0xff]
          %v2133 = vld [vmem:[#allocation18 + $0x3c0] sm:$0xff]
          %v2134 = vld [vmem:[#allocation18 + $0x3c8] sm:$0xff]
          %v2135 = vld [vmem:[#allocation18 + $0x3d0] sm:$0xff]
          %v2136 = vld [vmem:[#allocation18 + $0x3d8] sm:$0xff]
          %v2137 = vld [vmem:[#allocation18 + $0x3e0] sm:$0xff]
          %v2138 = vld [vmem:[#allocation18 + $0x3e8] sm:$0xff]
          %v2139 = vld [vmem:[#allocation18 + $0x3f0] sm:$0xff]
          %v2140 = vld [vmem:[#allocation18 + $0x3f8] sm:$0xff]
          %v2141 = vld [vmem:[#allocation18 + $0x400] sm:$0xff]
          %v2142 = vld [vmem:[#allocation18 + $0x408] sm:$0xff]
          %v2143 = vld [vmem:[#allocation18 + $0x410] sm:$0xff]
          %v2144 = vld [vmem:[#allocation18 + $0x418] sm:$0xff]
          %v2145 = vld [vmem:[#allocation18 + $0x420] sm:$0xff]
          %v2146 = vld [vmem:[#allocation18 + $0x428] sm:$0xff]
          %v2147 = vld [vmem:[#allocation18 + $0x430] sm:$0xff]
          %v2148 = vld [vmem:[#allocation18 + $0x438] sm:$0xff]
          %v2149 = vld [vmem:[#allocation18 + $0x440] sm:$0xff]
          %v2150 = vld [vmem:[#allocation18 + $0x448] sm:$0xff]
          %v2151 = vld [vmem:[#allocation18 + $0x450] sm:$0xff]
          %v2152 = vld [vmem:[#allocation18 + $0x458] sm:$0xff]
          %v2153 = vld [vmem:[#allocation18 + $0x460] sm:$0xff]
          %v2154 = vld [vmem:[#allocation18 + $0x468] sm:$0xff]
          %v2155 = vld [vmem:[#allocation18 + $0x470] sm:$0xff]
          %v2156 = vld [vmem:[#allocation18 + $0x478] sm:$0xff]
          %v2157 = vld [vmem:[#allocation18 + $0x480] sm:$0xff]
          %v2158 = vld [vmem:[#allocation18 + $0x488] sm:$0xff]
          %v2159 = vld [vmem:[#allocation18 + $0x490] sm:$0xff]
          %v2160 = vld [vmem:[#allocation18 + $0x498] sm:$0xff]
          %v2161 = vld [vmem:[#allocation18 + $0x4a0] sm:$0xff]
          %v2162 = vld [vmem:[#allocation18 + $0x4a8] sm:$0xff]
          %v2163 = vld [vmem:[#allocation18 + $0x4b0] sm:$0xff]
          %v2164 = vld [vmem:[#allocation18 + $0x4b8] sm:$0xff]
          %v2165 = vld [vmem:[#allocation18 + $0x4c0] sm:$0xff]
          %v2166 = vld [vmem:[#allocation18 + $0x4c8] sm:$0xff]
          %v2167 = vld [vmem:[#allocation18 + $0x4d0] sm:$0xff]
          %v2168 = vld [vmem:[#allocation18 + $0x4d8] sm:$0xff]
          %v2169 = vld [vmem:[#allocation18 + $0x4e0] sm:$0xff]
          %v2170 = vld [vmem:[#allocation18 + $0x4e8] sm:$0xff]
          %v2171 = vld [vmem:[#allocation18 + $0x4f0] sm:$0xff]
          %v2172 = vld [vmem:[#allocation18 + $0x4f8] sm:$0xff]
          %v2173 = vld [vmem:[#allocation18 + $0x500] sm:$0xff]
          %v2174 = vld [vmem:[#allocation18 + $0x508] sm:$0xff]
          %v2175 = vld [vmem:[#allocation18 + $0x510] sm:$0xff]
          %v2176 = vld [vmem:[#allocation18 + $0x518] sm:$0xff]
          %v2177 = vld [vmem:[#allocation18 + $0x520] sm:$0xff]
          %v2178 = vld [vmem:[#allocation18 + $0x528] sm:$0xff]
          %v2179 = vld [vmem:[#allocation18 + $0x530] sm:$0xff]
          %v2180 = vld [vmem:[#allocation18 + $0x538] sm:$0xff]
          %v2181 = vld [vmem:[#allocation18 + $0x540] sm:$0xff]
          %v2182 = vld [vmem:[#allocation18 + $0x548] sm:$0xff]
          %v2183 = vld [vmem:[#allocation18 + $0x550] sm:$0xff]
          %v2184 = vld [vmem:[#allocation18 + $0x558] sm:$0xff]
          %v2185 = vld [vmem:[#allocation18 + $0x560] sm:$0xff]
          %v2186 = vld [vmem:[#allocation18 + $0x568] sm:$0xff]
          %v2187 = vld [vmem:[#allocation18 + $0x570] sm:$0xff]
          %v2188 = vld [vmem:[#allocation18 + $0x578] sm:$0xff]
          %v2189 = vld [vmem:[#allocation18 + $0x580] sm:$0xff]
          %v2190 = vld [vmem:[#allocation18 + $0x588] sm:$0xff]
          %v2191 = vld [vmem:[#allocation18 + $0x590] sm:$0xff]
          %v2192 = vld [vmem:[#allocation18 + $0x598] sm:$0xff]
          %v2193 = vld [vmem:[#allocation18 + $0x5a0] sm:$0xff]
          %v2194 = vld [vmem:[#allocation18 + $0x5a8] sm:$0xff]
          %v2195 = vld [vmem:[#allocation18 + $0x5b0] sm:$0xff]
          %v2196 = vld [vmem:[#allocation18 + $0x5b8] sm:$0xff]
          %v2197 = vld [vmem:[#allocation18 + $0x5c0] sm:$0xff]
          %v2198 = vld [vmem:[#allocation18 + $0x5c8] sm:$0xff]
          %v2199 = vld [vmem:[#allocation18 + $0x5d0] sm:$0xff]
          %v2200 = vld [vmem:[#allocation18 + $0x5d8] sm:$0xff]
          %v2201 = vld [vmem:[#allocation18 + $0x5e0] sm:$0xff]
          %v2202 = vld [vmem:[#allocation18 + $0x5e8] sm:$0xff]
          %v2203 = vld [vmem:[#allocation18 + $0x5f0] sm:$0xff]
          %v2204 = vld [vmem:[#allocation18 + $0x5f8] sm:$0xff]
          %v2205 = vld [vmem:[#allocation18 + $0x600] sm:$0xff]
          %v2206 = vld [vmem:[#allocation18 + $0x608] sm:$0xff]
          %v2207 = vld [vmem:[#allocation18 + $0x610] sm:$0xff]
          %v2208 = vld [vmem:[#allocation18 + $0x618] sm:$0xff]
          %v2209 = vld [vmem:[#allocation18 + $0x620] sm:$0xff]
          %v2210 = vld [vmem:[#allocation18 + $0x628] sm:$0xff]
          %v2211 = vld [vmem:[#allocation18 + $0x630] sm:$0xff]
          %v2212 = vld [vmem:[#allocation18 + $0x638] sm:$0xff]
          %v2213 = vld [vmem:[#allocation18 + $0x640] sm:$0xff]
          %v2214 = vld [vmem:[#allocation18 + $0x648] sm:$0xff]
          %v2215 = vld [vmem:[#allocation18 + $0x650] sm:$0xff]
          %v2216 = vld [vmem:[#allocation18 + $0x658] sm:$0xff]
          %v2217 = vld [vmem:[#allocation18 + $0x660] sm:$0xff]
          %v2218 = vld [vmem:[#allocation18 + $0x668] sm:$0xff]
          %v2219 = vld [vmem:[#allocation18 + $0x670] sm:$0xff]
          %v2220 = vld [vmem:[#allocation18 + $0x678] sm:$0xff]
          %v2221 = vld [vmem:[#allocation18 + $0x680] sm:$0xff]
          %v2222 = vld [vmem:[#allocation18 + $0x688] sm:$0xff]
          %v2223 = vld [vmem:[#allocation18 + $0x690] sm:$0xff]
          %v2224 = vld [vmem:[#allocation18 + $0x698] sm:$0xff]
          %v2225 = vld [vmem:[#allocation18 + $0x6a0] sm:$0xff]
          %v2226 = vld [vmem:[#allocation18 + $0x6a8] sm:$0xff]
          %v2227 = vld [vmem:[#allocation18 + $0x6b0] sm:$0xff]
          %v2228 = vld [vmem:[#allocation18 + $0x6b8] sm:$0xff]
          %v2229 = vld [vmem:[#allocation18 + $0x6c0] sm:$0xff]
          %v2230 = vld [vmem:[#allocation18 + $0x6c8] sm:$0xff]
          %v2231 = vld [vmem:[#allocation18 + $0x6d0] sm:$0xff]
          %v2232 = vld [vmem:[#allocation18 + $0x6d8] sm:$0xff]
          %v2233 = vld [vmem:[#allocation18 + $0x6e0] sm:$0xff]
          %v2234 = vld [vmem:[#allocation18 + $0x6e8] sm:$0xff]
          %v2235 = vld [vmem:[#allocation18 + $0x6f0] sm:$0xff]
          %v2236 = vld [vmem:[#allocation18 + $0x6f8] sm:$0xff]
          %v2237 = vld [vmem:[#allocation18 + $0x700] sm:$0xff]
          %v2238 = vld [vmem:[#allocation18 + $0x708] sm:$0xff]
          %v2239 = vld [vmem:[#allocation18 + $0x710] sm:$0xff]
          %v2240 = vld [vmem:[#allocation18 + $0x718] sm:$0xff]
          %v2241 = vld [vmem:[#allocation18 + $0x720] sm:$0xff]
          %v2242 = vld [vmem:[#allocation18 + $0x728] sm:$0xff]
          %v2243 = vld [vmem:[#allocation18 + $0x730] sm:$0xff]
          %v2244 = vld [vmem:[#allocation18 + $0x738] sm:$0xff]
          %v2245 = vld [vmem:[#allocation18 + $0x740] sm:$0xff]
          %v2246 = vld [vmem:[#allocation18 + $0x748] sm:$0xff]
          %v2247 = vld [vmem:[#allocation18 + $0x750] sm:$0xff]
          %v2248 = vld [vmem:[#allocation18 + $0x758] sm:$0xff]
          %v2249 = vld [vmem:[#allocation18 + $0x760] sm:$0xff]
          %v2250 = vld [vmem:[#allocation18 + $0x768] sm:$0xff]
          %v2251 = vld [vmem:[#allocation18 + $0x770] sm:$0xff]
          %v2252 = vld [vmem:[#allocation18 + $0x778] sm:$0xff]
          %v2253 = vld [vmem:[#allocation18 + $0x780] sm:$0xff]
          %v2254 = vld [vmem:[#allocation18 + $0x788] sm:$0xff]
          %v2255 = vld [vmem:[#allocation18 + $0x790] sm:$0xff]
          %v2256 = vld [vmem:[#allocation18 + $0x798] sm:$0xff]
          %v2257 = vld [vmem:[#allocation18 + $0x7a0] sm:$0xff]
          %v2258 = vld [vmem:[#allocation18 + $0x7a8] sm:$0xff]
          %v2259 = vld [vmem:[#allocation18 + $0x7b0] sm:$0xff]
          %v2260 = vld [vmem:[#allocation18 + $0x7b8] sm:$0xff]
          %v2261 = vld [vmem:[#allocation18 + $0x7c0] sm:$0xff]
          %v2262 = vld [vmem:[#allocation18 + $0x7c8] sm:$0xff]
          %v2263 = vld [vmem:[#allocation18 + $0x7d0] sm:$0xff]
          %v2264 = vld [vmem:[#allocation18 + $0x7d8] sm:$0xff]
          %v2265 = vld [vmem:[#allocation18 + $0x7e0] sm:$0xff]
          %v2266 = vld [vmem:[#allocation18 + $0x7e8] sm:$0xff]
          %v2267 = vld [vmem:[#allocation18 + $0x7f0] sm:$0xff]
          %v2268 = vld [vmem:[#allocation18 + $0x7f8] sm:$0xff]
          %v2525 = vunpack.c.l.b16 %v2013
          %v2526 = vunpack.c.h.b16 %v2013
          %v2527 = vunpack.c.l.b16 %v2014
          %v2528 = vunpack.c.h.b16 %v2014
          %v2529 = vunpack.c.l.b16 %v2015
          %v2530 = vunpack.c.h.b16 %v2015
          %v2531 = vunpack.c.l.b16 %v2016
          %v2532 = vunpack.c.h.b16 %v2016
          %v2533 = vunpack.c.l.b16 %v2017
          %v2534 = vunpack.c.h.b16 %v2017
          %v2535 = vunpack.c.l.b16 %v2018
          %v2536 = vunpack.c.h.b16 %v2018
          %v2537 = vunpack.c.l.b16 %v2019
          %v2538 = vunpack.c.h.b16 %v2019
          %v2539 = vunpack.c.l.b16 %v2020
          %v2540 = vunpack.c.h.b16 %v2020
          %v2541 = vunpack.c.l.b16 %v2021
          %v2542 = vunpack.c.h.b16 %v2021
          %v2543 = vunpack.c.l.b16 %v2022
          %v2544 = vunpack.c.h.b16 %v2022
          %v2545 = vunpack.c.l.b16 %v2023
          %v2546 = vunpack.c.h.b16 %v2023
          %v2547 = vunpack.c.l.b16 %v2024
          %v2548 = vunpack.c.h.b16 %v2024
          %v2549 = vunpack.c.l.b16 %v2025
          %v2550 = vunpack.c.h.b16 %v2025
          %v2551 = vunpack.c.l.b16 %v2026
          %v2552 = vunpack.c.h.b16 %v2026
          %v2553 = vunpack.c.l.b16 %v2027
          %v2554 = vunpack.c.h.b16 %v2027
          %v2555 = vunpack.c.l.b16 %v2028
          %v2556 = vunpack.c.h.b16 %v2028
          %v2557 = vunpack.c.l.b16 %v2029
          %v2558 = vunpack.c.h.b16 %v2029
          %v2559 = vunpack.c.l.b16 %v2030
          %v2560 = vunpack.c.h.b16 %v2030
          %v2561 = vunpack.c.l.b16 %v2031
          %v2562 = vunpack.c.h.b16 %v2031
          %v2563 = vunpack.c.l.b16 %v2032
          %v2564 = vunpack.c.h.b16 %v2032
          %v2565 = vunpack.c.l.b16 %v2033
          %v2566 = vunpack.c.h.b16 %v2033
          %v2567 = vunpack.c.l.b16 %v2034
          %v2568 = vunpack.c.h.b16 %v2034
          %v2569 = vunpack.c.l.b16 %v2035
          %v2570 = vunpack.c.h.b16 %v2035
          %v2571 = vunpack.c.l.b16 %v2036
          %v2572 = vunpack.c.h.b16 %v2036
          %v2573 = vunpack.c.l.b16 %v2037
          %v2574 = vunpack.c.h.b16 %v2037
          %v2575 = vunpack.c.l.b16 %v2038
          %v2576 = vunpack.c.h.b16 %v2038
          %v2577 = vunpack.c.l.b16 %v2039
          %v2578 = vunpack.c.h.b16 %v2039
          %v2579 = vunpack.c.l.b16 %v2040
          %v2580 = vunpack.c.h.b16 %v2040
          %v2581 = vunpack.c.l.b16 %v2041
          %v2582 = vunpack.c.h.b16 %v2041
          %v2583 = vunpack.c.l.b16 %v2042
          %v2584 = vunpack.c.h.b16 %v2042
          %v2585 = vunpack.c.l.b16 %v2043
          %v2586 = vunpack.c.h.b16 %v2043
          %v2587 = vunpack.c.l.b16 %v2044
          %v2588 = vunpack.c.h.b16 %v2044
          %v2589 = vunpack.c.l.b16 %v2045
          %v2590 = vunpack.c.h.b16 %v2045
          %v2591 = vunpack.c.l.b16 %v2046
          %v2592 = vunpack.c.h.b16 %v2046
          %v2593 = vunpack.c.l.b16 %v2047
          %v2594 = vunpack.c.h.b16 %v2047
          %v2595 = vunpack.c.l.b16 %v2048
          %v2596 = vunpack.c.h.b16 %v2048
          %v2597 = vunpack.c.l.b16 %v2049
          %v2598 = vunpack.c.h.b16 %v2049
          %v2599 = vunpack.c.l.b16 %v2050
          %v2600 = vunpack.c.h.b16 %v2050
          %v2601 = vunpack.c.l.b16 %v2051
          %v2602 = vunpack.c.h.b16 %v2051
          %v2603 = vunpack.c.l.b16 %v2052
          %v2604 = vunpack.c.h.b16 %v2052
          %v2605 = vunpack.c.l.b16 %v2053
          %v2606 = vunpack.c.h.b16 %v2053
          %v2607 = vunpack.c.l.b16 %v2054
          %v2608 = vunpack.c.h.b16 %v2054
          %v2609 = vunpack.c.l.b16 %v2055
          %v2610 = vunpack.c.h.b16 %v2055
          %v2611 = vunpack.c.l.b16 %v2056
          %v2612 = vunpack.c.h.b16 %v2056
          %v2613 = vunpack.c.l.b16 %v2057
          %v2614 = vunpack.c.h.b16 %v2057
          %v2615 = vunpack.c.l.b16 %v2058
          %v2616 = vunpack.c.h.b16 %v2058
          %v2617 = vunpack.c.l.b16 %v2059
          %v2618 = vunpack.c.h.b16 %v2059
          %v2619 = vunpack.c.l.b16 %v2060
          %v2620 = vunpack.c.h.b16 %v2060
          %v2621 = vunpack.c.l.b16 %v2061
          %v2622 = vunpack.c.h.b16 %v2061
          %v2623 = vunpack.c.l.b16 %v2062
          %v2624 = vunpack.c.h.b16 %v2062
          %v2625 = vunpack.c.l.b16 %v2063
          %v2626 = vunpack.c.h.b16 %v2063
          %v2627 = vunpack.c.l.b16 %v2064
          %v2628 = vunpack.c.h.b16 %v2064
          %v2629 = vunpack.c.l.b16 %v2065
          %v2630 = vunpack.c.h.b16 %v2065
          %v2631 = vunpack.c.l.b16 %v2066
          %v2632 = vunpack.c.h.b16 %v2066
          %v2633 = vunpack.c.l.b16 %v2067
          %v2634 = vunpack.c.h.b16 %v2067
          %v2635 = vunpack.c.l.b16 %v2068
          %v2636 = vunpack.c.h.b16 %v2068
          %v2637 = vunpack.c.l.b16 %v2069
          %v2638 = vunpack.c.h.b16 %v2069
          %v2639 = vunpack.c.l.b16 %v2070
          %v2640 = vunpack.c.h.b16 %v2070
          %v2641 = vunpack.c.l.b16 %v2071
          %v2642 = vunpack.c.h.b16 %v2071
          %v2643 = vunpack.c.l.b16 %v2072
          %v2644 = vunpack.c.h.b16 %v2072
          %v2645 = vunpack.c.l.b16 %v2073
          %v2646 = vunpack.c.h.b16 %v2073
          %v2647 = vunpack.c.l.b16 %v2074
          %v2648 = vunpack.c.h.b16 %v2074
          %v2649 = vunpack.c.l.b16 %v2075
          %v2650 = vunpack.c.h.b16 %v2075
          %v2651 = vunpack.c.l.b16 %v2076
          %v2652 = vunpack.c.h.b16 %v2076
          %v2653 = vunpack.c.l.b16 %v2077
          %v2654 = vunpack.c.h.b16 %v2077
          %v2655 = vunpack.c.l.b16 %v2078
          %v2656 = vunpack.c.h.b16 %v2078
          %v2657 = vunpack.c.l.b16 %v2079
          %v2658 = vunpack.c.h.b16 %v2079
          %v2659 = vunpack.c.l.b16 %v2080
          %v2660 = vunpack.c.h.b16 %v2080
          %v2661 = vunpack.c.l.b16 %v2081
          %v2662 = vunpack.c.h.b16 %v2081
          %v2663 = vunpack.c.l.b16 %v2082
          %v2664 = vunpack.c.h.b16 %v2082
          %v2665 = vunpack.c.l.b16 %v2083
          %v2666 = vunpack.c.h.b16 %v2083
          %v2667 = vunpack.c.l.b16 %v2084
          %v2668 = vunpack.c.h.b16 %v2084
          %v2669 = vunpack.c.l.b16 %v2085
          %v2670 = vunpack.c.h.b16 %v2085
          %v2671 = vunpack.c.l.b16 %v2086
          %v2672 = vunpack.c.h.b16 %v2086
          %v2673 = vunpack.c.l.b16 %v2087
          %v2674 = vunpack.c.h.b16 %v2087
          %v2675 = vunpack.c.l.b16 %v2088
          %v2676 = vunpack.c.h.b16 %v2088
          %v2677 = vunpack.c.l.b16 %v2089
          %v2678 = vunpack.c.h.b16 %v2089
          %v2679 = vunpack.c.l.b16 %v2090
          %v2680 = vunpack.c.h.b16 %v2090
          %v2681 = vunpack.c.l.b16 %v2091
          %v2682 = vunpack.c.h.b16 %v2091
          %v2683 = vunpack.c.l.b16 %v2092
          %v2684 = vunpack.c.h.b16 %v2092
          %v2685 = vunpack.c.l.b16 %v2093
          %v2686 = vunpack.c.h.b16 %v2093
          %v2687 = vunpack.c.l.b16 %v2094
          %v2688 = vunpack.c.h.b16 %v2094
          %v2689 = vunpack.c.l.b16 %v2095
          %v2690 = vunpack.c.h.b16 %v2095
          %v2691 = vunpack.c.l.b16 %v2096
          %v2692 = vunpack.c.h.b16 %v2096
          %v2693 = vunpack.c.l.b16 %v2097
          %v2694 = vunpack.c.h.b16 %v2097
          %v2695 = vunpack.c.l.b16 %v2098
          %v2696 = vunpack.c.h.b16 %v2098
          %v2697 = vunpack.c.l.b16 %v2099
          %v2698 = vunpack.c.h.b16 %v2099
          %v2699 = vunpack.c.l.b16 %v2100
          %v2700 = vunpack.c.h.b16 %v2100
          %v2701 = vunpack.c.l.b16 %v2101
          %v2702 = vunpack.c.h.b16 %v2101
          %v2703 = vunpack.c.l.b16 %v2102
          %v2704 = vunpack.c.h.b16 %v2102
          %v2705 = vunpack.c.l.b16 %v2103
          %v2706 = vunpack.c.h.b16 %v2103
          %v2707 = vunpack.c.l.b16 %v2104
          %v2708 = vunpack.c.h.b16 %v2104
          %v2709 = vunpack.c.l.b16 %v2105
          %v2710 = vunpack.c.h.b16 %v2105
          %v2711 = vunpack.c.l.b16 %v2106
          %v2712 = vunpack.c.h.b16 %v2106
          %v2713 = vunpack.c.l.b16 %v2107
          %v2714 = vunpack.c.h.b16 %v2107
          %v2715 = vunpack.c.l.b16 %v2108
          %v2716 = vunpack.c.h.b16 %v2108
          %v2717 = vunpack.c.l.b16 %v2109
          %v2718 = vunpack.c.h.b16 %v2109
          %v2719 = vunpack.c.l.b16 %v2110
          %v2720 = vunpack.c.h.b16 %v2110
          %v2721 = vunpack.c.l.b16 %v2111
          %v2722 = vunpack.c.h.b16 %v2111
          %v2723 = vunpack.c.l.b16 %v2112
          %v2724 = vunpack.c.h.b16 %v2112
          %v2725 = vunpack.c.l.b16 %v2113
          %v2726 = vunpack.c.h.b16 %v2113
          %v2727 = vunpack.c.l.b16 %v2114
          %v2728 = vunpack.c.h.b16 %v2114
          %v2729 = vunpack.c.l.b16 %v2115
          %v2730 = vunpack.c.h.b16 %v2115
          %v2731 = vunpack.c.l.b16 %v2116
          %v2732 = vunpack.c.h.b16 %v2116
          %v2733 = vunpack.c.l.b16 %v2117
          %v2734 = vunpack.c.h.b16 %v2117
          %v2735 = vunpack.c.l.b16 %v2118
          %v2736 = vunpack.c.h.b16 %v2118
          %v2737 = vunpack.c.l.b16 %v2119
          %v2738 = vunpack.c.h.b16 %v2119
          %v2739 = vunpack.c.l.b16 %v2120
          %v2740 = vunpack.c.h.b16 %v2120
          %v2741 = vunpack.c.l.b16 %v2121
          %v2742 = vunpack.c.h.b16 %v2121
          %v2743 = vunpack.c.l.b16 %v2122
          %v2744 = vunpack.c.h.b16 %v2122
          %v2745 = vunpack.c.l.b16 %v2123
          %v2746 = vunpack.c.h.b16 %v2123
          %v2747 = vunpack.c.l.b16 %v2124
          %v2748 = vunpack.c.h.b16 %v2124
          %v2749 = vunpack.c.l.b16 %v2125
          %v2750 = vunpack.c.h.b16 %v2125
          %v2751 = vunpack.c.l.b16 %v2126
          %v2752 = vunpack.c.h.b16 %v2126
          %v2753 = vunpack.c.l.b16 %v2127
          %v2754 = vunpack.c.h.b16 %v2127
          %v2755 = vunpack.c.l.b16 %v2128
          %v2756 = vunpack.c.h.b16 %v2128
          %v2757 = vunpack.c.l.b16 %v2129
          %v2758 = vunpack.c.h.b16 %v2129
          %v2759 = vunpack.c.l.b16 %v2130
          %v2760 = vunpack.c.h.b16 %v2130
          %v2761 = vunpack.c.l.b16 %v2131
          %v2762 = vunpack.c.h.b16 %v2131
          %v2763 = vunpack.c.l.b16 %v2132
          %v2764 = vunpack.c.h.b16 %v2132
          %v2765 = vunpack.c.l.b16 %v2133
          %v2766 = vunpack.c.h.b16 %v2133
          %v2767 = vunpack.c.l.b16 %v2134
          %v2768 = vunpack.c.h.b16 %v2134
          %v2769 = vunpack.c.l.b16 %v2135
          %v2770 = vunpack.c.h.b16 %v2135
          %v2771 = vunpack.c.l.b16 %v2136
          %v2772 = vunpack.c.h.b16 %v2136
          %v2773 = vunpack.c.l.b16 %v2137
          %v2774 = vunpack.c.h.b16 %v2137
          %v2775 = vunpack.c.l.b16 %v2138
          %v2776 = vunpack.c.h.b16 %v2138
          %v2777 = vunpack.c.l.b16 %v2139
          %v2778 = vunpack.c.h.b16 %v2139
          %v2779 = vunpack.c.l.b16 %v2140
          %v2780 = vunpack.c.h.b16 %v2140
          %v2781 = vunpack.c.l.b16 %v2141
          %v2782 = vunpack.c.h.b16 %v2141
          %v2783 = vunpack.c.l.b16 %v2142
          %v2784 = vunpack.c.h.b16 %v2142
          %v2785 = vunpack.c.l.b16 %v2143
          %v2786 = vunpack.c.h.b16 %v2143
          %v2787 = vunpack.c.l.b16 %v2144
          %v2788 = vunpack.c.h.b16 %v2144
          %v2789 = vunpack.c.l.b16 %v2145
          %v2790 = vunpack.c.h.b16 %v2145
          %v2791 = vunpack.c.l.b16 %v2146
          %v2792 = vunpack.c.h.b16 %v2146
          %v2793 = vunpack.c.l.b16 %v2147
          %v2794 = vunpack.c.h.b16 %v2147
          %v2795 = vunpack.c.l.b16 %v2148
          %v2796 = vunpack.c.h.b16 %v2148
          %v2797 = vunpack.c.l.b16 %v2149
          %v2798 = vunpack.c.h.b16 %v2149
          %v2799 = vunpack.c.l.b16 %v2150
          %v2800 = vunpack.c.h.b16 %v2150
          %v2801 = vunpack.c.l.b16 %v2151
          %v2802 = vunpack.c.h.b16 %v2151
          %v2803 = vunpack.c.l.b16 %v2152
          %v2804 = vunpack.c.h.b16 %v2152
          %v2805 = vunpack.c.l.b16 %v2153
          %v2806 = vunpack.c.h.b16 %v2153
          %v2807 = vunpack.c.l.b16 %v2154
          %v2808 = vunpack.c.h.b16 %v2154
          %v2809 = vunpack.c.l.b16 %v2155
          %v2810 = vunpack.c.h.b16 %v2155
          %v2811 = vunpack.c.l.b16 %v2156
          %v2812 = vunpack.c.h.b16 %v2156
          %v2813 = vunpack.c.l.b16 %v2157
          %v2814 = vunpack.c.h.b16 %v2157
          %v2815 = vunpack.c.l.b16 %v2158
          %v2816 = vunpack.c.h.b16 %v2158
          %v2817 = vunpack.c.l.b16 %v2159
          %v2818 = vunpack.c.h.b16 %v2159
          %v2819 = vunpack.c.l.b16 %v2160
          %v2820 = vunpack.c.h.b16 %v2160
          %v2821 = vunpack.c.l.b16 %v2161
          %v2822 = vunpack.c.h.b16 %v2161
          %v2823 = vunpack.c.l.b16 %v2162
          %v2824 = vunpack.c.h.b16 %v2162
          %v2825 = vunpack.c.l.b16 %v2163
          %v2826 = vunpack.c.h.b16 %v2163
          %v2827 = vunpack.c.l.b16 %v2164
          %v2828 = vunpack.c.h.b16 %v2164
          %v2829 = vunpack.c.l.b16 %v2165
          %v2830 = vunpack.c.h.b16 %v2165
          %v2831 = vunpack.c.l.b16 %v2166
          %v2832 = vunpack.c.h.b16 %v2166
          %v2833 = vunpack.c.l.b16 %v2167
          %v2834 = vunpack.c.h.b16 %v2167
          %v2835 = vunpack.c.l.b16 %v2168
          %v2836 = vunpack.c.h.b16 %v2168
          %v2837 = vunpack.c.l.b16 %v2169
          %v2838 = vunpack.c.h.b16 %v2169
          %v2839 = vunpack.c.l.b16 %v2170
          %v2840 = vunpack.c.h.b16 %v2170
          %v2841 = vunpack.c.l.b16 %v2171
          %v2842 = vunpack.c.h.b16 %v2171
          %v2843 = vunpack.c.l.b16 %v2172
          %v2844 = vunpack.c.h.b16 %v2172
          %v2845 = vunpack.c.l.b16 %v2173
          %v2846 = vunpack.c.h.b16 %v2173
          %v2847 = vunpack.c.l.b16 %v2174
          %v2848 = vunpack.c.h.b16 %v2174
          %v2849 = vunpack.c.l.b16 %v2175
          %v2850 = vunpack.c.h.b16 %v2175
          %v2851 = vunpack.c.l.b16 %v2176
          %v2852 = vunpack.c.h.b16 %v2176
          %v2853 = vunpack.c.l.b16 %v2177
          %v2854 = vunpack.c.h.b16 %v2177
          %v2855 = vunpack.c.l.b16 %v2178
          %v2856 = vunpack.c.h.b16 %v2178
          %v2857 = vunpack.c.l.b16 %v2179
          %v2858 = vunpack.c.h.b16 %v2179
          %v2859 = vunpack.c.l.b16 %v2180
          %v2860 = vunpack.c.h.b16 %v2180
          %v2861 = vunpack.c.l.b16 %v2181
          %v2862 = vunpack.c.h.b16 %v2181
          %v2863 = vunpack.c.l.b16 %v2182
          %v2864 = vunpack.c.h.b16 %v2182
          %v2865 = vunpack.c.l.b16 %v2183
          %v2866 = vunpack.c.h.b16 %v2183
          %v2867 = vunpack.c.l.b16 %v2184
          %v2868 = vunpack.c.h.b16 %v2184
          %v2869 = vunpack.c.l.b16 %v2185
          %v2870 = vunpack.c.h.b16 %v2185
          %v2871 = vunpack.c.l.b16 %v2186
          %v2872 = vunpack.c.h.b16 %v2186
          %v2873 = vunpack.c.l.b16 %v2187
          %v2874 = vunpack.c.h.b16 %v2187
          %v2875 = vunpack.c.l.b16 %v2188
          %v2876 = vunpack.c.h.b16 %v2188
          %v2877 = vunpack.c.l.b16 %v2189
          %v2878 = vunpack.c.h.b16 %v2189
          %v2879 = vunpack.c.l.b16 %v2190
          %v2880 = vunpack.c.h.b16 %v2190
          %v2881 = vunpack.c.l.b16 %v2191
          %v2882 = vunpack.c.h.b16 %v2191
          %v2883 = vunpack.c.l.b16 %v2192
          %v2884 = vunpack.c.h.b16 %v2192
          %v2885 = vunpack.c.l.b16 %v2193
          %v2886 = vunpack.c.h.b16 %v2193
          %v2887 = vunpack.c.l.b16 %v2194
          %v2888 = vunpack.c.h.b16 %v2194
          %v2889 = vunpack.c.l.b16 %v2195
          %v2890 = vunpack.c.h.b16 %v2195
          %v2891 = vunpack.c.l.b16 %v2196
          %v2892 = vunpack.c.h.b16 %v2196
          %v2893 = vunpack.c.l.b16 %v2197
          %v2894 = vunpack.c.h.b16 %v2197
          %v2895 = vunpack.c.l.b16 %v2198
          %v2896 = vunpack.c.h.b16 %v2198
          %v2897 = vunpack.c.l.b16 %v2199
          %v2898 = vunpack.c.h.b16 %v2199
          %v2899 = vunpack.c.l.b16 %v2200
          %v2900 = vunpack.c.h.b16 %v2200
          %v2901 = vunpack.c.l.b16 %v2201
          %v2902 = vunpack.c.h.b16 %v2201
          %v2903 = vunpack.c.l.b16 %v2202
          %v2904 = vunpack.c.h.b16 %v2202
          %v2905 = vunpack.c.l.b16 %v2203
          %v2906 = vunpack.c.h.b16 %v2203
          %v2907 = vunpack.c.l.b16 %v2204
          %v2908 = vunpack.c.h.b16 %v2204
          %v2909 = vunpack.c.l.b16 %v2205
          %v2910 = vunpack.c.h.b16 %v2205
          %v2911 = vunpack.c.l.b16 %v2206
          %v2912 = vunpack.c.h.b16 %v2206
          %v2913 = vunpack.c.l.b16 %v2207
          %v2914 = vunpack.c.h.b16 %v2207
          %v2915 = vunpack.c.l.b16 %v2208
          %v2916 = vunpack.c.h.b16 %v2208
          %v2917 = vunpack.c.l.b16 %v2209
          %v2918 = vunpack.c.h.b16 %v2209
          %v2919 = vunpack.c.l.b16 %v2210
          %v2920 = vunpack.c.h.b16 %v2210
          %v2921 = vunpack.c.l.b16 %v2211
          %v2922 = vunpack.c.h.b16 %v2211
          %v2923 = vunpack.c.l.b16 %v2212
          %v2924 = vunpack.c.h.b16 %v2212
          %v2925 = vunpack.c.l.b16 %v2213
          %v2926 = vunpack.c.h.b16 %v2213
          %v2927 = vunpack.c.l.b16 %v2214
          %v2928 = vunpack.c.h.b16 %v2214
          %v2929 = vunpack.c.l.b16 %v2215
          %v2930 = vunpack.c.h.b16 %v2215
          %v2931 = vunpack.c.l.b16 %v2216
          %v2932 = vunpack.c.h.b16 %v2216
          %v2933 = vunpack.c.l.b16 %v2217
          %v2934 = vunpack.c.h.b16 %v2217
          %v2935 = vunpack.c.l.b16 %v2218
          %v2936 = vunpack.c.h.b16 %v2218
          %v2937 = vunpack.c.l.b16 %v2219
          %v2938 = vunpack.c.h.b16 %v2219
          %v2939 = vunpack.c.l.b16 %v2220
          %v2940 = vunpack.c.h.b16 %v2220
          %v2941 = vunpack.c.l.b16 %v2221
          %v2942 = vunpack.c.h.b16 %v2221
          %v2943 = vunpack.c.l.b16 %v2222
          %v2944 = vunpack.c.h.b16 %v2222
          %v2945 = vunpack.c.l.b16 %v2223
          %v2946 = vunpack.c.h.b16 %v2223
          %v2947 = vunpack.c.l.b16 %v2224
          %v2948 = vunpack.c.h.b16 %v2224
          %v2949 = vunpack.c.l.b16 %v2225
          %v2950 = vunpack.c.h.b16 %v2225
          %v2951 = vunpack.c.l.b16 %v2226
          %v2952 = vunpack.c.h.b16 %v2226
          %v2953 = vunpack.c.l.b16 %v2227
          %v2954 = vunpack.c.h.b16 %v2227
          %v2955 = vunpack.c.l.b16 %v2228
          %v2956 = vunpack.c.h.b16 %v2228
          %v2957 = vunpack.c.l.b16 %v2229
          %v2958 = vunpack.c.h.b16 %v2229
          %v2959 = vunpack.c.l.b16 %v2230
          %v2960 = vunpack.c.h.b16 %v2230
          %v2961 = vunpack.c.l.b16 %v2231
          %v2962 = vunpack.c.h.b16 %v2231
          %v2963 = vunpack.c.l.b16 %v2232
          %v2964 = vunpack.c.h.b16 %v2232
          %v2965 = vunpack.c.l.b16 %v2233
          %v2966 = vunpack.c.h.b16 %v2233
          %v2967 = vunpack.c.l.b16 %v2234
          %v2968 = vunpack.c.h.b16 %v2234
          %v2969 = vunpack.c.l.b16 %v2235
          %v2970 = vunpack.c.h.b16 %v2235
          %v2971 = vunpack.c.l.b16 %v2236
          %v2972 = vunpack.c.h.b16 %v2236
          %v2973 = vunpack.c.l.b16 %v2237
          %v2974 = vunpack.c.h.b16 %v2237
          %v2975 = vunpack.c.l.b16 %v2238
          %v2976 = vunpack.c.h.b16 %v2238
          %v2977 = vunpack.c.l.b16 %v2239
          %v2978 = vunpack.c.h.b16 %v2239
          %v2979 = vunpack.c.l.b16 %v2240
          %v2980 = vunpack.c.h.b16 %v2240
          %v2981 = vunpack.c.l.b16 %v2241
          %v2982 = vunpack.c.h.b16 %v2241
          %v2983 = vunpack.c.l.b16 %v2242
          %v2984 = vunpack.c.h.b16 %v2242
          %v2985 = vunpack.c.l.b16 %v2243
          %v2986 = vunpack.c.h.b16 %v2243
          %v2987 = vunpack.c.l.b16 %v2244
          %v2988 = vunpack.c.h.b16 %v2244
          %v2989 = vunpack.c.l.b16 %v2245
          %v2990 = vunpack.c.h.b16 %v2245
          %v2991 = vunpack.c.l.b16 %v2246
          %v2992 = vunpack.c.h.b16 %v2246
          %v2993 = vunpack.c.l.b16 %v2247
          %v2994 = vunpack.c.h.b16 %v2247
          %v2995 = vunpack.c.l.b16 %v2248
          %v2996 = vunpack.c.h.b16 %v2248
          %v2997 = vunpack.c.l.b16 %v2249
          %v2998 = vunpack.c.h.b16 %v2249
          %v2999 = vunpack.c.l.b16 %v2250
          %v3000 = vunpack.c.h.b16 %v2250
          %v3001 = vunpack.c.l.b16 %v2251
          %v3002 = vunpack.c.h.b16 %v2251
          %v3003 = vunpack.c.l.b16 %v2252
          %v3004 = vunpack.c.h.b16 %v2252
          %v3005 = vunpack.c.l.b16 %v2253
          %v3006 = vunpack.c.h.b16 %v2253
          %v3007 = vunpack.c.l.b16 %v2254
          %v3008 = vunpack.c.h.b16 %v2254
          %v3009 = vunpack.c.l.b16 %v2255
          %v3010 = vunpack.c.h.b16 %v2255
          %v3011 = vunpack.c.l.b16 %v2256
          %v3012 = vunpack.c.h.b16 %v2256
          %v3013 = vunpack.c.l.b16 %v2257
          %v3014 = vunpack.c.h.b16 %v2257
          %v3015 = vunpack.c.l.b16 %v2258
          %v3016 = vunpack.c.h.b16 %v2258
          %v3017 = vunpack.c.l.b16 %v2259
          %v3018 = vunpack.c.h.b16 %v2259
          %v3019 = vunpack.c.l.b16 %v2260
          %v3020 = vunpack.c.h.b16 %v2260
          %v3021 = vunpack.c.l.b16 %v2261
          %v3022 = vunpack.c.h.b16 %v2261
          %v3023 = vunpack.c.l.b16 %v2262
          %v3024 = vunpack.c.h.b16 %v2262
          %v3025 = vunpack.c.l.b16 %v2263
          %v3026 = vunpack.c.h.b16 %v2263
          %v3027 = vunpack.c.l.b16 %v2264
          %v3028 = vunpack.c.h.b16 %v2264
          %v3029 = vunpack.c.l.b16 %v2265
          %v3030 = vunpack.c.h.b16 %v2265
          %v3031 = vunpack.c.l.b16 %v2266
          %v3032 = vunpack.c.h.b16 %v2266
          %v3033 = vunpack.c.l.b16 %v2267
          %v3034 = vunpack.c.h.b16 %v2267
          %v3035 = vunpack.c.l.b16 %v2268
          %v3036 = vunpack.c.h.b16 %v2268
          %v3037 = vpack.c.b16 %v2529, %v2525
          %v3038 = vpack.c.b16 %v2530, %v2526
          %v3039 = vpack.c.b16 %v2531, %v2527
          %v3040 = vpack.c.b16 %v2532, %v2528
          %v3041 = vpack.c.b16 %v2537, %v2533
          %v3042 = vpack.c.b16 %v2538, %v2534
          %v3043 = vpack.c.b16 %v2539, %v2535
          %v3044 = vpack.c.b16 %v2540, %v2536
          %v3045 = vpack.c.b16 %v2545, %v2541
          %v3046 = vpack.c.b16 %v2546, %v2542
          %v3047 = vpack.c.b16 %v2547, %v2543
          %v3048 = vpack.c.b16 %v2548, %v2544
          %v3049 = vpack.c.b16 %v2553, %v2549
          %v3050 = vpack.c.b16 %v2554, %v2550
          %v3051 = vpack.c.b16 %v2555, %v2551
          %v3052 = vpack.c.b16 %v2556, %v2552
          %v3053 = vpack.c.b16 %v2561, %v2557
          %v3054 = vpack.c.b16 %v2562, %v2558
          %v3055 = vpack.c.b16 %v2563, %v2559
          %v3056 = vpack.c.b16 %v2564, %v2560
          %v3057 = vpack.c.b16 %v2569, %v2565
          %v3058 = vpack.c.b16 %v2570, %v2566
          %v3059 = vpack.c.b16 %v2571, %v2567
          %v3060 = vpack.c.b16 %v2572, %v2568
          %v3061 = vpack.c.b16 %v2577, %v2573
          %v3062 = vpack.c.b16 %v2578, %v2574
          %v3063 = vpack.c.b16 %v2579, %v2575
          %v3064 = vpack.c.b16 %v2580, %v2576
          %v3065 = vpack.c.b16 %v2585, %v2581
          %v3066 = vpack.c.b16 %v2586, %v2582
          %v3067 = vpack.c.b16 %v2587, %v2583
          %v3068 = vpack.c.b16 %v2588, %v2584
          %v3069 = vpack.c.b16 %v2593, %v2589
          %v3070 = vpack.c.b16 %v2594, %v2590
          %v3071 = vpack.c.b16 %v2595, %v2591
          %v3072 = vpack.c.b16 %v2596, %v2592
          %v3073 = vpack.c.b16 %v2601, %v2597
          %v3074 = vpack.c.b16 %v2602, %v2598
          %v3075 = vpack.c.b16 %v2603, %v2599
          %v3076 = vpack.c.b16 %v2604, %v2600
          %v3077 = vpack.c.b16 %v2609, %v2605
          %v3078 = vpack.c.b16 %v2610, %v2606
          %v3079 = vpack.c.b16 %v2611, %v2607
          %v3080 = vpack.c.b16 %v2612, %v2608
          %v3081 = vpack.c.b16 %v2617, %v2613
          %v3082 = vpack.c.b16 %v2618, %v2614
          %v3083 = vpack.c.b16 %v2619, %v2615
          %v3084 = vpack.c.b16 %v2620, %v2616
          %v3085 = vpack.c.b16 %v2625, %v2621
          %v3086 = vpack.c.b16 %v2626, %v2622
          %v3087 = vpack.c.b16 %v2627, %v2623
          %v3088 = vpack.c.b16 %v2628, %v2624
          %v3089 = vpack.c.b16 %v2633, %v2629
          %v3090 = vpack.c.b16 %v2634, %v2630
          %v3091 = vpack.c.b16 %v2635, %v2631
          %v3092 = vpack.c.b16 %v2636, %v2632
          %v3093 = vpack.c.b16 %v2641, %v2637
          %v3094 = vpack.c.b16 %v2642, %v2638
          %v3095 = vpack.c.b16 %v2643, %v2639
          %v3096 = vpack.c.b16 %v2644, %v2640
          %v3097 = vpack.c.b16 %v2649, %v2645
          %v3098 = vpack.c.b16 %v2650, %v2646
          %v3099 = vpack.c.b16 %v2651, %v2647
          %v3100 = vpack.c.b16 %v2652, %v2648
          %v3101 = vpack.c.b16 %v2657, %v2653
          %v3102 = vpack.c.b16 %v2658, %v2654
          %v3103 = vpack.c.b16 %v2659, %v2655
          %v3104 = vpack.c.b16 %v2660, %v2656
          %v3105 = vpack.c.b16 %v2665, %v2661
          %v3106 = vpack.c.b16 %v2666, %v2662
          %v3107 = vpack.c.b16 %v2667, %v2663
          %v3108 = vpack.c.b16 %v2668, %v2664
          %v3109 = vpack.c.b16 %v2673, %v2669
          %v3110 = vpack.c.b16 %v2674, %v2670
          %v3111 = vpack.c.b16 %v2675, %v2671
          %v3112 = vpack.c.b16 %v2676, %v2672
          %v3113 = vpack.c.b16 %v2681, %v2677
          %v3114 = vpack.c.b16 %v2682, %v2678
          %v3115 = vpack.c.b16 %v2683, %v2679
          %v3116 = vpack.c.b16 %v2684, %v2680
          %v3117 = vpack.c.b16 %v2689, %v2685
          %v3118 = vpack.c.b16 %v2690, %v2686
          %v3119 = vpack.c.b16 %v2691, %v2687
          %v3120 = vpack.c.b16 %v2692, %v2688
          %v3121 = vpack.c.b16 %v2697, %v2693
          %v3122 = vpack.c.b16 %v2698, %v2694
          %v3123 = vpack.c.b16 %v2699, %v2695
          %v3124 = vpack.c.b16 %v2700, %v2696
          %v3125 = vpack.c.b16 %v2705, %v2701
          %v3126 = vpack.c.b16 %v2706, %v2702
          %v3127 = vpack.c.b16 %v2707, %v2703
          %v3128 = vpack.c.b16 %v2708, %v2704
          %v3129 = vpack.c.b16 %v2713, %v2709
          %v3130 = vpack.c.b16 %v2714, %v2710
          %v3131 = vpack.c.b16 %v2715, %v2711
          %v3132 = vpack.c.b16 %v2716, %v2712
          %v3133 = vpack.c.b16 %v2721, %v2717
          %v3134 = vpack.c.b16 %v2722, %v2718
          %v3135 = vpack.c.b16 %v2723, %v2719
          %v3136 = vpack.c.b16 %v2724, %v2720
          %v3137 = vpack.c.b16 %v2729, %v2725
          %v3138 = vpack.c.b16 %v2730, %v2726
          %v3139 = vpack.c.b16 %v2731, %v2727
          %v3140 = vpack.c.b16 %v2732, %v2728
          %v3141 = vpack.c.b16 %v2737, %v2733
          %v3142 = vpack.c.b16 %v2738, %v2734
          %v3143 = vpack.c.b16 %v2739, %v2735
          %v3144 = vpack.c.b16 %v2740, %v2736
          %v3145 = vpack.c.b16 %v2745, %v2741
          %v3146 = vpack.c.b16 %v2746, %v2742
          %v3147 = vpack.c.b16 %v2747, %v2743
          %v3148 = vpack.c.b16 %v2748, %v2744
          %v3149 = vpack.c.b16 %v2753, %v2749
          %v3150 = vpack.c.b16 %v2754, %v2750
          %v3151 = vpack.c.b16 %v2755, %v2751
          %v3152 = vpack.c.b16 %v2756, %v2752
          %v3153 = vpack.c.b16 %v2761, %v2757
          %v3154 = vpack.c.b16 %v2762, %v2758
          %v3155 = vpack.c.b16 %v2763, %v2759
          %v3156 = vpack.c.b16 %v2764, %v2760
          %v3157 = vpack.c.b16 %v2769, %v2765
          %v3158 = vpack.c.b16 %v2770, %v2766
          %v3159 = vpack.c.b16 %v2771, %v2767
          %v3160 = vpack.c.b16 %v2772, %v2768
          %v3161 = vpack.c.b16 %v2777, %v2773
          %v3162 = vpack.c.b16 %v2778, %v2774
          %v3163 = vpack.c.b16 %v2779, %v2775
          %v3164 = vpack.c.b16 %v2780, %v2776
          %v3165 = vpack.c.b16 %v2785, %v2781
          %v3166 = vpack.c.b16 %v2786, %v2782
          %v3167 = vpack.c.b16 %v2787, %v2783
          %v3168 = vpack.c.b16 %v2788, %v2784
          %v3169 = vpack.c.b16 %v2793, %v2789
          %v3170 = vpack.c.b16 %v2794, %v2790
          %v3171 = vpack.c.b16 %v2795, %v2791
          %v3172 = vpack.c.b16 %v2796, %v2792
          %v3173 = vpack.c.b16 %v2801, %v2797
          %v3174 = vpack.c.b16 %v2802, %v2798
          %v3175 = vpack.c.b16 %v2803, %v2799
          %v3176 = vpack.c.b16 %v2804, %v2800
          %v3177 = vpack.c.b16 %v2809, %v2805
          %v3178 = vpack.c.b16 %v2810, %v2806
          %v3179 = vpack.c.b16 %v2811, %v2807
          %v3180 = vpack.c.b16 %v2812, %v2808
          %v3181 = vpack.c.b16 %v2817, %v2813
          %v3182 = vpack.c.b16 %v2818, %v2814
          %v3183 = vpack.c.b16 %v2819, %v2815
          %v3184 = vpack.c.b16 %v2820, %v2816
          %v3185 = vpack.c.b16 %v2825, %v2821
          %v3186 = vpack.c.b16 %v2826, %v2822
          %v3187 = vpack.c.b16 %v2827, %v2823
          %v3188 = vpack.c.b16 %v2828, %v2824
          %v3189 = vpack.c.b16 %v2833, %v2829
          %v3190 = vpack.c.b16 %v2834, %v2830
          %v3191 = vpack.c.b16 %v2835, %v2831
          %v3192 = vpack.c.b16 %v2836, %v2832
          %v3193 = vpack.c.b16 %v2841, %v2837
          %v3194 = vpack.c.b16 %v2842, %v2838
          %v3195 = vpack.c.b16 %v2843, %v2839
          %v3196 = vpack.c.b16 %v2844, %v2840
          %v3197 = vpack.c.b16 %v2849, %v2845
          %v3198 = vpack.c.b16 %v2850, %v2846
          %v3199 = vpack.c.b16 %v2851, %v2847
          %v3200 = vpack.c.b16 %v2852, %v2848
          %v3201 = vpack.c.b16 %v2857, %v2853
          %v3202 = vpack.c.b16 %v2858, %v2854
          %v3203 = vpack.c.b16 %v2859, %v2855
          %v3204 = vpack.c.b16 %v2860, %v2856
          %v3205 = vpack.c.b16 %v2865, %v2861
          %v3206 = vpack.c.b16 %v2866, %v2862
          %v3207 = vpack.c.b16 %v2867, %v2863
          %v3208 = vpack.c.b16 %v2868, %v2864
          %v3209 = vpack.c.b16 %v2873, %v2869
          %v3210 = vpack.c.b16 %v2874, %v2870
          %v3211 = vpack.c.b16 %v2875, %v2871
          %v3212 = vpack.c.b16 %v2876, %v2872
          %v3213 = vpack.c.b16 %v2881, %v2877
          %v3214 = vpack.c.b16 %v2882, %v2878
          %v3215 = vpack.c.b16 %v2883, %v2879
          %v3216 = vpack.c.b16 %v2884, %v2880
          %v3217 = vpack.c.b16 %v2889, %v2885
          %v3218 = vpack.c.b16 %v2890, %v2886
          %v3219 = vpack.c.b16 %v2891, %v2887
          %v3220 = vpack.c.b16 %v2892, %v2888
          %v3221 = vpack.c.b16 %v2897, %v2893
          %v3222 = vpack.c.b16 %v2898, %v2894
          %v3223 = vpack.c.b16 %v2899, %v2895
          %v3224 = vpack.c.b16 %v2900, %v2896
          %v3225 = vpack.c.b16 %v2905, %v2901
          %v3226 = vpack.c.b16 %v2906, %v2902
          %v3227 = vpack.c.b16 %v2907, %v2903
          %v3228 = vpack.c.b16 %v2908, %v2904
          %v3229 = vpack.c.b16 %v2913, %v2909
          %v3230 = vpack.c.b16 %v2914, %v2910
          %v3231 = vpack.c.b16 %v2915, %v2911
          %v3232 = vpack.c.b16 %v2916, %v2912
          %v3233 = vpack.c.b16 %v2921, %v2917
          %v3234 = vpack.c.b16 %v2922, %v2918
          %v3235 = vpack.c.b16 %v2923, %v2919
          %v3236 = vpack.c.b16 %v2924, %v2920
          %v3237 = vpack.c.b16 %v2929, %v2925
          %v3238 = vpack.c.b16 %v2930, %v2926
          %v3239 = vpack.c.b16 %v2931, %v2927
          %v3240 = vpack.c.b16 %v2932, %v2928
          %v3241 = vpack.c.b16 %v2937, %v2933
          %v3242 = vpack.c.b16 %v2938, %v2934
          %v3243 = vpack.c.b16 %v2939, %v2935
          %v3244 = vpack.c.b16 %v2940, %v2936
          %v3245 = vpack.c.b16 %v2945, %v2941
          %v3246 = vpack.c.b16 %v2946, %v2942
          %v3247 = vpack.c.b16 %v2947, %v2943
          %v3248 = vpack.c.b16 %v2948, %v2944
          %v3249 = vpack.c.b16 %v2953, %v2949
          %v3250 = vpack.c.b16 %v2954, %v2950
          %v3251 = vpack.c.b16 %v2955, %v2951
          %v3252 = vpack.c.b16 %v2956, %v2952
          %v3253 = vpack.c.b16 %v2961, %v2957
          %v3254 = vpack.c.b16 %v2962, %v2958
          %v3255 = vpack.c.b16 %v2963, %v2959
          %v3256 = vpack.c.b16 %v2964, %v2960
          %v3257 = vpack.c.b16 %v2969, %v2965
          %v3258 = vpack.c.b16 %v2970, %v2966
          %v3259 = vpack.c.b16 %v2971, %v2967
          %v3260 = vpack.c.b16 %v2972, %v2968
          %v3261 = vpack.c.b16 %v2977, %v2973
          %v3262 = vpack.c.b16 %v2978, %v2974
          %v3263 = vpack.c.b16 %v2979, %v2975
          %v3264 = vpack.c.b16 %v2980, %v2976
          %v3265 = vpack.c.b16 %v2985, %v2981
          %v3266 = vpack.c.b16 %v2986, %v2982
          %v3267 = vpack.c.b16 %v2987, %v2983
          %v3268 = vpack.c.b16 %v2988, %v2984
          %v3269 = vpack.c.b16 %v2993, %v2989
          %v3270 = vpack.c.b16 %v2994, %v2990
          %v3271 = vpack.c.b16 %v2995, %v2991
          %v3272 = vpack.c.b16 %v2996, %v2992
          %v3273 = vpack.c.b16 %v3001, %v2997
          %v3274 = vpack.c.b16 %v3002, %v2998
          %v3275 = vpack.c.b16 %v3003, %v2999
          %v3276 = vpack.c.b16 %v3004, %v3000
          %v3277 = vpack.c.b16 %v3009, %v3005
          %v3278 = vpack.c.b16 %v3010, %v3006
          %v3279 = vpack.c.b16 %v3011, %v3007
          %v3280 = vpack.c.b16 %v3012, %v3008
          %v3281 = vpack.c.b16 %v3017, %v3013
          %v3282 = vpack.c.b16 %v3018, %v3014
          %v3283 = vpack.c.b16 %v3019, %v3015
          %v3284 = vpack.c.b16 %v3020, %v3016
          %v3285 = vpack.c.b16 %v3025, %v3021
          %v3286 = vpack.c.b16 %v3026, %v3022
          %v3287 = vpack.c.b16 %v3027, %v3023
          %v3288 = vpack.c.b16 %v3028, %v3024
          %v3289 = vpack.c.b16 %v3033, %v3029
          %v3290 = vpack.c.b16 %v3034, %v3030
          %v3291 = vpack.c.b16 %v3035, %v3031
          %v3292 = vpack.c.b16 %v3036, %v3032
          %3549 = vmatprep.subr.bf16.mxu0 %v3066
          %3550 = vmatpush1.bf16.msra.mxu0 %v3065
          %3551 = vmatprep.subr.bf16.mxu0 %v3062
          %3552 = vmatpush1.bf16.msra.mxu0 %v3061
          %3553 = vmatprep.subr.bf16.mxu0 %v3058
          %3554 = vmatpush1.bf16.msra.mxu0 %v3057
          %3555 = vmatprep.subr.bf16.mxu0 %v3054
          %3556 = vmatpush1.bf16.msra.mxu0 %v3053
          %3557 = vmatprep.subr.bf16.mxu0 %v3050
          %3558 = vmatpush1.bf16.msra.mxu0 %v3049
          %3559 = vmatprep.subr.bf16.mxu0 %v3046
          %3560 = vmatpush1.bf16.msra.mxu0 %v3045
          %3561 = vmatprep.subr.bf16.mxu0 %v3042
          %3562 = vmatpush1.bf16.msra.mxu0 %v3041
          %3563 = vmatprep.subr.bf16.mxu0 %v3038
          %3564 = vmatpush1.bf16.msra.mxu0 %v3037
          %3565 = vmatprep.subr.bf16.mxu0 %v3098
          %3566 = vmatpush2.bf16.msra.mxu0 %v3097
          %3567 = vmatprep.subr.bf16.mxu0 %v3094
          %3568 = vmatpush2.bf16.msra.mxu0 %v3093
          %3569 = vmatprep.subr.bf16.mxu0 %v3090
          %3570 = vmatpush2.bf16.msra.mxu0 %v3089
          %3571 = vmatprep.subr.bf16.mxu0 %v3086
          %3572 = vmatpush2.bf16.msra.mxu0 %v3085
          %3573 = vmatprep.subr.bf16.mxu0 %v3082
          %3574 = vmatpush2.bf16.msra.mxu0 %v3081
          %3575 = vmatprep.subr.bf16.mxu0 %v3078
          %3576 = vmatpush2.bf16.msra.mxu0 %v3077
          %3577 = vmatprep.subr.bf16.mxu0 %v3074
          %3578 = vmatpush2.bf16.msra.mxu0 %v3073
          %3579 = vmatprep.subr.bf16.mxu0 %v3070
          %3580 = vmatpush2.bf16.msra.mxu0 %v3069
          %3581 = vmatprep.mubr.bf16.mxu0 %v2006
          %3582 = vmatmul.mubr.bf16.gmra.mxu0 %v2005
          %v3583 = vpop.f32.mrf.mxu0
          %v3584 = vadd.f32 0.0, %v3583
          %v3585 = vpop.f32.mrf.mxu0
          %v3586 = vadd.f32 0.0, %v3585
          %v3587 = vpop.f32.mrf.mxu0
          %v3588 = vpop.f32.mrf.mxu0
          %3589 = vdwg.mxu0
          %3590 = vmatprep.subr.bf16.mxu0 %v3130
          %3591 = vmatpush1.bf16.msra.mxu0 %v3129
          %3592 = vmatprep.subr.bf16.mxu0 %v3126
          %3593 = vmatpush1.bf16.msra.mxu0 %v3125
          %3594 = vmatprep.subr.bf16.mxu0 %v3122
          %3595 = vmatpush1.bf16.msra.mxu0 %v3121
          %3596 = vmatprep.subr.bf16.mxu0 %v3118
          %3597 = vmatpush1.bf16.msra.mxu0 %v3117
          %3598 = vmatprep.subr.bf16.mxu0 %v3114
          %3599 = vmatpush1.bf16.msra.mxu0 %v3113
          %3600 = vmatprep.subr.bf16.mxu0 %v3110
          %3601 = vmatpush1.bf16.msra.mxu0 %v3109
          %3602 = vmatprep.subr.bf16.mxu0 %v3106
          %3603 = vmatpush1.bf16.msra.mxu0 %v3105
          %3604 = vmatprep.subr.bf16.mxu0 %v3102
          %3605 = vmatpush1.bf16.msra.mxu0 %v3101
          %3606 = vmatprep.subr.bf16.mxu0 %v3162
          %3607 = vmatpush2.bf16.msra.mxu0 %v3161
          %3608 = vmatprep.subr.bf16.mxu0 %v3158
          %3609 = vmatpush2.bf16.msra.mxu0 %v3157
          %3610 = vmatprep.subr.bf16.mxu0 %v3154
          %3611 = vmatpush2.bf16.msra.mxu0 %v3153
          %3612 = vmatprep.subr.bf16.mxu0 %v3150
          %3613 = vmatpush2.bf16.msra.mxu0 %v3149
          %3614 = vmatprep.subr.bf16.mxu0 %v3146
          %3615 = vmatpush2.bf16.msra.mxu0 %v3145
          %3616 = vmatprep.subr.bf16.mxu0 %v3142
          %3617 = vmatpush2.bf16.msra.mxu0 %v3141
          %3618 = vmatprep.subr.bf16.mxu0 %v3138
          %3619 = vmatpush2.bf16.msra.mxu0 %v3137
          %3620 = vmatprep.subr.bf16.mxu0 %v3134
          %3621 = vmatpush2.bf16.msra.mxu0 %v3133
          %3622 = vmatprep.mubr.bf16.mxu0 %v2008
          %3623 = vmatmul.mubr.bf16.gmra.mxu0 %v2007
          %v3624 = vpop.f32.mrf.mxu0
          %v3625 = vadd.f32 %v3584, %v3624
          %v3626 = vpop.f32.mrf.mxu0
          %v3627 = vadd.f32 %v3586, %v3626
          %v3628 = vpop.f32.mrf.mxu0
          %v3629 = vpop.f32.mrf.mxu0
          %3630 = vdwg.mxu0
          %3631 = vmatprep.subr.bf16.mxu0 %v3194
          %3632 = vmatpush1.bf16.msra.mxu0 %v3193
          %3633 = vmatprep.subr.bf16.mxu0 %v3190
          %3634 = vmatpush1.bf16.msra.mxu0 %v3189
          %3635 = vmatprep.subr.bf16.mxu0 %v3186
          %3636 = vmatpush1.bf16.msra.mxu0 %v3185
          %3637 = vmatprep.subr.bf16.mxu0 %v3182
          %3638 = vmatpush1.bf16.msra.mxu0 %v3181
          %3639 = vmatprep.subr.bf16.mxu0 %v3178
          %3640 = vmatpush1.bf16.msra.mxu0 %v3177
          %3641 = vmatprep.subr.bf16.mxu0 %v3174
          %3642 = vmatpush1.bf16.msra.mxu0 %v3173
          %3643 = vmatprep.subr.bf16.mxu0 %v3170
          %3644 = vmatpush1.bf16.msra.mxu0 %v3169
          %3645 = vmatprep.subr.bf16.mxu0 %v3166
          %3646 = vmatpush1.bf16.msra.mxu0 %v3165
          %3647 = vmatprep.subr.bf16.mxu0 %v3226
          %3648 = vmatpush2.bf16.msra.mxu0 %v3225
          %3649 = vmatprep.subr.bf16.mxu0 %v3222
          %3650 = vmatpush2.bf16.msra.mxu0 %v3221
          %3651 = vmatprep.subr.bf16.mxu0 %v3218
          %3652 = vmatpush2.bf16.msra.mxu0 %v3217
          %3653 = vmatprep.subr.bf16.mxu0 %v3214
          %3654 = vmatpush2.bf16.msra.mxu0 %v3213
          %3655 = vmatprep.subr.bf16.mxu0 %v3210
          %3656 = vmatpush2.bf16.msra.mxu0 %v3209
          %3657 = vmatprep.subr.bf16.mxu0 %v3206
          %3658 = vmatpush2.bf16.msra.mxu0 %v3205
          %3659 = vmatprep.subr.bf16.mxu0 %v3202
          %3660 = vmatpush2.bf16.msra.mxu0 %v3201
          %3661 = vmatprep.subr.bf16.mxu0 %v3198
          %3662 = vmatpush2.bf16.msra.mxu0 %v3197
          %3663 = vmatprep.mubr.bf16.mxu0 %v2010
          %3664 = vmatmul.mubr.bf16.gmra.mxu0 %v2009
          %v3665 = vpop.f32.mrf.mxu0
          %v3666 = vadd.f32 %v3625, %v3665
          %v3667 = vpop.f32.mrf.mxu0
          %v3668 = vadd.f32 %v3627, %v3667
          %v3669 = vpop.f32.mrf.mxu0
          %v3670 = vpop.f32.mrf.mxu0
          %3671 = vdwg.mxu0
          %3672 = vmatprep.subr.bf16.mxu0 %v3258
          %3673 = vmatpush1.bf16.msra.mxu0 %v3257
          %3674 = vmatprep.subr.bf16.mxu0 %v3254
          %3675 = vmatpush1.bf16.msra.mxu0 %v3253
          %3676 = vmatprep.subr.bf16.mxu0 %v3250
          %3677 = vmatpush1.bf16.msra.mxu0 %v3249
          %3678 = vmatprep.subr.bf16.mxu0 %v3246
          %3679 = vmatpush1.bf16.msra.mxu0 %v3245
          %3680 = vmatprep.subr.bf16.mxu0 %v3242
          %3681 = vmatpush1.bf16.msra.mxu0 %v3241
          %3682 = vmatprep.subr.bf16.mxu0 %v3238
          %3683 = vmatpush1.bf16.msra.mxu0 %v3237
          %3684 = vmatprep.subr.bf16.mxu0 %v3234
          %3685 = vmatpush1.bf16.msra.mxu0 %v3233
          %3686 = vmatprep.subr.bf16.mxu0 %v3230
          %3687 = vmatpush1.bf16.msra.mxu0 %v3229
          %3688 = vmatprep.subr.bf16.mxu0 %v3290
          %3689 = vmatpush2.bf16.msra.mxu0 %v3289
          %3690 = vmatprep.subr.bf16.mxu0 %v3286
          %3691 = vmatpush2.bf16.msra.mxu0 %v3285
          %3692 = vmatprep.subr.bf16.mxu0 %v3282
          %3693 = vmatpush2.bf16.msra.mxu0 %v3281
          %3694 = vmatprep.subr.bf16.mxu0 %v3278
          %3695 = vmatpush2.bf16.msra.mxu0 %v3277
          %3696 = vmatprep.subr.bf16.mxu0 %v3274
          %3697 = vmatpush2.bf16.msra.mxu0 %v3273
          %3698 = vmatprep.subr.bf16.mxu0 %v3270
          %3699 = vmatpush2.bf16.msra.mxu0 %v3269
          %3700 = vmatprep.subr.bf16.mxu0 %v3266
          %3701 = vmatpush2.bf16.msra.mxu0 %v3265
          %3702 = vmatprep.subr.bf16.mxu0 %v3262
          %3703 = vmatpush2.bf16.msra.mxu0 %v3261
          %3704 = vmatprep.mubr.bf16.mxu0 %v2012
          %3705 = vmatmul.mubr.bf16.gmra.mxu0 %v2011
          %v3706 = vpop.f32.mrf.mxu0
          %v3707 = vadd.f32 %v3666, %v3706
          %v3708 = vpop.f32.mrf.mxu0
          %v3709 = vadd.f32 %v3668, %v3708
          %v3710 = vpop.f32.mrf.mxu0
          %v3711 = vpop.f32.mrf.mxu0
          %3712 = vdwg.mxu0
          %3713 = vmatprep.subr.bf16.mxu0 %v3068
          %3714 = vmatpush1.bf16.msra.mxu0 %v3067
          %3715 = vmatprep.subr.bf16.mxu0 %v3064
          %3716 = vmatpush1.bf16.msra.mxu0 %v3063
          %3717 = vmatprep.subr.bf16.mxu0 %v3060
          %3718 = vmatpush1.bf16.msra.mxu0 %v3059
          %3719 = vmatprep.subr.bf16.mxu0 %v3056
          %3720 = vmatpush1.bf16.msra.mxu0 %v3055
          %3721 = vmatprep.subr.bf16.mxu0 %v3052
          %3722 = vmatpush1.bf16.msra.mxu0 %v3051
          %3723 = vmatprep.subr.bf16.mxu0 %v3048
          %3724 = vmatpush1.bf16.msra.mxu0 %v3047
          %3725 = vmatprep.subr.bf16.mxu0 %v3044
          %3726 = vmatpush1.bf16.msra.mxu0 %v3043
          %3727 = vmatprep.subr.bf16.mxu0 %v3040
          %3728 = vmatpush1.bf16.msra.mxu0 %v3039
          %3729 = vmatprep.subr.bf16.mxu0 %v3100
          %3730 = vmatpush2.bf16.msra.mxu0 %v3099
          %3731 = vmatprep.subr.bf16.mxu0 %v3096
          %3732 = vmatpush2.bf16.msra.mxu0 %v3095
          %3733 = vmatprep.subr.bf16.mxu0 %v3092
          %3734 = vmatpush2.bf16.msra.mxu0 %v3091
          %3735 = vmatprep.subr.bf16.mxu0 %v3088
          %3736 = vmatpush2.bf16.msra.mxu0 %v3087
          %3737 = vmatprep.subr.bf16.mxu0 %v3084
          %3738 = vmatpush2.bf16.msra.mxu0 %v3083
          %3739 = vmatprep.subr.bf16.mxu0 %v3080
          %3740 = vmatpush2.bf16.msra.mxu0 %v3079
          %3741 = vmatprep.subr.bf16.mxu0 %v3076
          %3742 = vmatpush2.bf16.msra.mxu0 %v3075
          %3743 = vmatprep.subr.bf16.mxu0 %v3072
          %3744 = vmatpush2.bf16.msra.mxu0 %v3071
          %3745 = vmatprep.mubr.bf16.mxu0 %v2006
          %3746 = vmatmul.mubr.bf16.gmra.mxu0 %v2005
          %v3747 = vpop.f32.mrf.mxu0
          %v3748 = vadd.f32 0.0, %v3747
          %v3749 = vpop.f32.mrf.mxu0
          %v3750 = vadd.f32 0.0, %v3749
          %v3751 = vpop.f32.mrf.mxu0
          %v3752 = vpop.f32.mrf.mxu0
          %3753 = vdwg.mxu0
          %3754 = vmatprep.subr.bf16.mxu0 %v3132
          %3755 = vmatpush1.bf16.msra.mxu0 %v3131
          %3756 = vmatprep.subr.bf16.mxu0 %v3128
          %3757 = vmatpush1.bf16.msra.mxu0 %v3127
          %3758 = vmatprep.subr.bf16.mxu0 %v3124
          %3759 = vmatpush1.bf16.msra.mxu0 %v3123
          %3760 = vmatprep.subr.bf16.mxu0 %v3120
          %3761 = vmatpush1.bf16.msra.mxu0 %v3119
          %3762 = vmatprep.subr.bf16.mxu0 %v3116
          %3763 = vmatpush1.bf16.msra.mxu0 %v3115
          %3764 = vmatprep.subr.bf16.mxu0 %v3112
          %3765 = vmatpush1.bf16.msra.mxu0 %v3111
          %3766 = vmatprep.subr.bf16.mxu0 %v3108
          %3767 = vmatpush1.bf16.msra.mxu0 %v3107
          %3768 = vmatprep.subr.bf16.mxu0 %v3104
          %3769 = vmatpush1.bf16.msra.mxu0 %v3103
          %3770 = vmatprep.subr.bf16.mxu0 %v3164
          %3771 = vmatpush2.bf16.msra.mxu0 %v3163
          %3772 = vmatprep.subr.bf16.mxu0 %v3160
          %3773 = vmatpush2.bf16.msra.mxu0 %v3159
          %3774 = vmatprep.subr.bf16.mxu0 %v3156
          %3775 = vmatpush2.bf16.msra.mxu0 %v3155
          %3776 = vmatprep.subr.bf16.mxu0 %v3152
          %3777 = vmatpush2.bf16.msra.mxu0 %v3151
          %3778 = vmatprep.subr.bf16.mxu0 %v3148
          %3779 = vmatpush2.bf16.msra.mxu0 %v3147
          %3780 = vmatprep.subr.bf16.mxu0 %v3144
          %3781 = vmatpush2.bf16.msra.mxu0 %v3143
          %3782 = vmatprep.subr.bf16.mxu0 %v3140
          %3783 = vmatpush2.bf16.msra.mxu0 %v3139
          %3784 = vmatprep.subr.bf16.mxu0 %v3136
          %3785 = vmatpush2.bf16.msra.mxu0 %v3135
          %3786 = vmatprep.mubr.bf16.mxu0 %v2008
          %3787 = vmatmul.mubr.bf16.gmra.mxu0 %v2007
          %v3788 = vpop.f32.mrf.mxu0
          %v3789 = vadd.f32 %v3748, %v3788
          %v3790 = vpop.f32.mrf.mxu0
          %v3791 = vadd.f32 %v3750, %v3790
          %v3792 = vpop.f32.mrf.mxu0
          %v3793 = vpop.f32.mrf.mxu0
          %3794 = vdwg.mxu0
          %3795 = vmatprep.subr.bf16.mxu0 %v3196
          %3796 = vmatpush1.bf16.msra.mxu0 %v3195
          %3797 = vmatprep.subr.bf16.mxu0 %v3192
          %3798 = vmatpush1.bf16.msra.mxu0 %v3191
          %3799 = vmatprep.subr.bf16.mxu0 %v3188
          %3800 = vmatpush1.bf16.msra.mxu0 %v3187
          %3801 = vmatprep.subr.bf16.mxu0 %v3184
          %3802 = vmatpush1.bf16.msra.mxu0 %v3183
          %3803 = vmatprep.subr.bf16.mxu0 %v3180
          %3804 = vmatpush1.bf16.msra.mxu0 %v3179
          %3805 = vmatprep.subr.bf16.mxu0 %v3176
          %3806 = vmatpush1.bf16.msra.mxu0 %v3175
          %3807 = vmatprep.subr.bf16.mxu0 %v3172
          %3808 = vmatpush1.bf16.msra.mxu0 %v3171
          %3809 = vmatprep.subr.bf16.mxu0 %v3168
          %3810 = vmatpush1.bf16.msra.mxu0 %v3167
          %3811 = vmatprep.subr.bf16.mxu0 %v3228
          %3812 = vmatpush2.bf16.msra.mxu0 %v3227
          %3813 = vmatprep.subr.bf16.mxu0 %v3224
          %3814 = vmatpush2.bf16.msra.mxu0 %v3223
          %3815 = vmatprep.subr.bf16.mxu0 %v3220
          %3816 = vmatpush2.bf16.msra.mxu0 %v3219
          %3817 = vmatprep.subr.bf16.mxu0 %v3216
          %3818 = vmatpush2.bf16.msra.mxu0 %v3215
          %3819 = vmatprep.subr.bf16.mxu0 %v3212
          %3820 = vmatpush2.bf16.msra.mxu0 %v3211
          %3821 = vmatprep.subr.bf16.mxu0 %v3208
          %3822 = vmatpush2.bf16.msra.mxu0 %v3207
          %3823 = vmatprep.subr.bf16.mxu0 %v3204
          %3824 = vmatpush2.bf16.msra.mxu0 %v3203
          %3825 = vmatprep.subr.bf16.mxu0 %v3200
          %3826 = vmatpush2.bf16.msra.mxu0 %v3199
          %3827 = vmatprep.mubr.bf16.mxu0 %v2010
          %3828 = vmatmul.mubr.bf16.gmra.mxu0 %v2009
          %v3829 = vpop.f32.mrf.mxu0
          %v3830 = vadd.f32 %v3789, %v3829
          %v3831 = vpop.f32.mrf.mxu0
          %v3832 = vadd.f32 %v3791, %v3831
          %v3833 = vpop.f32.mrf.mxu0
          %v3834 = vpop.f32.mrf.mxu0
          %3835 = vdwg.mxu0
          %3836 = vmatprep.subr.bf16.mxu0 %v3260
          %3837 = vmatpush1.bf16.msra.mxu0 %v3259
          %3838 = vmatprep.subr.bf16.mxu0 %v3256
          %3839 = vmatpush1.bf16.msra.mxu0 %v3255
          %3840 = vmatprep.subr.bf16.mxu0 %v3252
          %3841 = vmatpush1.bf16.msra.mxu0 %v3251
          %3842 = vmatprep.subr.bf16.mxu0 %v3248
          %3843 = vmatpush1.bf16.msra.mxu0 %v3247
          %3844 = vmatprep.subr.bf16.mxu0 %v3244
          %3845 = vmatpush1.bf16.msra.mxu0 %v3243
          %3846 = vmatprep.subr.bf16.mxu0 %v3240
          %3847 = vmatpush1.bf16.msra.mxu0 %v3239
          %3848 = vmatprep.subr.bf16.mxu0 %v3236
          %3849 = vmatpush1.bf16.msra.mxu0 %v3235
          %3850 = vmatprep.subr.bf16.mxu0 %v3232
          %3851 = vmatpush1.bf16.msra.mxu0 %v3231
          %3852 = vmatprep.subr.bf16.mxu0 %v3292
          %3853 = vmatpush2.bf16.msra.mxu0 %v3291
          %3854 = vmatprep.subr.bf16.mxu0 %v3288
          %3855 = vmatpush2.bf16.msra.mxu0 %v3287
          %3856 = vmatprep.subr.bf16.mxu0 %v3284
          %3857 = vmatpush2.bf16.msra.mxu0 %v3283
          %3858 = vmatprep.subr.bf16.mxu0 %v3280
          %3859 = vmatpush2.bf16.msra.mxu0 %v3279
          %3860 = vmatprep.subr.bf16.mxu0 %v3276
          %3861 = vmatpush2.bf16.msra.mxu0 %v3275
          %3862 = vmatprep.subr.bf16.mxu0 %v3272
          %3863 = vmatpush2.bf16.msra.mxu0 %v3271
          %3864 = vmatprep.subr.bf16.mxu0 %v3268
          %3865 = vmatpush2.bf16.msra.mxu0 %v3267
          %3866 = vmatprep.subr.bf16.mxu0 %v3264
          %3867 = vmatpush2.bf16.msra.mxu0 %v3263
          %3868 = vmatprep.mubr.bf16.mxu0 %v2012
          %3869 = vmatmul.mubr.bf16.gmra.mxu0 %v2011
          %v3870 = vpop.f32.mrf.mxu0
          %v3871 = vadd.f32 %v3830, %v3870
          %v3872 = vpop.f32.mrf.mxu0
          %v3873 = vadd.f32 %v3832, %v3872
          %v3874 = vpop.f32.mrf.mxu0
          %v3875 = vpop.f32.mrf.mxu0
          %3876 = vdwg.mxu0
          %v3877 = vld [vmem:[%s14] sm:$0xf]
          %v3879 = vlaneseq
          %v3880 = vshrl.u32 %v3879, 7
          %v3881 = vsub.s32 0, %v3880
          %v3882 = vrot.slane %v3877, %v3881
          %v3883 = vlaneseq
          %v3884 = vshrl.u32 %v3883, 7
          %v3885 = vsub.s32 1, %v3884
          %v3886 = vrot.slane %v3877, %v3885
          %v3887 = vlaneseq
          %v3888 = vshrl.u32 %v3887, 7
          %v3889 = vsub.s32 2, %v3888
          %v3890 = vrot.slane %v3877, %v3889
          %v3891 = vlaneseq
          %v3892 = vshrl.u32 %v3891, 7
          %v3893 = vsub.s32 3, %v3892
          %v3894 = vrot.slane %v3877, %v3893
          %v3899 = vmul.f32 %v3707, %v3882
          %v3900 = vmul.f32 %v3709, %v3886
          %v3901 = vmul.f32 %v3871, %v3890
          %v3902 = vmul.f32 %v3873, %v3894
          %v3903 = vld [vmem:[%s15] sm:$0xf]
          %v3905 = vlaneseq
          %v3906 = vshrl.u32 %v3905, 7
          %v3907 = vsub.s32 0, %v3906
          %v3908 = vrot.slane %v3903, %v3907
          %v3909 = vlaneseq
          %v3910 = vshrl.u32 %v3909, 7
          %v3911 = vsub.s32 1, %v3910
          %v3912 = vrot.slane %v3903, %v3911
          %v3913 = vlaneseq
          %v3914 = vshrl.u32 %v3913, 7
          %v3915 = vsub.s32 2, %v3914
          %v3916 = vrot.slane %v3903, %v3915
          %v3917 = vlaneseq
          %v3918 = vshrl.u32 %v3917, 7
          %v3919 = vsub.s32 3, %v3918
          %v3920 = vrot.slane %v3903, %v3919
          %v3925 = vadd.f32 %v3899, %v3908
          %v3926 = vadd.f32 %v3900, %v3912
          %v3927 = vadd.f32 %v3901, %v3916
          %v3928 = vadd.f32 %v3902, %v3920
          %v3929 = vmax.f32 %v3925, 0.0
          %v3930 = vmax.f32 %v3926, 0.0
          %v3931 = vmax.f32 %v3927, 0.0
          %v3932 = vmax.f32 %v3928, 0.0
          %v3933 = vpack.c.bf16 %v3929, %v3929
          %v3934 = vpack.c.bf16 %v3930, %v3930
          %v3935 = vpack.c.bf16 %v3931, %v3931
          %v3936 = vpack.c.bf16 %v3932, %v3932
          %v3937 = vld [vmem:[#allocation20] sm:$0xff]
          %v3938 = vld [vmem:[#allocation20 + $0x8] sm:$0xff]
          %v3939 = vld [vmem:[#allocation20 + $0x10] sm:$0xff]
          %v3940 = vld [vmem:[#allocation20 + $0x18] sm:$0xff]
          %v3941 = vld [vmem:[#allocation20 + $0x20] sm:$0xff]
          %v3942 = vld [vmem:[#allocation20 + $0x28] sm:$0xff]
          %v3943 = vld [vmem:[#allocation20 + $0x30] sm:$0xff]
          %v3944 = vld [vmem:[#allocation20 + $0x38] sm:$0xff]
          %v3945 = vld [vmem:[#allocation20 + $0x40] sm:$0xff]
          %v3946 = vld [vmem:[#allocation20 + $0x48] sm:$0xff]
          %v3947 = vld [vmem:[#allocation20 + $0x50] sm:$0xff]
          %v3948 = vld [vmem:[#allocation20 + $0x58] sm:$0xff]
          %v3949 = vld [vmem:[#allocation20 + $0x60] sm:$0xff]
          %v3950 = vld [vmem:[#allocation20 + $0x68] sm:$0xff]
          %v3951 = vld [vmem:[#allocation20 + $0x70] sm:$0xff]
          %v3952 = vld [vmem:[#allocation20 + $0x78] sm:$0xff]
          %v3953 = vld [vmem:[#allocation20 + $0x80] sm:$0xff]
          %v3954 = vld [vmem:[#allocation20 + $0x88] sm:$0xff]
          %v3955 = vld [vmem:[#allocation20 + $0x90] sm:$0xff]
          %v3956 = vld [vmem:[#allocation20 + $0x98] sm:$0xff]
          %v3957 = vld [vmem:[#allocation20 + $0xa0] sm:$0xff]
          %v3958 = vld [vmem:[#allocation20 + $0xa8] sm:$0xff]
          %v3959 = vld [vmem:[#allocation20 + $0xb0] sm:$0xff]
          %v3960 = vld [vmem:[#allocation20 + $0xb8] sm:$0xff]
          %v3961 = vld [vmem:[#allocation20 + $0xc0] sm:$0xff]
          %v3962 = vld [vmem:[#allocation20 + $0xc8] sm:$0xff]
          %v3963 = vld [vmem:[#allocation20 + $0xd0] sm:$0xff]
          %v3964 = vld [vmem:[#allocation20 + $0xd8] sm:$0xff]
          %v3965 = vld [vmem:[#allocation20 + $0xe0] sm:$0xff]
          %v3966 = vld [vmem:[#allocation20 + $0xe8] sm:$0xff]
          %v3967 = vld [vmem:[#allocation20 + $0xf0] sm:$0xff]
          %v3968 = vld [vmem:[#allocation20 + $0xf8] sm:$0xff]
          %v3969 = vld [vmem:[#allocation20 + $0x100] sm:$0xff]
          %v3970 = vld [vmem:[#allocation20 + $0x108] sm:$0xff]
          %v3971 = vld [vmem:[#allocation20 + $0x110] sm:$0xff]
          %v3972 = vld [vmem:[#allocation20 + $0x118] sm:$0xff]
          %v3973 = vld [vmem:[#allocation20 + $0x120] sm:$0xff]
          %v3974 = vld [vmem:[#allocation20 + $0x128] sm:$0xff]
          %v3975 = vld [vmem:[#allocation20 + $0x130] sm:$0xff]
          %v3976 = vld [vmem:[#allocation20 + $0x138] sm:$0xff]
          %v3977 = vld [vmem:[#allocation20 + $0x140] sm:$0xff]
          %v3978 = vld [vmem:[#allocation20 + $0x148] sm:$0xff]
          %v3979 = vld [vmem:[#allocation20 + $0x150] sm:$0xff]
          %v3980 = vld [vmem:[#allocation20 + $0x158] sm:$0xff]
          %v3981 = vld [vmem:[#allocation20 + $0x160] sm:$0xff]
          %v3982 = vld [vmem:[#allocation20 + $0x168] sm:$0xff]
          %v3983 = vld [vmem:[#allocation20 + $0x170] sm:$0xff]
          %v3984 = vld [vmem:[#allocation20 + $0x178] sm:$0xff]
          %v3985 = vld [vmem:[#allocation20 + $0x180] sm:$0xff]
          %v3986 = vld [vmem:[#allocation20 + $0x188] sm:$0xff]
          %v3987 = vld [vmem:[#allocation20 + $0x190] sm:$0xff]
          %v3988 = vld [vmem:[#allocation20 + $0x198] sm:$0xff]
          %v3989 = vld [vmem:[#allocation20 + $0x1a0] sm:$0xff]
          %v3990 = vld [vmem:[#allocation20 + $0x1a8] sm:$0xff]
          %v3991 = vld [vmem:[#allocation20 + $0x1b0] sm:$0xff]
          %v3992 = vld [vmem:[#allocation20 + $0x1b8] sm:$0xff]
          %v3993 = vld [vmem:[#allocation20 + $0x1c0] sm:$0xff]
          %v3994 = vld [vmem:[#allocation20 + $0x1c8] sm:$0xff]
          %v3995 = vld [vmem:[#allocation20 + $0x1d0] sm:$0xff]
          %v3996 = vld [vmem:[#allocation20 + $0x1d8] sm:$0xff]
          %v3997 = vld [vmem:[#allocation20 + $0x1e0] sm:$0xff]
          %v3998 = vld [vmem:[#allocation20 + $0x1e8] sm:$0xff]
          %v3999 = vld [vmem:[#allocation20 + $0x1f0] sm:$0xff]
          %v4000 = vld [vmem:[#allocation20 + $0x1f8] sm:$0xff]
          %v4065 = vunpack.c.l.b16 %v3937
          %v4066 = vunpack.c.h.b16 %v3937
          %v4067 = vunpack.c.l.b16 %v3938
          %v4068 = vunpack.c.h.b16 %v3938
          %v4069 = vunpack.c.l.b16 %v3939
          %v4070 = vunpack.c.h.b16 %v3939
          %v4071 = vunpack.c.l.b16 %v3940
          %v4072 = vunpack.c.h.b16 %v3940
          %v4073 = vunpack.c.l.b16 %v3941
          %v4074 = vunpack.c.h.b16 %v3941
          %v4075 = vunpack.c.l.b16 %v3942
          %v4076 = vunpack.c.h.b16 %v3942
          %v4077 = vunpack.c.l.b16 %v3943
          %v4078 = vunpack.c.h.b16 %v3943
          %v4079 = vunpack.c.l.b16 %v3944
          %v4080 = vunpack.c.h.b16 %v3944
          %v4081 = vunpack.c.l.b16 %v3945
          %v4082 = vunpack.c.h.b16 %v3945
          %v4083 = vunpack.c.l.b16 %v3946
          %v4084 = vunpack.c.h.b16 %v3946
          %v4085 = vunpack.c.l.b16 %v3947
          %v4086 = vunpack.c.h.b16 %v3947
          %v4087 = vunpack.c.l.b16 %v3948
          %v4088 = vunpack.c.h.b16 %v3948
          %v4089 = vunpack.c.l.b16 %v3949
          %v4090 = vunpack.c.h.b16 %v3949
          %v4091 = vunpack.c.l.b16 %v3950
          %v4092 = vunpack.c.h.b16 %v3950
          %v4093 = vunpack.c.l.b16 %v3951
          %v4094 = vunpack.c.h.b16 %v3951
          %v4095 = vunpack.c.l.b16 %v3952
          %v4096 = vunpack.c.h.b16 %v3952
          %v4097 = vunpack.c.l.b16 %v3953
          %v4098 = vunpack.c.h.b16 %v3953
          %v4099 = vunpack.c.l.b16 %v3954
          %v4100 = vunpack.c.h.b16 %v3954
          %v4101 = vunpack.c.l.b16 %v3955
          %v4102 = vunpack.c.h.b16 %v3955
          %v4103 = vunpack.c.l.b16 %v3956
          %v4104 = vunpack.c.h.b16 %v3956
          %v4105 = vunpack.c.l.b16 %v3957
          %v4106 = vunpack.c.h.b16 %v3957
          %v4107 = vunpack.c.l.b16 %v3958
          %v4108 = vunpack.c.h.b16 %v3958
          %v4109 = vunpack.c.l.b16 %v3959
          %v4110 = vunpack.c.h.b16 %v3959
          %v4111 = vunpack.c.l.b16 %v3960
          %v4112 = vunpack.c.h.b16 %v3960
          %v4113 = vunpack.c.l.b16 %v3961
          %v4114 = vunpack.c.h.b16 %v3961
          %v4115 = vunpack.c.l.b16 %v3962
          %v4116 = vunpack.c.h.b16 %v3962
          %v4117 = vunpack.c.l.b16 %v3963
          %v4118 = vunpack.c.h.b16 %v3963
          %v4119 = vunpack.c.l.b16 %v3964
          %v4120 = vunpack.c.h.b16 %v3964
          %v4121 = vunpack.c.l.b16 %v3965
          %v4122 = vunpack.c.h.b16 %v3965
          %v4123 = vunpack.c.l.b16 %v3966
          %v4124 = vunpack.c.h.b16 %v3966
          %v4125 = vunpack.c.l.b16 %v3967
          %v4126 = vunpack.c.h.b16 %v3967
          %v4127 = vunpack.c.l.b16 %v3968
          %v4128 = vunpack.c.h.b16 %v3968
          %v4129 = vunpack.c.l.b16 %v3969
          %v4130 = vunpack.c.h.b16 %v3969
          %v4131 = vunpack.c.l.b16 %v3970
          %v4132 = vunpack.c.h.b16 %v3970
          %v4133 = vunpack.c.l.b16 %v3971
          %v4134 = vunpack.c.h.b16 %v3971
          %v4135 = vunpack.c.l.b16 %v3972
          %v4136 = vunpack.c.h.b16 %v3972
          %v4137 = vunpack.c.l.b16 %v3973
          %v4138 = vunpack.c.h.b16 %v3973
          %v4139 = vunpack.c.l.b16 %v3974
          %v4140 = vunpack.c.h.b16 %v3974
          %v4141 = vunpack.c.l.b16 %v3975
          %v4142 = vunpack.c.h.b16 %v3975
          %v4143 = vunpack.c.l.b16 %v3976
          %v4144 = vunpack.c.h.b16 %v3976
          %v4145 = vunpack.c.l.b16 %v3977
          %v4146 = vunpack.c.h.b16 %v3977
          %v4147 = vunpack.c.l.b16 %v3978
          %v4148 = vunpack.c.h.b16 %v3978
          %v4149 = vunpack.c.l.b16 %v3979
          %v4150 = vunpack.c.h.b16 %v3979
          %v4151 = vunpack.c.l.b16 %v3980
          %v4152 = vunpack.c.h.b16 %v3980
          %v4153 = vunpack.c.l.b16 %v3981
          %v4154 = vunpack.c.h.b16 %v3981
          %v4155 = vunpack.c.l.b16 %v3982
          %v4156 = vunpack.c.h.b16 %v3982
          %v4157 = vunpack.c.l.b16 %v3983
          %v4158 = vunpack.c.h.b16 %v3983
          %v4159 = vunpack.c.l.b16 %v3984
          %v4160 = vunpack.c.h.b16 %v3984
          %v4161 = vunpack.c.l.b16 %v3985
          %v4162 = vunpack.c.h.b16 %v3985
          %v4163 = vunpack.c.l.b16 %v3986
          %v4164 = vunpack.c.h.b16 %v3986
          %v4165 = vunpack.c.l.b16 %v3987
          %v4166 = vunpack.c.h.b16 %v3987
          %v4167 = vunpack.c.l.b16 %v3988
          %v4168 = vunpack.c.h.b16 %v3988
          %v4169 = vunpack.c.l.b16 %v3989
          %v4170 = vunpack.c.h.b16 %v3989
          %v4171 = vunpack.c.l.b16 %v3990
          %v4172 = vunpack.c.h.b16 %v3990
          %v4173 = vunpack.c.l.b16 %v3991
          %v4174 = vunpack.c.h.b16 %v3991
          %v4175 = vunpack.c.l.b16 %v3992
          %v4176 = vunpack.c.h.b16 %v3992
          %v4177 = vunpack.c.l.b16 %v3993
          %v4178 = vunpack.c.h.b16 %v3993
          %v4179 = vunpack.c.l.b16 %v3994
          %v4180 = vunpack.c.h.b16 %v3994
          %v4181 = vunpack.c.l.b16 %v3995
          %v4182 = vunpack.c.h.b16 %v3995
          %v4183 = vunpack.c.l.b16 %v3996
          %v4184 = vunpack.c.h.b16 %v3996
          %v4185 = vunpack.c.l.b16 %v3997
          %v4186 = vunpack.c.h.b16 %v3997
          %v4187 = vunpack.c.l.b16 %v3998
          %v4188 = vunpack.c.h.b16 %v3998
          %v4189 = vunpack.c.l.b16 %v3999
          %v4190 = vunpack.c.h.b16 %v3999
          %v4191 = vunpack.c.l.b16 %v4000
          %v4192 = vunpack.c.h.b16 %v4000
          %v4193 = vpack.c.b16 %v4067, %v4065
          %v4194 = vpack.c.b16 %v4068, %v4066
          %v4195 = vpack.c.b16 %v4071, %v4069
          %v4196 = vpack.c.b16 %v4072, %v4070
          %v4197 = vpack.c.b16 %v4075, %v4073
          %v4198 = vpack.c.b16 %v4076, %v4074
          %v4199 = vpack.c.b16 %v4079, %v4077
          %v4200 = vpack.c.b16 %v4080, %v4078
          %v4201 = vpack.c.b16 %v4083, %v4081
          %v4202 = vpack.c.b16 %v4084, %v4082
          %v4203 = vpack.c.b16 %v4087, %v4085
          %v4204 = vpack.c.b16 %v4088, %v4086
          %v4205 = vpack.c.b16 %v4091, %v4089
          %v4206 = vpack.c.b16 %v4092, %v4090
          %v4207 = vpack.c.b16 %v4095, %v4093
          %v4208 = vpack.c.b16 %v4096, %v4094
          %v4209 = vpack.c.b16 %v4099, %v4097
          %v4210 = vpack.c.b16 %v4100, %v4098
          %v4211 = vpack.c.b16 %v4103, %v4101
          %v4212 = vpack.c.b16 %v4104, %v4102
          %v4213 = vpack.c.b16 %v4107, %v4105
          %v4214 = vpack.c.b16 %v4108, %v4106
          %v4215 = vpack.c.b16 %v4111, %v4109
          %v4216 = vpack.c.b16 %v4112, %v4110
          %v4217 = vpack.c.b16 %v4115, %v4113
          %v4218 = vpack.c.b16 %v4116, %v4114
          %v4219 = vpack.c.b16 %v4119, %v4117
          %v4220 = vpack.c.b16 %v4120, %v4118
          %v4221 = vpack.c.b16 %v4123, %v4121
          %v4222 = vpack.c.b16 %v4124, %v4122
          %v4223 = vpack.c.b16 %v4127, %v4125
          %v4224 = vpack.c.b16 %v4128, %v4126
          %v4225 = vpack.c.b16 %v4131, %v4129
          %v4226 = vpack.c.b16 %v4132, %v4130
          %v4227 = vpack.c.b16 %v4135, %v4133
          %v4228 = vpack.c.b16 %v4136, %v4134
          %v4229 = vpack.c.b16 %v4139, %v4137
          %v4230 = vpack.c.b16 %v4140, %v4138
          %v4231 = vpack.c.b16 %v4143, %v4141
          %v4232 = vpack.c.b16 %v4144, %v4142
          %v4233 = vpack.c.b16 %v4147, %v4145
          %v4234 = vpack.c.b16 %v4148, %v4146
          %v4235 = vpack.c.b16 %v4151, %v4149
          %v4236 = vpack.c.b16 %v4152, %v4150
          %v4237 = vpack.c.b16 %v4155, %v4153
          %v4238 = vpack.c.b16 %v4156, %v4154
          %v4239 = vpack.c.b16 %v4159, %v4157
          %v4240 = vpack.c.b16 %v4160, %v4158
          %v4241 = vpack.c.b16 %v4163, %v4161
          %v4242 = vpack.c.b16 %v4164, %v4162
          %v4243 = vpack.c.b16 %v4167, %v4165
          %v4244 = vpack.c.b16 %v4168, %v4166
          %v4245 = vpack.c.b16 %v4171, %v4169
          %v4246 = vpack.c.b16 %v4172, %v4170
          %v4247 = vpack.c.b16 %v4175, %v4173
          %v4248 = vpack.c.b16 %v4176, %v4174
          %v4249 = vpack.c.b16 %v4179, %v4177
          %v4250 = vpack.c.b16 %v4180, %v4178
          %v4251 = vpack.c.b16 %v4183, %v4181
          %v4252 = vpack.c.b16 %v4184, %v4182
          %v4253 = vpack.c.b16 %v4187, %v4185
          %v4254 = vpack.c.b16 %v4188, %v4186
          %v4255 = vpack.c.b16 %v4191, %v4189
          %v4256 = vpack.c.b16 %v4192, %v4190
          %4321 = vmatprep.subr.bf16.mxu0 %v4208
          %4322 = vmatpush1.bf16.msra.mxu0 %v4207
          %4323 = vmatprep.subr.bf16.mxu0 %v4206
          %4324 = vmatpush1.bf16.msra.mxu0 %v4205
          %4325 = vmatprep.subr.bf16.mxu0 %v4204
          %4326 = vmatpush1.bf16.msra.mxu0 %v4203
          %4327 = vmatprep.subr.bf16.mxu0 %v4202
          %4328 = vmatpush1.bf16.msra.mxu0 %v4201
          %4329 = vmatprep.subr.bf16.mxu0 %v4200
          %4330 = vmatpush1.bf16.msra.mxu0 %v4199
          %4331 = vmatprep.subr.bf16.mxu0 %v4198
          %4332 = vmatpush1.bf16.msra.mxu0 %v4197
          %4333 = vmatprep.subr.bf16.mxu0 %v4196
          %4334 = vmatpush1.bf16.msra.mxu0 %v4195
          %4335 = vmatprep.subr.bf16.mxu0 %v4194
          %4336 = vmatpush1.bf16.msra.mxu0 %v4193
          %4337 = vmatprep.subr.bf16.mxu0 %v4224
          %4338 = vmatpush2.bf16.msra.mxu0 %v4223
          %4339 = vmatprep.subr.bf16.mxu0 %v4222
          %4340 = vmatpush2.bf16.msra.mxu0 %v4221
          %4341 = vmatprep.subr.bf16.mxu0 %v4220
          %4342 = vmatpush2.bf16.msra.mxu0 %v4219
          %4343 = vmatprep.subr.bf16.mxu0 %v4218
          %4344 = vmatpush2.bf16.msra.mxu0 %v4217
          %4345 = vmatprep.subr.bf16.mxu0 %v4216
          %4346 = vmatpush2.bf16.msra.mxu0 %v4215
          %4347 = vmatprep.subr.bf16.mxu0 %v4214
          %4348 = vmatpush2.bf16.msra.mxu0 %v4213
          %4349 = vmatprep.subr.bf16.mxu0 %v4212
          %4350 = vmatpush2.bf16.msra.mxu0 %v4211
          %4351 = vmatprep.subr.bf16.mxu0 %v4210
          %4352 = vmatpush2.bf16.msra.mxu0 %v4209
          %4353 = vmatprep.mubr.bf16.mxu0 %v3934
          %4354 = vmatmul.mubr.bf16.gmra.mxu0 %v3933
          %v4355 = vpop.f32.mrf.mxu0
          %v4356 = vadd.f32 0.0, %v4355
          %v4357 = vpop.f32.mrf.mxu0
          %v4358 = vadd.f32 0.0, %v4357
          %v4359 = vpop.f32.mrf.mxu0
          %v4360 = vpop.f32.mrf.mxu0
          %4361 = vdwg.mxu0
          %4362 = vmatprep.subr.bf16.mxu0 %v4240
          %4363 = vmatpush1.bf16.msra.mxu0 %v4239
          %4364 = vmatprep.subr.bf16.mxu0 %v4238
          %4365 = vmatpush1.bf16.msra.mxu0 %v4237
          %4366 = vmatprep.subr.bf16.mxu0 %v4236
          %4367 = vmatpush1.bf16.msra.mxu0 %v4235
          %4368 = vmatprep.subr.bf16.mxu0 %v4234
          %4369 = vmatpush1.bf16.msra.mxu0 %v4233
          %4370 = vmatprep.subr.bf16.mxu0 %v4232
          %4371 = vmatpush1.bf16.msra.mxu0 %v4231
          %4372 = vmatprep.subr.bf16.mxu0 %v4230
          %4373 = vmatpush1.bf16.msra.mxu0 %v4229
          %4374 = vmatprep.subr.bf16.mxu0 %v4228
          %4375 = vmatpush1.bf16.msra.mxu0 %v4227
          %4376 = vmatprep.subr.bf16.mxu0 %v4226
          %4377 = vmatpush1.bf16.msra.mxu0 %v4225
          %4378 = vmatprep.subr.bf16.mxu0 %v4256
          %4379 = vmatpush2.bf16.msra.mxu0 %v4255
          %4380 = vmatprep.subr.bf16.mxu0 %v4254
          %4381 = vmatpush2.bf16.msra.mxu0 %v4253
          %4382 = vmatprep.subr.bf16.mxu0 %v4252
          %4383 = vmatpush2.bf16.msra.mxu0 %v4251
          %4384 = vmatprep.subr.bf16.mxu0 %v4250
          %4385 = vmatpush2.bf16.msra.mxu0 %v4249
          %4386 = vmatprep.subr.bf16.mxu0 %v4248
          %4387 = vmatpush2.bf16.msra.mxu0 %v4247
          %4388 = vmatprep.subr.bf16.mxu0 %v4246
          %4389 = vmatpush2.bf16.msra.mxu0 %v4245
          %4390 = vmatprep.subr.bf16.mxu0 %v4244
          %4391 = vmatpush2.bf16.msra.mxu0 %v4243
          %4392 = vmatprep.subr.bf16.mxu0 %v4242
          %4393 = vmatpush2.bf16.msra.mxu0 %v4241
          %4394 = vmatprep.mubr.bf16.mxu0 %v3936
          %4395 = vmatmul.mubr.bf16.gmra.mxu0 %v3935
          %v4396 = vpop.f32.mrf.mxu0
          %v4397 = vadd.f32 %v4356, %v4396
          %v4398 = vpop.f32.mrf.mxu0
          %v4399 = vadd.f32 %v4358, %v4398
          %v4400 = vpop.f32.mrf.mxu0
          %v4401 = vpop.f32.mrf.mxu0
          %4402 = vdwg.mxu0
          %v4403 = vld [vmem:[%s17] sm:$0x3]
          %v4405 = vlaneseq
          %v4406 = vshrl.u32 %v4405, 7
          %v4407 = vsub.s32 0, %v4406
          %v4408 = vrot.slane %v4403, %v4407
          %v4409 = vlaneseq
          %v4410 = vshrl.u32 %v4409, 7
          %v4411 = vsub.s32 1, %v4410
          %v4412 = vrot.slane %v4403, %v4411
          %v4415 = vmul.f32 %v4397, %v4408
          %v4416 = vmul.f32 %v4399, %v4412
          %v4417 = vld [vmem:[%s18] sm:$0x3]
          %v4419 = vlaneseq
          %v4420 = vshrl.u32 %v4419, 7
          %v4421 = vsub.s32 0, %v4420
          %v4422 = vrot.slane %v4417, %v4421
          %v4423 = vlaneseq
          %v4424 = vshrl.u32 %v4423, 7
          %v4425 = vsub.s32 1, %v4424
          %v4426 = vrot.slane %v4417, %v4425
          %v4429 = vadd.f32 %v4415, %v4422
          %v4430 = vadd.f32 %v4416, %v4426
          %v4431 = vmax.f32 %v4429, 0.0
          %v4432 = vmax.f32 %v4430, 0.0
          %v4433 = vpack.c.bf16 %v4431, %v4431
          %v4434 = vpack.c.bf16 %v4432, %v4432
          %v4435 = vld [vmem:[#allocation21] sm:$0xf]
          %v4436 = vld [vmem:[#allocation21 + $0x4] sm:$0xf]
          %v4437 = vld [vmem:[#allocation21 + $0x8] sm:$0xf]
          %v4438 = vld [vmem:[#allocation21 + $0xc] sm:$0xf]
          %v4439 = vld [vmem:[#allocation21 + $0x10] sm:$0xf]
          %v4440 = vld [vmem:[#allocation21 + $0x14] sm:$0xf]
          %v4441 = vld [vmem:[#allocation21 + $0x18] sm:$0xf]
          %v4442 = vld [vmem:[#allocation21 + $0x1c] sm:$0xf]
          %v4443 = vld [vmem:[#allocation21 + $0x20] sm:$0xf]
          %v4444 = vld [vmem:[#allocation21 + $0x24] sm:$0xf]
          %v4445 = vld [vmem:[#allocation21 + $0x28] sm:$0xf]
          %v4446 = vld [vmem:[#allocation21 + $0x2c] sm:$0xf]
          %v4447 = vld [vmem:[#allocation21 + $0x30] sm:$0xf]
          %v4448 = vld [vmem:[#allocation21 + $0x34] sm:$0xf]
          %v4449 = vld [vmem:[#allocation21 + $0x38] sm:$0xf]
          %v4450 = vld [vmem:[#allocation21 + $0x3c] sm:$0xf]
          %v4451 = vld [vmem:[#allocation21 + $0x40] sm:$0xf]
          %v4452 = vld [vmem:[#allocation21 + $0x44] sm:$0xf]
          %v4453 = vld [vmem:[#allocation21 + $0x48] sm:$0xf]
          %v4454 = vld [vmem:[#allocation21 + $0x4c] sm:$0xf]
          %v4455 = vld [vmem:[#allocation21 + $0x50] sm:$0xf]
          %v4456 = vld [vmem:[#allocation21 + $0x54] sm:$0xf]
          %v4457 = vld [vmem:[#allocation21 + $0x58] sm:$0xf]
          %v4458 = vld [vmem:[#allocation21 + $0x5c] sm:$0xf]
          %v4459 = vld [vmem:[#allocation21 + $0x60] sm:$0xf]
          %v4460 = vld [vmem:[#allocation21 + $0x64] sm:$0xf]
          %v4461 = vld [vmem:[#allocation21 + $0x68] sm:$0xf]
          %v4462 = vld [vmem:[#allocation21 + $0x6c] sm:$0xf]
          %v4463 = vld [vmem:[#allocation21 + $0x70] sm:$0xf]
          %v4464 = vld [vmem:[#allocation21 + $0x74] sm:$0xf]
          %v4465 = vld [vmem:[#allocation21 + $0x78] sm:$0xf]
          %v4466 = vld [vmem:[#allocation21 + $0x7c] sm:$0xf]
          %v4467 = vld [vmem:[%s20] sm:$0x1]
          %v4500 = vunpack.c.l.b16 %v4435
          %v4501 = vunpack.c.l.b16 %v4436
          %v4502 = vunpack.c.l.b16 %v4437
          %v4503 = vunpack.c.l.b16 %v4438
          %v4504 = vunpack.c.l.b16 %v4439
          %v4505 = vunpack.c.l.b16 %v4440
          %v4506 = vunpack.c.l.b16 %v4441
          %v4507 = vunpack.c.l.b16 %v4442
          %v4508 = vunpack.c.l.b16 %v4443
          %v4509 = vunpack.c.l.b16 %v4444
          %v4510 = vunpack.c.l.b16 %v4445
          %v4511 = vunpack.c.l.b16 %v4446
          %v4512 = vunpack.c.l.b16 %v4447
          %v4513 = vunpack.c.l.b16 %v4448
          %v4514 = vunpack.c.l.b16 %v4449
          %v4515 = vunpack.c.l.b16 %v4450
          %v4516 = vunpack.c.l.b16 %v4451
          %v4517 = vunpack.c.l.b16 %v4452
          %v4518 = vunpack.c.l.b16 %v4453
          %v4519 = vunpack.c.l.b16 %v4454
          %v4520 = vunpack.c.l.b16 %v4455
          %v4521 = vunpack.c.l.b16 %v4456
          %v4522 = vunpack.c.l.b16 %v4457
          %v4523 = vunpack.c.l.b16 %v4458
          %v4524 = vunpack.c.l.b16 %v4459
          %v4525 = vunpack.c.l.b16 %v4460
          %v4526 = vunpack.c.l.b16 %v4461
          %v4527 = vunpack.c.l.b16 %v4462
          %v4528 = vunpack.c.l.b16 %v4463
          %v4529 = vunpack.c.l.b16 %v4464
          %v4530 = vunpack.c.l.b16 %v4465
          %v4531 = vunpack.c.l.b16 %v4466
          %v4532 = vpack.c.b16 %v4501, %v4500
          %v4533 = vpack.c.b16 %v4503, %v4502
          %v4534 = vpack.c.b16 %v4505, %v4504
          %v4535 = vpack.c.b16 %v4507, %v4506
          %v4536 = vpack.c.b16 %v4509, %v4508
          %v4537 = vpack.c.b16 %v4511, %v4510
          %v4538 = vpack.c.b16 %v4513, %v4512
          %v4539 = vpack.c.b16 %v4515, %v4514
          %v4540 = vpack.c.b16 %v4517, %v4516
          %v4541 = vpack.c.b16 %v4519, %v4518
          %v4542 = vpack.c.b16 %v4521, %v4520
          %v4543 = vpack.c.b16 %v4523, %v4522
          %v4544 = vpack.c.b16 %v4525, %v4524
          %v4545 = vpack.c.b16 %v4527, %v4526
          %v4546 = vpack.c.b16 %v4529, %v4528
          %v4547 = vpack.c.b16 %v4531, %v4530
          %4564 = vmatprep.subr.bf16.mxu0 0
          %4565 = vmatpush1.bf16.msra.mxu0 %v4539
          %4566 = vmatprep.subr.bf16.mxu0 0
          %4567 = vmatpush1.bf16.msra.mxu0 %v4538
          %4568 = vmatprep.subr.bf16.mxu0 0
          %4569 = vmatpush1.bf16.msra.mxu0 %v4537
          %4570 = vmatprep.subr.bf16.mxu0 0
          %4571 = vmatpush1.bf16.msra.mxu0 %v4536
          %4572 = vmatprep.subr.bf16.mxu0 0
          %4573 = vmatpush1.bf16.msra.mxu0 %v4535
          %4574 = vmatprep.subr.bf16.mxu0 0
          %4575 = vmatpush1.bf16.msra.mxu0 %v4534
          %4576 = vmatprep.subr.bf16.mxu0 0
          %4577 = vmatpush1.bf16.msra.mxu0 %v4533
          %4578 = vmatprep.subr.bf16.mxu0 0
          %4579 = vmatpush1.bf16.msra.mxu0 %v4532
          %4580 = vmatprep.subr.bf16.mxu0 0
          %4581 = vmatpush2.bf16.msra.mxu0 %v4547
          %4582 = vmatprep.subr.bf16.mxu0 0
          %4583 = vmatpush2.bf16.msra.mxu0 %v4546
          %4584 = vmatprep.subr.bf16.mxu0 0
          %4585 = vmatpush2.bf16.msra.mxu0 %v4545
          %4586 = vmatprep.subr.bf16.mxu0 0
          %4587 = vmatpush2.bf16.msra.mxu0 %v4544
          %4588 = vmatprep.subr.bf16.mxu0 0
          %4589 = vmatpush2.bf16.msra.mxu0 %v4543
          %4590 = vmatprep.subr.bf16.mxu0 0
          %4591 = vmatpush2.bf16.msra.mxu0 %v4542
          %4592 = vmatprep.subr.bf16.mxu0 0
          %4593 = vmatpush2.bf16.msra.mxu0 %v4541
          %4594 = vmatprep.subr.bf16.mxu0 0
          %4595 = vmatpush2.bf16.msra.mxu0 %v4540
          %4596 = vmatprep.mubr.bf16.mxu0 %v4434
          %4597 = vmatmul.mubr.bf16.gmra.mxu0 %v4433
          %v4598 = vpop.f32.mrf.mxu0
          %v4599 = vadd.f32 %v4467, %v4598
          %v4600 = vpop.f32.mrf.mxu0
          %v4601 = vpop.f32.mrf.mxu0
          %v4602 = vpop.f32.mrf.mxu0
          %4603 = vdwg.mxu0
          %4604 = vst [vmem:[%s832] sm:$0x1] %v4599
        $region160: #{tpu_custom_call.1} parent=103 // pred_fallthru
          _
        %s4605 = sand.u32 %s510, 1
        %s4606 = scalar_lea.sflag [#allocation5], %s4605
        %s4607 = sand.u32 %s510, 1
        %s4608 = scalar_lea.vmem [#allocation23], %s4607
        // Predicated region
        $region161: #{tpu_custom_call.1} parent=103 // pred_check
          %p4609 = pneg %p520
        $region162: #{tpu_custom_call.1} parent=103 // pred_check_branch
          %4611 = sbr.rel (%p4609) target = $region164
        $region163: #{tpu_custom_call.1} parent=103 // pred_region
          %s4613 = ssub.s32 16, 16
          %4614 = vsyncadd %s4606, %s4613
          %s4615 = smul.addr %s46, 16
          %s4616 = scalar_lea.hbm %s21, %s4615
          %s4618 = sshll.u32 %s4608, 4
          %s4619 = int_to_ptr.vmem [resolvable:$true] %s4618
          %4621 = dma.vmem_to_hbm [thread:$0]  %s4619, 16, %s4616, %s4606
        $region164: #{tpu_custom_call.1} parent=103 // pred_fallthru
          _
      $region104: #{tpu_custom_call.1} parent=5 // pred_fallthru
        _
      %p4622 = scmp.le.s32.totalorder 2, %s37
      // Predicated region
      $region165: #{tpu_custom_call.1} parent=5 // pred_check
        %p4623 = pneg %p4622
      $region166: #{tpu_custom_call.1} parent=5 // pred_check_branch
        %4625 = sbr.rel (%p4623) target = $region168
      $region167: #{tpu_custom_call.1} parent=5 // pred_region
        %s4626 = ssub.s32 %s37, 2
        // Predicated region
        $region169: #{tpu_custom_call.1} parent=167 // pred_check
          %p4627 = pneg %p526
        $region170: #{tpu_custom_call.1} parent=167 // pred_check_branch
          %4629 = sbr.rel (%p4627) target = $region172
        $region171: #{tpu_custom_call.1} parent=167 // pred_region
          %s4630 = sand.u32 %s511, 1
          %s4631 = scalar_lea.sflag [#allocation5], %s4630
          %s4632 = sand.u32 %s511, 1
          %s4633 = scalar_lea.vmem [#allocation23], %s4632
          %4634 = dma.done %s4631, 16
        $region172: #{tpu_custom_call.1} parent=167 // pred_fallthru
          _
      $region168: #{tpu_custom_call.1} parent=5 // pred_fallthru
        _
    $region6: #{tpu_custom_call.1} parent=1 // loop_footer
      %s41 = sadd.s32 1, %s37
    $region7: #{tpu_custom_call.1} parent=1 // loop_footer_branch
      %36 = sbr.rel target = $region3
    $region8: #{tpu_custom_call.1} parent=1 // loop_exit
      _
    %4635 = vsyncpa [#allocation4], 1
    %s4636 = scalar_lea.sflag [#allocation4], 1
    %4637 = vsyncpa %s4636, 1
    %4638 = vsyncpa [#allocation7], 1
    %4639 = vsyncpa [#allocation10], 1
    %4640 = vsyncpa [#allocation13], 1
    %4641 = vsyncpa [#allocation16], 1
    %4642 = vsyncpa [#allocation19], 1
    %4643 = vsyncpa [#allocation22], 1
    %4644 = vsyncpa [#allocation5], 1
    %s4645 = scalar_lea.sflag [#allocation5], 1
    %4646 = vsyncpa %s4645, 1

</llo_original>
